<compile_context>
chip_gen: v6e
topology: v6e:2x2x1
jax: 0.10.0
libtpu: 0.0.40
codegen_flags: <defaults>
</compile_context>

<pallas_src>
import functools

import jax
import jax.numpy as jnp
from jax.experimental import pallas as pl
from jax.experimental.pallas import tpu as pltpu

_EPS = 1e-6
_MM_DTYPE = jnp.bfloat16     # MXU operand dtype (accumulation is always f32)
_STAGE_DTYPE = jnp.bfloat16  # inter-stage activation storage dtype
_OUT_DTYPE = jnp.float32     # final module output dtype


@functools.lru_cache(maxsize=None)
def _vmem_limit_bytes():
    """Generation-aware VMEM budget: ~3/4 of physical, capped at 100 MiB."""
    try:
        info = pltpu.get_tpu_info()
        cap = int(getattr(info, "vmem_capacity_bytes", 64 * 1024 * 1024))
    except Exception:
        cap = 64 * 1024 * 1024  # conservative (v7x-sized) fallback
    return int(min(cap * 3 // 4, 100 * 1024 * 1024))


# ---------------------------------------------------------------------------
# Fused per-stage kernel
# ---------------------------------------------------------------------------

def _make_stage_kernel(*, T, Cin, u, Cout, d_list, pad_lo, pad_hi, groups, eps, apply_proj):
    Tu = u * T
    cs = Cout // groups
    inv_n = 1.0 / (Tu * cs)

    def kernel(*refs):
        if apply_proj:
            (x_ref, wup_ref, bup_ref, n1g_ref, n1b_ref, c1w_ref, c1b_ref,
             n2g_ref, n2b_ref, c2w_ref, c2b_ref, pw_ref, pb_ref,
             o_ref, ph_ref, xpad_ref, hpad_ref) = refs
        else:
            (x_ref, wup_ref, bup_ref, n1g_ref, n1b_ref, c1w_ref, c1b_ref,
             n2g_ref, n2b_ref, c2w_ref, c2b_ref,
             o_ref, ph_ref, xpad_ref, hpad_ref) = refs
            pw_ref = pb_ref = None

        # ---- halo-only zeroing (interiors are fully overwritten every grid step) ----
        if pad_lo:
            xpad_ref[pl.ds(0, pad_lo), :] = jnp.zeros((pad_lo, Cin), xpad_ref.dtype)
        if pad_hi:
            xpad_ref[pl.ds(pad_lo + T, pad_hi), :] = jnp.zeros((pad_hi, Cin), xpad_ref.dtype)
        hpad_ref[pl.ds(0, 1), :] = jnp.zeros((1, Cout), hpad_ref.dtype)
        hpad_ref[pl.ds(Tu + 1, 1), :] = jnp.zeros((1, Cout), hpad_ref.dtype)

        # ---- polyphase weight-normed ConvTranspose1d: ONE (T, n_d*Cin)@(n_d*Cin, u*Cout) ----
        xpad_ref[pl.ds(pad_lo, T), :] = x_ref[0]                    # bf16 activation
        xcat = jnp.concatenate(
            [xpad_ref[pl.ds(pad_lo + d, T), :] for d in d_list], axis=-1)     # (T, n_d*Cin)
        acc = jnp.dot(xcat, wup_ref[...], preferred_element_type=jnp.float32)  # (T, u*Cout) f32
        # Interleave output phases.  The minor (lane) dim is kept == Cout throughout so the
        # final reshape is a pure sublane/leading-dim regroup (supported relayout class).
        for ell in range(u):
            ph_ref[:, ell, :] = acc[:, ell * Cout:(ell + 1) * Cout]
        h0 = ph_ref[...].reshape(Tu, Cout) + bup_ref[...]           # (Tu, Cout) f32

        # ---- ResnetBlock pieces (all VMEM-resident) ----
        if cs > 1:  # same-group indicator for GroupNorm stat combine (hoisted, built once)
            gi = jax.lax.broadcasted_iota(jnp.int32, (Cout, Cout), 0) // cs
            gj = jax.lax.broadcasted_iota(jnp.int32, (Cout, Cout), 1) // cs
            agg = (gi == gj).astype(jnp.float32)
        else:
            agg = None

        def gn_swish(h, g_ref, b_ref):
            # one-pass statistics: sum and sum-of-squares in f32
            s1 = jnp.sum(h, axis=0, keepdims=True)                  # (1, C)
            s2 = jnp.sum(h * h, axis=0, keepdims=True)              # (1, C)
            if agg is not None:
                s1 = jnp.dot(s1, agg, preferred_element_type=jnp.float32)
                s2 = jnp.dot(s2, agg, preferred_element_type=jnp.float32)
            mean = s1 * inv_n
            var = s2 * inv_n - mean * mean
            y = (h - mean) * jax.lax.rsqrt(var + eps) * g_ref[...] + b_ref[...]
            return y * jax.nn.sigmoid(y)                            # swish

        def conv3(h, w_ref, b_ref):
            # k=3, pad=1 conv as im2col: rows 0 and Tu+1 of hpad_ref stay zero (halo).
            hpad_ref[pl.ds(1, Tu), :] = h.astype(hpad_ref.dtype)    # bf16 for the MXU
            hcat = jnp.concatenate(
                [hpad_ref[pl.ds(j, Tu), :] for j in range(3)], axis=-1)        # (Tu, 3*Cout)
            return jnp.dot(hcat, w_ref[...], preferred_element_type=jnp.float32) + b_ref[...]

        h = gn_swish(h0, n1g_ref, n1b_ref)
        h = conv3(h, c1w_ref, c1b_ref)
        h = gn_swish(h, n2g_ref, n2b_ref)
        # dropout(p=0.0) is the identity
        h = conv3(h, c2w_ref, c2b_ref) + h0                         # residual skip

        if apply_proj:                                              # fused out_proj + swish
            h = jnp.dot(h.astype(pw_ref.dtype), pw_ref[...],
                        preferred_element_type=jnp.float32) + pb_ref[...]
            h = h * jax.nn.sigmoid(h)
        o_ref[0] = h.astype(o_ref.dtype)

    return kernel


# ---------------------------------------------------------------------------
# Wrapper: parameter prep + pallas_call plumbing (one call per stage)
# ---------------------------------------------------------------------------

def _stage_forward(x, sp, k, u, proj_w=None, proj_b=None):
    B, T, Cin = x.shape
    v, g = sp["up_v"], sp["up_g"]
    Cout = v.shape[1]
    assert (k - u) % 2 == 0, "polyphase path assumes symmetric padding ((k-u) even)"
    p = (k - u) // 2
    Tu = u * T
    groups = min(32, Cout)
    f32 = jnp.float32

    # weight_norm (dim=0 for ConvTranspose1d): per-in-channel norm over (out_channels, k)
    norm = jnp.sqrt(jnp.sum(v * v, axis=(1, 2), keepdims=True))
    wt = jnp.transpose(g * v / norm, (2, 0, 1))          # (k, Cin, Cout), tap-major, no flip

    # Static polyphase tap table: out[m*u + ell] += x[m + d] @ wt[j]
    taps, d_set = [], set()
    for ell in range(u):
        tl = []
        for j in range(k):
            if (ell + p - j) % u == 0:
                d = (ell + p - j) // u
                tl.append((j, d))
                d_set.add(d)
        taps.append(tl)
    d_list = sorted(d_set)
    d_idx = {d: i for i, d in enumerate(d_list)}
    n_d = len(d_list)
    pad_lo = max(0, -d_list[0])
    pad_hi = max(0, d_list[-1])

    # Merge taps into K (distinct shifts) and phases into N: (n_d*Cin, u*Cout), zero-filled.
    wup = jnp.zeros((n_d, Cin, u, Cout), f32)
    for ell in range(u):
        for (j, d) in taps[ell]:
            wup = wup.at[d_idx[d], :, ell, :].set(wt[j])
    wup = wup.reshape(n_d * Cin, u * Cout).astype(_MM_DTYPE)

    # k=3 convs in im2col form: (3*Cout, Cout)
    c1w = jnp.transpose(sp["c1_w"], (2, 1, 0)).reshape(3 * Cout, Cout).astype(_MM_DTYPE)
    c2w = jnp.transpose(sp["c2_w"], (2, 1, 0)).reshape(3 * Cout, Cout).astype(_MM_DTYPE)

    apply_proj = proj_w is not None
    C_final = proj_w.shape[1] if apply_proj else Cout
    out_dtype = _OUT_DTYPE if apply_proj else _STAGE_DTYPE

    inputs = [x.astype(_MM_DTYPE), wup, sp["up_b"].reshape(1, Cout).astype(f32),
              sp["n1_g"].reshape(1, Cout).astype(f32), sp["n1_b"].reshape(1, Cout).astype(f32),
              c1w, sp["c1_b"].reshape(1, Cout).astype(f32),
              sp["n2_g"].reshape(1, Cout).astype(f32), sp["n2_b"].reshape(1, Cout).astype(f32),
              c2w, sp["c2_b"].reshape(1, Cout).astype(f32)]
    if apply_proj:
        inputs += [proj_w.astype(_MM_DTYPE), proj_b.reshape(1, C_final).astype(f32)]

    in_specs = [pl.BlockSpec((1, T, Cin), lambda b: (b, 0, 0))]
    # Constant weights/biases: same block every grid step.
    in_specs += [pl.BlockSpec(a.shape, (lambda b, _nd=a.ndim: (0,) * _nd))
                 for a in inputs[1:]]

    kernel = _make_stage_kernel(T=T, Cin=Cin, u=u, Cout=Cout, d_list=tuple(d_list),
                                pad_lo=pad_lo, pad_hi=pad_hi, groups=groups, eps=_EPS,
                                apply_proj=apply_proj)

    return pl.pallas_call(
        kernel,
        grid=(B,),
        in_specs=in_specs,
        out_specs=pl.BlockSpec((1, Tu, C_final), lambda b: (b, 0, 0)),
        out_shape=jax.ShapeDtypeStruct((B, Tu, C_final), out_dtype),
        scratch_shapes=[
            pltpu.VMEM((T, u, Cout), jnp.float32),                    # phase-interleave staging
            pltpu.VMEM((T + pad_lo + pad_hi, Cin), _MM_DTYPE),        # conv-transpose halo
            pltpu.VMEM((Tu + 2, Cout), _MM_DTYPE),                    # k=3 conv halo (reused)
        ],
        compiler_params=pltpu.CompilerParams(
            dimension_semantics=("parallel",),        # pipelined / megacore-sharded over batch
            vmem_limit_bytes=_vmem_limit_bytes(),
        ),
    )(*inputs)


def upsampler_forward(x_ncl, params, upsample_factors, kernel_sizes):
    x = jnp.transpose(x_ncl, (0, 2, 1))                # NCL -> (B, T, C) channels-last
    n = len(upsample_factors)
    for i, (stage, k, u) in enumerate(zip(params["stages"], kernel_sizes, upsample_factors)):
        last = i == n - 1
        x = _stage_forward(
            x, stage, k, u,
            proj_w=params["proj_w"].T if last else None,   # torch Linear (out,in) -> (in,out)
            proj_b=params["proj_b"] if last else None,
        )
    return x


def init_params(key, in_channels, upsample_factors, kernel_sizes):
    keys = iter(jax.random.split(key, 8 * len(upsample_factors) + 4))

    def nrm(shape, scale=0.1):
        return scale * jax.random.normal(next(keys), shape, jnp.float32)

    stages = []
    for i, (k, u) in enumerate(zip(kernel_sizes, upsample_factors)):
        cin = in_channels // 2 ** i
        cout = in_channels // 2 ** (i + 1)
        stages.append(dict(
            up_v=nrm((cin, cout, k)),
            up_g=1.0 + nrm((cin, 1, 1)),
            up_b=nrm((cout,)),
            n1_g=jnp.ones((cout,), jnp.float32), n1_b=jnp.zeros((cout,), jnp.float32),
            c1_w=nrm((cout, cout, 3)), c1_b=nrm((cout,)),
            n2_g=jnp.ones((cout,), jnp.float32), n2_b=jnp.zeros((cout,), jnp.float32),
            c2_w=nrm((cout, cout, 3)), c2_b=nrm((cout,)),
        ))
    c_last = in_channels // 2 ** len(upsample_factors)
    return dict(
        stages=stages,
        proj_w=nrm((in_channels, c_last)),   # torch Linear: (out_features, in_features)
        proj_b=nrm((in_channels,)),
    )


if __name__ == "__main__":
    in_channels = 32
    upsample_factors = [2, 2]
    kernel_sizes = [4, 4]
    B, T = 2, 8

    key = jax.random.PRNGKey(0)
    kx, kp = jax.random.split(key)
    x = jax.random.normal(kx, (B, in_channels, T), jnp.float32)   # PyTorch-style NCL input
    params = init_params(kp, in_channels, upsample_factors, kernel_sizes)

    fwd = jax.jit(functools.partial(upsampler_forward,
                                    upsample_factors=upsample_factors,
                                    kernel_sizes=kernel_sizes))
    y = jax.block_until_ready(fwd(x, params))

    expected_t = T
    for u in upsample_factors:
        expected_t *= u
    assert y.shape == (B, expected_t, in_channels), y.shape
    assert y.dtype == jnp.float32, y.dtype
    assert bool(jnp.all(jnp.isfinite(y)))
    print("KERNEL_OK")
</pallas_src>

<mosaic_0001>
module attributes {stable_mosaic.version = 11 : i64} {
  func.func @kernel(%arg0: i32, %arg1: memref<1x8x32xbf16, #tpu.memory_space<vmem>>, %arg2: memref<96x32xbf16, #tpu.memory_space<vmem>>, %arg3: memref<1x16xf32, #tpu.memory_space<vmem>>, %arg4: memref<1x16xf32, #tpu.memory_space<vmem>>, %arg5: memref<1x16xf32, #tpu.memory_space<vmem>>, %arg6: memref<48x16xbf16, #tpu.memory_space<vmem>>, %arg7: memref<1x16xf32, #tpu.memory_space<vmem>>, %arg8: memref<1x16xf32, #tpu.memory_space<vmem>>, %arg9: memref<1x16xf32, #tpu.memory_space<vmem>>, %arg10: memref<48x16xbf16, #tpu.memory_space<vmem>>, %arg11: memref<1x16xf32, #tpu.memory_space<vmem>>, %arg12: memref<1x16x16xbf16, #tpu.memory_space<vmem>>, %arg13: memref<8x2x16xf32, #tpu.memory_space<vmem>>, %arg14: memref<10x32xbf16, #tpu.memory_space<vmem>>, %arg15: memref<18x16xbf16, #tpu.memory_space<vmem>>) attributes {dimension_semantics = [#tpu.dimension_semantics<parallel>], iteration_bounds = array<i64: 2>, scalar_prefetch = 0 : i64, scratch_operands = 3 : i64, tpu.core_type = #tpu.core_type<tc>, window_params = [{transform_indices = @transform_0, window_bounds = array<i64: 1, 8, 32>}, {pipeline_mode = #tpu.pipeline_mode<synchronous>, transform_indices = @transform_1, window_bounds = array<i64: 96, 32>}, {pipeline_mode = #tpu.pipeline_mode<synchronous>, transform_indices = @transform_2, window_bounds = array<i64: 1, 16>}, {pipeline_mode = #tpu.pipeline_mode<synchronous>, transform_indices = @transform_3, window_bounds = array<i64: 1, 16>}, {pipeline_mode = #tpu.pipeline_mode<synchronous>, transform_indices = @transform_4, window_bounds = array<i64: 1, 16>}, {pipeline_mode = #tpu.pipeline_mode<synchronous>, transform_indices = @transform_5, window_bounds = array<i64: 48, 16>}, {pipeline_mode = #tpu.pipeline_mode<synchronous>, transform_indices = @transform_6, window_bounds = array<i64: 1, 16>}, {pipeline_mode = #tpu.pipeline_mode<synchronous>, transform_indices = @transform_7, window_bounds = array<i64: 1, 16>}, {pipeline_mode = #tpu.pipeline_mode<synchronous>, transform_indices = @transform_8, window_bounds = array<i64: 1, 16>}, {pipeline_mode = #tpu.pipeline_mode<synchronous>, transform_indices = @transform_9, window_bounds = array<i64: 48, 16>}, {pipeline_mode = #tpu.pipeline_mode<synchronous>, transform_indices = @transform_10, window_bounds = array<i64: 1, 16>}, {transform_indices = @transform_11, window_bounds = array<i64: 1, 16, 16>}]} {
    %cst = arith.constant 0.000000e+00 : bf16
    %0 = vector.broadcast %cst : bf16 to vector<1x32xbf16>
    %c0 = arith.constant 0 : index
    %c0_0 = arith.constant 0 : index
    %1 = vector.load %arg14[%c0, %c0_0] : memref<10x32xbf16, #tpu.memory_space<vmem>>, vector<1x32xbf16>
    tpu.vector_store %arg14[%c0, %c0_0], %0 {strides = array<i32>} : memref<10x32xbf16, #tpu.memory_space<vmem>>, vector<1x32xbf16>,
    %cst_1 = arith.constant 0.000000e+00 : bf16
    %2 = vector.broadcast %cst_1 : bf16 to vector<1x32xbf16>
    %c9 = arith.constant 9 : index
    %c0_2 = arith.constant 0 : index
    %3 = vector.load %arg14[%c9, %c0_2] : memref<10x32xbf16, #tpu.memory_space<vmem>>, vector<1x32xbf16>
    tpu.vector_store %arg14[%c9, %c0_2], %2 {strides = array<i32>} : memref<10x32xbf16, #tpu.memory_space<vmem>>, vector<1x32xbf16>,
    %cst_3 = arith.constant 0.000000e+00 : bf16
    %4 = vector.broadcast %cst_3 : bf16 to vector<1x16xbf16>
    %c0_4 = arith.constant 0 : index
    %c0_5 = arith.constant 0 : index
    %5 = vector.load %arg15[%c0_4, %c0_5] : memref<18x16xbf16, #tpu.memory_space<vmem>>, vector<1x16xbf16>
    tpu.vector_store %arg15[%c0_4, %c0_5], %4 {strides = array<i32>} : memref<18x16xbf16, #tpu.memory_space<vmem>>, vector<1x16xbf16>,
    %cst_6 = arith.constant 0.000000e+00 : bf16
    %6 = vector.broadcast %cst_6 : bf16 to vector<1x16xbf16>
    %c17 = arith.constant 17 : index
    %c0_7 = arith.constant 0 : index
    %7 = vector.load %arg15[%c17, %c0_7] : memref<18x16xbf16, #tpu.memory_space<vmem>>, vector<1x16xbf16>
    tpu.vector_store %arg15[%c17, %c0_7], %6 {strides = array<i32>} : memref<18x16xbf16, #tpu.memory_space<vmem>>, vector<1x16xbf16>,
    %c0_8 = arith.constant 0 : index
    %c0_9 = arith.constant 0 : index
    %c0_10 = arith.constant 0 : index
    %8 = vector.load %arg1[%c0_8, %c0_9, %c0_10] : memref<1x8x32xbf16, #tpu.memory_space<vmem>>, vector<1x8x32xbf16>
    %9 = vector.shape_cast %8 : vector<1x8x32xbf16> to vector<8x32xbf16>
    %c1 = arith.constant 1 : index
    %c0_11 = arith.constant 0 : index
    %10 = vector.load %arg14[%c1, %c0_11] : memref<10x32xbf16, #tpu.memory_space<vmem>>, vector<8x32xbf16>
    tpu.vector_store %arg14[%c1, %c0_11], %9 {strides = array<i32>} : memref<10x32xbf16, #tpu.memory_space<vmem>>, vector<8x32xbf16>,
    %c0_12 = arith.constant 0 : index
    %c0_13 = arith.constant 0 : index
    %11 = vector.load %arg14[%c0_12, %c0_13] : memref<10x32xbf16, #tpu.memory_space<vmem>>, vector<8x32xbf16>
    %c1_14 = arith.constant 1 : index
    %c0_15 = arith.constant 0 : index
    %12 = vector.load %arg14[%c1_14, %c0_15] : memref<10x32xbf16, #tpu.memory_space<vmem>>, vector<8x32xbf16>
    %c2 = arith.constant 2 : index
    %c0_16 = arith.constant 0 : index
    %13 = vector.load %arg14[%c2, %c0_16] : memref<10x32xbf16, #tpu.memory_space<vmem>>, vector<8x32xbf16>
    %14 = tpu.concatenate %11, %12, %13 in 1 : vector<8x32xbf16>, vector<8x32xbf16>, vector<8x32xbf16> -> vector<8x96xbf16>
    %c0_17 = arith.constant 0 : index
    %c0_18 = arith.constant 0 : index
    %15 = vector.load %arg2[%c0_17, %c0_18] : memref<96x32xbf16, #tpu.memory_space<vmem>>, vector<96x32xbf16>
    %cst_19 = arith.constant dense<0.000000e+00> : vector<8x32xf32>
    %16 = tpu.matmul %14, %15, %cst_19 {dimension_numbers = #tpu.dot_dimension_numbers<[1], [0], [0], [1], [0, 0, 1, 1], [], []>} : vector<8x96xbf16>, vector<96x32xbf16>, vector<8x32xf32> -> vector<8x32xf32>
    %17 = vector.extract_strided_slice %16 {offsets = [0, 0], sizes = [8, 16], strides = [1, 1]} : vector<8x32xf32> to vector<8x16xf32>
    %c0_20 = arith.constant 0 : index
    %c0_21 = arith.constant 0 : index
    %c0_22 = arith.constant 0 : index
    %18 = vector.load %arg13[%c0_20, %c0_21, %c0_22] : memref<8x2x16xf32, #tpu.memory_space<vmem>>, vector<8x1x16xf32>
    %19 = vector.shape_cast %18 : vector<8x1x16xf32> to vector<8x16xf32>
    %20 = vector.shape_cast %17 : vector<8x16xf32> to vector<8x1x16xf32>
    tpu.vector_store %arg13[%c0_20, %c0_21, %c0_22], %20 {strides = array<i32>} : memref<8x2x16xf32, #tpu.memory_space<vmem>>, vector<8x1x16xf32>,
    %21 = vector.extract_strided_slice %16 {offsets = [0, 16], sizes = [8, 16], strides = [1, 1]} : vector<8x32xf32> to vector<8x16xf32>
    %c0_23 = arith.constant 0 : index
    %c1_24 = arith.constant 1 : index
    %c0_25 = arith.constant 0 : index
    %22 = vector.load %arg13[%c0_23, %c1_24, %c0_25] : memref<8x2x16xf32, #tpu.memory_space<vmem>>, vector<8x1x16xf32>
    %23 = vector.shape_cast %22 : vector<8x1x16xf32> to vector<8x16xf32>
    %24 = vector.shape_cast %21 : vector<8x16xf32> to vector<8x1x16xf32>
    tpu.vector_store %arg13[%c0_23, %c1_24, %c0_25], %24 {strides = array<i32>} : memref<8x2x16xf32, #tpu.memory_space<vmem>>, vector<8x1x16xf32>,
    %c0_26 = arith.constant 0 : index
    %c0_27 = arith.constant 0 : index
    %c0_28 = arith.constant 0 : index
    %25 = vector.load %arg13[%c0_26, %c0_27, %c0_28] : memref<8x2x16xf32, #tpu.memory_space<vmem>>, vector<8x2x16xf32>
    %26 = vector.shape_cast %25 : vector<8x2x16xf32> to vector<16x16xf32>
    %c0_29 = arith.constant 0 : index
    %c0_30 = arith.constant 0 : index
    %27 = vector.load %arg3[%c0_29, %c0_30] : memref<1x16xf32, #tpu.memory_space<vmem>>, vector<1x16xf32>
    %28 = vector.broadcast %27 : vector<1x16xf32> to vector<16x16xf32>
    %29 = arith.addf %26, %28 : vector<16x16xf32>
    %cst_31 = arith.constant dense<0.000000e+00> : vector<16xf32>
    %30 = vector.multi_reduction <add>, %29, %cst_31 [0] : vector<16x16xf32> to vector<16xf32>
    %31 = vector.shape_cast %30 : vector<16xf32> to vector<1x16xf32>
    %32 = arith.mulf %29, %29 : vector<16x16xf32>
    %cst_32 = arith.constant dense<0.000000e+00> : vector<16xf32>
    %33 = vector.multi_reduction <add>, %32, %cst_32 [0] : vector<16x16xf32> to vector<16xf32>
    %34 = vector.shape_cast %33 : vector<16xf32> to vector<1x16xf32>
    %cst_33 = arith.constant 6.250000e-02 : f32
    %35 = vector.broadcast %cst_33 : f32 to vector<1x16xf32>
    %36 = arith.mulf %31, %35 : vector<1x16xf32>
    %cst_34 = arith.constant 6.250000e-02 : f32
    %37 = vector.broadcast %cst_34 : f32 to vector<1x16xf32>
    %38 = arith.mulf %34, %37 : vector<1x16xf32>
    %39 = arith.mulf %36, %36 : vector<1x16xf32>
    %40 = arith.subf %38, %39 : vector<1x16xf32>
    %41 = vector.broadcast %36 : vector<1x16xf32> to vector<16x16xf32>
    %42 = arith.subf %29, %41 : vector<16x16xf32>
    %cst_35 = arith.constant 9.99999997E-7 : f32
    %43 = vector.broadcast %cst_35 : f32 to vector<1x16xf32>
    %44 = arith.addf %40, %43 : vector<1x16xf32>
    %45 = math.rsqrt %44 : vector<1x16xf32>
    %46 = vector.broadcast %45 : vector<1x16xf32> to vector<16x16xf32>
    %47 = arith.mulf %42, %46 : vector<16x16xf32>
    %c0_36 = arith.constant 0 : index
    %c0_37 = arith.constant 0 : index
    %48 = vector.load %arg4[%c0_36, %c0_37] : memref<1x16xf32, #tpu.memory_space<vmem>>, vector<1x16xf32>
    %49 = vector.broadcast %48 : vector<1x16xf32> to vector<16x16xf32>
    %50 = arith.mulf %47, %49 : vector<16x16xf32>
    %c0_38 = arith.constant 0 : index
    %c0_39 = arith.constant 0 : index
    %51 = vector.load %arg5[%c0_38, %c0_39] : memref<1x16xf32, #tpu.memory_space<vmem>>, vector<1x16xf32>
    %52 = vector.broadcast %51 : vector<1x16xf32> to vector<16x16xf32>
    %53 = arith.addf %50, %52 : vector<16x16xf32>
    %54 = arith.negf %53 : vector<16x16xf32>
    %55 = math.exp %54 : vector<16x16xf32>
    %cst_40 = arith.constant 1.000000e+00 : f32
    %56 = vector.broadcast %cst_40 : f32 to vector<16x16xf32>
    %57 = arith.addf %56, %55 : vector<16x16xf32>
    %58 = arith.divf %56, %57 : vector<16x16xf32>
    %59 = arith.mulf %53, %58 : vector<16x16xf32>
    %60 = arith.truncf %59 : vector<16x16xf32> to vector<16x16xbf16>
    %c1_41 = arith.constant 1 : index
    %c0_42 = arith.constant 0 : index
    %61 = vector.load %arg15[%c1_41, %c0_42] : memref<18x16xbf16, #tpu.memory_space<vmem>>, vector<16x16xbf16>
    tpu.vector_store %arg15[%c1_41, %c0_42], %60 {strides = array<i32>} : memref<18x16xbf16, #tpu.memory_space<vmem>>, vector<16x16xbf16>,
    %c0_43 = arith.constant 0 : index
    %c0_44 = arith.constant 0 : index
    %62 = vector.load %arg15[%c0_43, %c0_44] : memref<18x16xbf16, #tpu.memory_space<vmem>>, vector<16x16xbf16>
    %c1_45 = arith.constant 1 : index
    %c0_46 = arith.constant 0 : index
    %63 = vector.load %arg15[%c1_45, %c0_46] : memref<18x16xbf16, #tpu.memory_space<vmem>>, vector<16x16xbf16>
    %c2_47 = arith.constant 2 : index
    %c0_48 = arith.constant 0 : index
    %64 = vector.load %arg15[%c2_47, %c0_48] : memref<18x16xbf16, #tpu.memory_space<vmem>>, vector<16x16xbf16>
    %65 = tpu.concatenate %62, %63, %64 in 1 : vector<16x16xbf16>, vector<16x16xbf16>, vector<16x16xbf16> -> vector<16x48xbf16>
    %c0_49 = arith.constant 0 : index
    %c0_50 = arith.constant 0 : index
    %66 = vector.load %arg6[%c0_49, %c0_50] : memref<48x16xbf16, #tpu.memory_space<vmem>>, vector<48x16xbf16>
    %cst_51 = arith.constant dense<0.000000e+00> : vector<16x16xf32>
    %67 = tpu.matmul %65, %66, %cst_51 {dimension_numbers = #tpu.dot_dimension_numbers<[1], [0], [0], [1], [0, 0, 1, 1], [], []>} : vector<16x48xbf16>, vector<48x16xbf16>, vector<16x16xf32> -> vector<16x16xf32>
    %c0_52 = arith.constant 0 : index
    %c0_53 = arith.constant 0 : index
    %68 = vector.load %arg7[%c0_52, %c0_53] : memref<1x16xf32, #tpu.memory_space<vmem>>, vector<1x16xf32>
    %69 = vector.broadcast %68 : vector<1x16xf32> to vector<16x16xf32>
    %70 = arith.addf %67, %69 : vector<16x16xf32>
    %cst_54 = arith.constant dense<0.000000e+00> : vector<16xf32>
    %71 = vector.multi_reduction <add>, %70, %cst_54 [0] : vector<16x16xf32> to vector<16xf32>
    %72 = vector.shape_cast %71 : vector<16xf32> to vector<1x16xf32>
    %73 = arith.mulf %70, %70 : vector<16x16xf32>
    %cst_55 = arith.constant dense<0.000000e+00> : vector<16xf32>
    %74 = vector.multi_reduction <add>, %73, %cst_55 [0] : vector<16x16xf32> to vector<16xf32>
    %75 = vector.shape_cast %74 : vector<16xf32> to vector<1x16xf32>
    %cst_56 = arith.constant 6.250000e-02 : f32
    %76 = vector.broadcast %cst_56 : f32 to vector<1x16xf32>
    %77 = arith.mulf %72, %76 : vector<1x16xf32>
    %cst_57 = arith.constant 6.250000e-02 : f32
    %78 = vector.broadcast %cst_57 : f32 to vector<1x16xf32>
    %79 = arith.mulf %75, %78 : vector<1x16xf32>
    %80 = arith.mulf %77, %77 : vector<1x16xf32>
    %81 = arith.subf %79, %80 : vector<1x16xf32>
    %82 = vector.broadcast %77 : vector<1x16xf32> to vector<16x16xf32>
    %83 = arith.subf %70, %82 : vector<16x16xf32>
    %cst_58 = arith.constant 9.99999997E-7 : f32
    %84 = vector.broadcast %cst_58 : f32 to vector<1x16xf32>
    %85 = arith.addf %81, %84 : vector<1x16xf32>
    %86 = math.rsqrt %85 : vector<1x16xf32>
    %87 = vector.broadcast %86 : vector<1x16xf32> to vector<16x16xf32>
    %88 = arith.mulf %83, %87 : vector<16x16xf32>
    %c0_59 = arith.constant 0 : index
    %c0_60 = arith.constant 0 : index
    %89 = vector.load %arg8[%c0_59, %c0_60] : memref<1x16xf32, #tpu.memory_space<vmem>>, vector<1x16xf32>
    %90 = vector.broadcast %89 : vector<1x16xf32> to vector<16x16xf32>
    %91 = arith.mulf %88, %90 : vector<16x16xf32>
    %c0_61 = arith.constant 0 : index
    %c0_62 = arith.constant 0 : index
    %92 = vector.load %arg9[%c0_61, %c0_62] : memref<1x16xf32, #tpu.memory_space<vmem>>, vector<1x16xf32>
    %93 = vector.broadcast %92 : vector<1x16xf32> to vector<16x16xf32>
    %94 = arith.addf %91, %93 : vector<16x16xf32>
    %95 = arith.negf %94 : vector<16x16xf32>
    %96 = math.exp %95 : vector<16x16xf32>
    %cst_63 = arith.constant 1.000000e+00 : f32
    %97 = vector.broadcast %cst_63 : f32 to vector<16x16xf32>
    %98 = arith.addf %97, %96 : vector<16x16xf32>
    %99 = arith.divf %97, %98 : vector<16x16xf32>
    %100 = arith.mulf %94, %99 : vector<16x16xf32>
    %101 = arith.truncf %100 : vector<16x16xf32> to vector<16x16xbf16>
    %c1_64 = arith.constant 1 : index
    %c0_65 = arith.constant 0 : index
    %102 = vector.load %arg15[%c1_64, %c0_65] : memref<18x16xbf16, #tpu.memory_space<vmem>>, vector<16x16xbf16>
    tpu.vector_store %arg15[%c1_64, %c0_65], %101 {strides = array<i32>} : memref<18x16xbf16, #tpu.memory_space<vmem>>, vector<16x16xbf16>,
    %c0_66 = arith.constant 0 : index
    %c0_67 = arith.constant 0 : index
    %103 = vector.load %arg15[%c0_66, %c0_67] : memref<18x16xbf16, #tpu.memory_space<vmem>>, vector<16x16xbf16>
    %c1_68 = arith.constant 1 : index
    %c0_69 = arith.constant 0 : index
    %104 = vector.load %arg15[%c1_68, %c0_69] : memref<18x16xbf16, #tpu.memory_space<vmem>>, vector<16x16xbf16>
    %c2_70 = arith.constant 2 : index
    %c0_71 = arith.constant 0 : index
    %105 = vector.load %arg15[%c2_70, %c0_71] : memref<18x16xbf16, #tpu.memory_space<vmem>>, vector<16x16xbf16>
    %106 = tpu.concatenate %103, %104, %105 in 1 : vector<16x16xbf16>, vector<16x16xbf16>, vector<16x16xbf16> -> vector<16x48xbf16>
    %c0_72 = arith.constant 0 : index
    %c0_73 = arith.constant 0 : index
    %107 = vector.load %arg10[%c0_72, %c0_73] : memref<48x16xbf16, #tpu.memory_space<vmem>>, vector<48x16xbf16>
    %cst_74 = arith.constant dense<0.000000e+00> : vector<16x16xf32>
    %108 = tpu.matmul %106, %107, %cst_74 {dimension_numbers = #tpu.dot_dimension_numbers<[1], [0], [0], [1], [0, 0, 1, 1], [], []>} : vector<16x48xbf16>, vector<48x16xbf16>, vector<16x16xf32> -> vector<16x16xf32>
    %c0_75 = arith.constant 0 : index
    %c0_76 = arith.constant 0 : index
    %109 = vector.load %arg11[%c0_75, %c0_76] : memref<1x16xf32, #tpu.memory_space<vmem>>, vector<1x16xf32>
    %110 = vector.broadcast %109 : vector<1x16xf32> to vector<16x16xf32>
    %111 = arith.addf %108, %110 : vector<16x16xf32>
    %112 = arith.addf %111, %29 : vector<16x16xf32>
    %113 = arith.truncf %112 : vector<16x16xf32> to vector<16x16xbf16>
    %c0_77 = arith.constant 0 : index
    %c0_78 = arith.constant 0 : index
    %c0_79 = arith.constant 0 : index
    %114 = vector.load %arg12[%c0_77, %c0_78, %c0_79] : memref<1x16x16xbf16, #tpu.memory_space<vmem>>, vector<1x16x16xbf16>
    %115 = vector.shape_cast %114 : vector<1x16x16xbf16> to vector<16x16xbf16>
    %116 = vector.shape_cast %113 : vector<16x16xbf16> to vector<1x16x16xbf16>
    tpu.vector_store %arg12[%c0_77, %c0_78, %c0_79], %116 {strides = array<i32>} : memref<1x16x16xbf16, #tpu.memory_space<vmem>>, vector<1x16x16xbf16>,
    return
  }
  func.func @transform_0(%arg0: i32) -> (i32, i32, i32) {
    %c0_i32 = arith.constant 0 : i32
    %c0_i32_0 = arith.constant 0 : i32
    %c0_i32_1 = arith.constant 0 : i32
    return %arg0, %c0_i32, %c0_i32_0 : i32, i32, i32
  }
  func.func @transform_1(%arg0: i32) -> (i32, i32) {
    %c0_i32 = arith.constant 0 : i32
    %c0_i32_0 = arith.constant 0 : i32
    %c0_i32_1 = arith.constant 0 : i32
    return %c0_i32, %c0_i32_0 : i32, i32
  }
  func.func @transform_2(%arg0: i32) -> (i32, i32) {
    %c0_i32 = arith.constant 0 : i32
    %c0_i32_0 = arith.constant 0 : i32
    %c0_i32_1 = arith.constant 0 : i32
    return %c0_i32, %c0_i32_0 : i32, i32
  }
  func.func @transform_3(%arg0: i32) -> (i32, i32) {
    %c0_i32 = arith.constant 0 : i32
    %c0_i32_0 = arith.constant 0 : i32
    %c0_i32_1 = arith.constant 0 : i32
    return %c0_i32, %c0_i32_0 : i32, i32
  }
  func.func @transform_4(%arg0: i32) -> (i32, i32) {
    %c0_i32 = arith.constant 0 : i32
    %c0_i32_0 = arith.constant 0 : i32
    %c0_i32_1 = arith.constant 0 : i32
    return %c0_i32, %c0_i32_0 : i32, i32
  }
  func.func @transform_5(%arg0: i32) -> (i32, i32) {
    %c0_i32 = arith.constant 0 : i32
    %c0_i32_0 = arith.constant 0 : i32
    %c0_i32_1 = arith.constant 0 : i32
    return %c0_i32, %c0_i32_0 : i32, i32
  }
  func.func @transform_6(%arg0: i32) -> (i32, i32) {
    %c0_i32 = arith.constant 0 : i32
    %c0_i32_0 = arith.constant 0 : i32
    %c0_i32_1 = arith.constant 0 : i32
    return %c0_i32, %c0_i32_0 : i32, i32
  }
  func.func @transform_7(%arg0: i32) -> (i32, i32) {
    %c0_i32 = arith.constant 0 : i32
    %c0_i32_0 = arith.constant 0 : i32
    %c0_i32_1 = arith.constant 0 : i32
    return %c0_i32, %c0_i32_0 : i32, i32
  }
  func.func @transform_8(%arg0: i32) -> (i32, i32) {
    %c0_i32 = arith.constant 0 : i32
    %c0_i32_0 = arith.constant 0 : i32
    %c0_i32_1 = arith.constant 0 : i32
    return %c0_i32, %c0_i32_0 : i32, i32
  }
  func.func @transform_9(%arg0: i32) -> (i32, i32) {
    %c0_i32 = arith.constant 0 : i32
    %c0_i32_0 = arith.constant 0 : i32
    %c0_i32_1 = arith.constant 0 : i32
    return %c0_i32, %c0_i32_0 : i32, i32
  }
  func.func @transform_10(%arg0: i32) -> (i32, i32) {
    %c0_i32 = arith.constant 0 : i32
    %c0_i32_0 = arith.constant 0 : i32
    %c0_i32_1 = arith.constant 0 : i32
    return %c0_i32, %c0_i32_0 : i32, i32
  }
  func.func @transform_11(%arg0: i32) -> (i32, i32, i32) {
    %c0_i32 = arith.constant 0 : i32
    %c0_i32_0 = arith.constant 0 : i32
    %c0_i32_1 = arith.constant 0 : i32
    return %arg0, %c0_i32, %c0_i32_0 : i32, i32, i32
  }
}

module attributes {stable_mosaic.version = 11 : i64} {
  func.func @kernel(%arg0: i32, %arg1: memref<1x16x16xbf16, #tpu.memory_space<vmem>>, %arg2: memref<48x16xbf16, #tpu.memory_space<vmem>>, %arg3: memref<1x8xf32, #tpu.memory_space<vmem>>, %arg4: memref<1x8xf32, #tpu.memory_space<vmem>>, %arg5: memref<1x8xf32, #tpu.memory_space<vmem>>, %arg6: memref<24x8xbf16, #tpu.memory_space<vmem>>, %arg7: memref<1x8xf32, #tpu.memory_space<vmem>>, %arg8: memref<1x8xf32, #tpu.memory_space<vmem>>, %arg9: memref<1x8xf32, #tpu.memory_space<vmem>>, %arg10: memref<24x8xbf16, #tpu.memory_space<vmem>>, %arg11: memref<1x8xf32, #tpu.memory_space<vmem>>, %arg12: memref<8x32xbf16, #tpu.memory_space<vmem>>, %arg13: memref<1x32xf32, #tpu.memory_space<vmem>>, %arg14: memref<1x32x32xf32, #tpu.memory_space<vmem>>, %arg15: memref<16x2x8xf32, #tpu.memory_space<vmem>>, %arg16: memref<18x16xbf16, #tpu.memory_space<vmem>>, %arg17: memref<34x8xbf16, #tpu.memory_space<vmem>>) attributes {dimension_semantics = [#tpu.dimension_semantics<parallel>], iteration_bounds = array<i64: 2>, scalar_prefetch = 0 : i64, scratch_operands = 3 : i64, tpu.core_type = #tpu.core_type<tc>, window_params = [{transform_indices = @transform_0, window_bounds = array<i64: 1, 16, 16>}, {pipeline_mode = #tpu.pipeline_mode<synchronous>, transform_indices = @transform_1, window_bounds = array<i64: 48, 16>}, {pipeline_mode = #tpu.pipeline_mode<synchronous>, transform_indices = @transform_2, window_bounds = array<i64: 1, 8>}, {pipeline_mode = #tpu.pipeline_mode<synchronous>, transform_indices = @transform_3, window_bounds = array<i64: 1, 8>}, {pipeline_mode = #tpu.pipeline_mode<synchronous>, transform_indices = @transform_4, window_bounds = array<i64: 1, 8>}, {pipeline_mode = #tpu.pipeline_mode<synchronous>, transform_indices = @transform_5, window_bounds = array<i64: 24, 8>}, {pipeline_mode = #tpu.pipeline_mode<synchronous>, transform_indices = @transform_6, window_bounds = array<i64: 1, 8>}, {pipeline_mode = #tpu.pipeline_mode<synchronous>, transform_indices = @transform_7, window_bounds = array<i64: 1, 8>}, {pipeline_mode = #tpu.pipeline_mode<synchronous>, transform_indices = @transform_8, window_bounds = array<i64: 1, 8>}, {pipeline_mode = #tpu.pipeline_mode<synchronous>, transform_indices = @transform_9, window_bounds = array<i64: 24, 8>}, {pipeline_mode = #tpu.pipeline_mode<synchronous>, transform_indices = @transform_10, window_bounds = array<i64: 1, 8>}, {pipeline_mode = #tpu.pipeline_mode<synchronous>, transform_indices = @transform_11, window_bounds = array<i64: 8, 32>}, {pipeline_mode = #tpu.pipeline_mode<synchronous>, transform_indices = @transform_12, window_bounds = array<i64: 1, 32>}, {transform_indices = @transform_13, window_bounds = array<i64: 1, 32, 32>}]} {
    %cst = arith.constant 0.000000e+00 : bf16
    %0 = vector.broadcast %cst : bf16 to vector<1x16xbf16>
    %c0 = arith.constant 0 : index
    %c0_0 = arith.constant 0 : index
    %1 = vector.load %arg16[%c0, %c0_0] : memref<18x16xbf16, #tpu.memory_space<vmem>>, vector<1x16xbf16>
    tpu.vector_store %arg16[%c0, %c0_0], %0 {strides = array<i32>} : memref<18x16xbf16, #tpu.memory_space<vmem>>, vector<1x16xbf16>,
    %cst_1 = arith.constant 0.000000e+00 : bf16
    %2 = vector.broadcast %cst_1 : bf16 to vector<1x16xbf16>
    %c17 = arith.constant 17 : index
    %c0_2 = arith.constant 0 : index
    %3 = vector.load %arg16[%c17, %c0_2] : memref<18x16xbf16, #tpu.memory_space<vmem>>, vector<1x16xbf16>
    tpu.vector_store %arg16[%c17, %c0_2], %2 {strides = array<i32>} : memref<18x16xbf16, #tpu.memory_space<vmem>>, vector<1x16xbf16>,
    %cst_3 = arith.constant 0.000000e+00 : bf16
    %4 = vector.broadcast %cst_3 : bf16 to vector<1x8xbf16>
    %c0_4 = arith.constant 0 : index
    %c0_5 = arith.constant 0 : index
    %5 = vector.load %arg17[%c0_4, %c0_5] : memref<34x8xbf16, #tpu.memory_space<vmem>>, vector<1x8xbf16>
    tpu.vector_store %arg17[%c0_4, %c0_5], %4 {strides = array<i32>} : memref<34x8xbf16, #tpu.memory_space<vmem>>, vector<1x8xbf16>,
    %cst_6 = arith.constant 0.000000e+00 : bf16
    %6 = vector.broadcast %cst_6 : bf16 to vector<1x8xbf16>
    %c33 = arith.constant 33 : index
    %c0_7 = arith.constant 0 : index
    %7 = vector.load %arg17[%c33, %c0_7] : memref<34x8xbf16, #tpu.memory_space<vmem>>, vector<1x8xbf16>
    tpu.vector_store %arg17[%c33, %c0_7], %6 {strides = array<i32>} : memref<34x8xbf16, #tpu.memory_space<vmem>>, vector<1x8xbf16>,
    %c0_8 = arith.constant 0 : index
    %c0_9 = arith.constant 0 : index
    %c0_10 = arith.constant 0 : index
    %8 = vector.load %arg1[%c0_8, %c0_9, %c0_10] : memref<1x16x16xbf16, #tpu.memory_space<vmem>>, vector<1x16x16xbf16>
    %9 = vector.shape_cast %8 : vector<1x16x16xbf16> to vector<16x16xbf16>
    %c1 = arith.constant 1 : index
    %c0_11 = arith.constant 0 : index
    %10 = vector.load %arg16[%c1, %c0_11] : memref<18x16xbf16, #tpu.memory_space<vmem>>, vector<16x16xbf16>
    tpu.vector_store %arg16[%c1, %c0_11], %9 {strides = array<i32>} : memref<18x16xbf16, #tpu.memory_space<vmem>>, vector<16x16xbf16>,
    %c0_12 = arith.constant 0 : index
    %c0_13 = arith.constant 0 : index
    %11 = vector.load %arg16[%c0_12, %c0_13] : memref<18x16xbf16, #tpu.memory_space<vmem>>, vector<16x16xbf16>
    %c1_14 = arith.constant 1 : index
    %c0_15 = arith.constant 0 : index
    %12 = vector.load %arg16[%c1_14, %c0_15] : memref<18x16xbf16, #tpu.memory_space<vmem>>, vector<16x16xbf16>
    %c2 = arith.constant 2 : index
    %c0_16 = arith.constant 0 : index
    %13 = vector.load %arg16[%c2, %c0_16] : memref<18x16xbf16, #tpu.memory_space<vmem>>, vector<16x16xbf16>
    %14 = tpu.concatenate %11, %12, %13 in 1 : vector<16x16xbf16>, vector<16x16xbf16>, vector<16x16xbf16> -> vector<16x48xbf16>
    %c0_17 = arith.constant 0 : index
    %c0_18 = arith.constant 0 : index
    %15 = vector.load %arg2[%c0_17, %c0_18] : memref<48x16xbf16, #tpu.memory_space<vmem>>, vector<48x16xbf16>
    %cst_19 = arith.constant dense<0.000000e+00> : vector<16x16xf32>
    %16 = tpu.matmul %14, %15, %cst_19 {dimension_numbers = #tpu.dot_dimension_numbers<[1], [0], [0], [1], [0, 0, 1, 1], [], []>} : vector<16x48xbf16>, vector<48x16xbf16>, vector<16x16xf32> -> vector<16x16xf32>
    %17 = vector.extract_strided_slice %16 {offsets = [0, 0], sizes = [16, 8], strides = [1, 1]} : vector<16x16xf32> to vector<16x8xf32>
    %c0_20 = arith.constant 0 : index
    %c0_21 = arith.constant 0 : index
    %c0_22 = arith.constant 0 : index
    %18 = vector.load %arg15[%c0_20, %c0_21, %c0_22] : memref<16x2x8xf32, #tpu.memory_space<vmem>>, vector<16x1x8xf32>
    %19 = vector.shape_cast %18 : vector<16x1x8xf32> to vector<16x8xf32>
    %20 = vector.shape_cast %17 : vector<16x8xf32> to vector<16x1x8xf32>
    tpu.vector_store %arg15[%c0_20, %c0_21, %c0_22], %20 {strides = array<i32>} : memref<16x2x8xf32, #tpu.memory_space<vmem>>, vector<16x1x8xf32>,
    %21 = vector.extract_strided_slice %16 {offsets = [0, 8], sizes = [16, 8], strides = [1, 1]} : vector<16x16xf32> to vector<16x8xf32>
    %c0_23 = arith.constant 0 : index
    %c1_24 = arith.constant 1 : index
    %c0_25 = arith.constant 0 : index
    %22 = vector.load %arg15[%c0_23, %c1_24, %c0_25] : memref<16x2x8xf32, #tpu.memory_space<vmem>>, vector<16x1x8xf32>
    %23 = vector.shape_cast %22 : vector<16x1x8xf32> to vector<16x8xf32>
    %24 = vector.shape_cast %21 : vector<16x8xf32> to vector<16x1x8xf32>
    tpu.vector_store %arg15[%c0_23, %c1_24, %c0_25], %24 {strides = array<i32>} : memref<16x2x8xf32, #tpu.memory_space<vmem>>, vector<16x1x8xf32>,
    %c0_26 = arith.constant 0 : index
    %c0_27 = arith.constant 0 : index
    %c0_28 = arith.constant 0 : index
    %25 = vector.load %arg15[%c0_26, %c0_27, %c0_28] : memref<16x2x8xf32, #tpu.memory_space<vmem>>, vector<16x2x8xf32>
    %26 = vector.shape_cast %25 : vector<16x2x8xf32> to vector<32x8xf32>
    %c0_29 = arith.constant 0 : index
    %c0_30 = arith.constant 0 : index
    %27 = vector.load %arg3[%c0_29, %c0_30] : memref<1x8xf32, #tpu.memory_space<vmem>>, vector<1x8xf32>
    %28 = vector.broadcast %27 : vector<1x8xf32> to vector<32x8xf32>
    %29 = arith.addf %26, %28 : vector<32x8xf32>
    %cst_31 = arith.constant dense<0.000000e+00> : vector<8xf32>
    %30 = vector.multi_reduction <add>, %29, %cst_31 [0] : vector<32x8xf32> to vector<8xf32>
    %31 = vector.shape_cast %30 : vector<8xf32> to vector<1x8xf32>
    %32 = arith.mulf %29, %29 : vector<32x8xf32>
    %cst_32 = arith.constant dense<0.000000e+00> : vector<8xf32>
    %33 = vector.multi_reduction <add>, %32, %cst_32 [0] : vector<32x8xf32> to vector<8xf32>
    %34 = vector.shape_cast %33 : vector<8xf32> to vector<1x8xf32>
    %cst_33 = arith.constant 3.125000e-02 : f32
    %35 = vector.broadcast %cst_33 : f32 to vector<1x8xf32>
    %36 = arith.mulf %31, %35 : vector<1x8xf32>
    %cst_34 = arith.constant 3.125000e-02 : f32
    %37 = vector.broadcast %cst_34 : f32 to vector<1x8xf32>
    %38 = arith.mulf %34, %37 : vector<1x8xf32>
    %39 = arith.mulf %36, %36 : vector<1x8xf32>
    %40 = arith.subf %38, %39 : vector<1x8xf32>
    %41 = vector.broadcast %36 : vector<1x8xf32> to vector<32x8xf32>
    %42 = arith.subf %29, %41 : vector<32x8xf32>
    %cst_35 = arith.constant 9.99999997E-7 : f32
    %43 = vector.broadcast %cst_35 : f32 to vector<1x8xf32>
    %44 = arith.addf %40, %43 : vector<1x8xf32>
    %45 = math.rsqrt %44 : vector<1x8xf32>
    %46 = vector.broadcast %45 : vector<1x8xf32> to vector<32x8xf32>
    %47 = arith.mulf %42, %46 : vector<32x8xf32>
    %c0_36 = arith.constant 0 : index
    %c0_37 = arith.constant 0 : index
    %48 = vector.load %arg4[%c0_36, %c0_37] : memref<1x8xf32, #tpu.memory_space<vmem>>, vector<1x8xf32>
    %49 = vector.broadcast %48 : vector<1x8xf32> to vector<32x8xf32>
    %50 = arith.mulf %47, %49 : vector<32x8xf32>
    %c0_38 = arith.constant 0 : index
    %c0_39 = arith.constant 0 : index
    %51 = vector.load %arg5[%c0_38, %c0_39] : memref<1x8xf32, #tpu.memory_space<vmem>>, vector<1x8xf32>
    %52 = vector.broadcast %51 : vector<1x8xf32> to vector<32x8xf32>
    %53 = arith.addf %50, %52 : vector<32x8xf32>
    %54 = arith.negf %53 : vector<32x8xf32>
    %55 = math.exp %54 : vector<32x8xf32>
    %cst_40 = arith.constant 1.000000e+00 : f32
    %56 = vector.broadcast %cst_40 : f32 to vector<32x8xf32>
    %57 = arith.addf %56, %55 : vector<32x8xf32>
    %58 = arith.divf %56, %57 : vector<32x8xf32>
    %59 = arith.mulf %53, %58 : vector<32x8xf32>
    %60 = arith.truncf %59 : vector<32x8xf32> to vector<32x8xbf16>
    %c1_41 = arith.constant 1 : index
    %c0_42 = arith.constant 0 : index
    %61 = vector.load %arg17[%c1_41, %c0_42] : memref<34x8xbf16, #tpu.memory_space<vmem>>, vector<32x8xbf16>
    tpu.vector_store %arg17[%c1_41, %c0_42], %60 {strides = array<i32>} : memref<34x8xbf16, #tpu.memory_space<vmem>>, vector<32x8xbf16>,
    %c0_43 = arith.constant 0 : index
    %c0_44 = arith.constant 0 : index
    %62 = vector.load %arg17[%c0_43, %c0_44] : memref<34x8xbf16, #tpu.memory_space<vmem>>, vector<32x8xbf16>
    %c1_45 = arith.constant 1 : index
    %c0_46 = arith.constant 0 : index
    %63 = vector.load %arg17[%c1_45, %c0_46] : memref<34x8xbf16, #tpu.memory_space<vmem>>, vector<32x8xbf16>
    %c2_47 = arith.constant 2 : index
    %c0_48 = arith.constant 0 : index
    %64 = vector.load %arg17[%c2_47, %c0_48] : memref<34x8xbf16, #tpu.memory_space<vmem>>, vector<32x8xbf16>
    %65 = tpu.concatenate %62, %63, %64 in 1 : vector<32x8xbf16>, vector<32x8xbf16>, vector<32x8xbf16> -> vector<32x24xbf16>
    %c0_49 = arith.constant 0 : index
    %c0_50 = arith.constant 0 : index
    %66 = vector.load %arg6[%c0_49, %c0_50] : memref<24x8xbf16, #tpu.memory_space<vmem>>, vector<24x8xbf16>
    %cst_51 = arith.constant dense<0.000000e+00> : vector<32x8xf32>
    %67 = tpu.matmul %65, %66, %cst_51 {dimension_numbers = #tpu.dot_dimension_numbers<[1], [0], [0], [1], [0, 0, 1, 1], [], []>} : vector<32x24xbf16>, vector<24x8xbf16>, vector<32x8xf32> -> vector<32x8xf32>
    %c0_52 = arith.constant 0 : index
    %c0_53 = arith.constant 0 : index
    %68 = vector.load %arg7[%c0_52, %c0_53] : memref<1x8xf32, #tpu.memory_space<vmem>>, vector<1x8xf32>
    %69 = vector.broadcast %68 : vector<1x8xf32> to vector<32x8xf32>
    %70 = arith.addf %67, %69 : vector<32x8xf32>
    %cst_54 = arith.constant dense<0.000000e+00> : vector<8xf32>
    %71 = vector.multi_reduction <add>, %70, %cst_54 [0] : vector<32x8xf32> to vector<8xf32>
    %72 = vector.shape_cast %71 : vector<8xf32> to vector<1x8xf32>
    %73 = arith.mulf %70, %70 : vector<32x8xf32>
    %cst_55 = arith.constant dense<0.000000e+00> : vector<8xf32>
    %74 = vector.multi_reduction <add>, %73, %cst_55 [0] : vector<32x8xf32> to vector<8xf32>
    %75 = vector.shape_cast %74 : vector<8xf32> to vector<1x8xf32>
    %cst_56 = arith.constant 3.125000e-02 : f32
    %76 = vector.broadcast %cst_56 : f32 to vector<1x8xf32>
    %77 = arith.mulf %72, %76 : vector<1x8xf32>
    %cst_57 = arith.constant 3.125000e-02 : f32
    %78 = vector.broadcast %cst_57 : f32 to vector<1x8xf32>
    %79 = arith.mulf %75, %78 : vector<1x8xf32>
    %80 = arith.mulf %77, %77 : vector<1x8xf32>
    %81 = arith.subf %79, %80 : vector<1x8xf32>
    %82 = vector.broadcast %77 : vector<1x8xf32> to vector<32x8xf32>
    %83 = arith.subf %70, %82 : vector<32x8xf32>
    %cst_58 = arith.constant 9.99999997E-7 : f32
    %84 = vector.broadcast %cst_58 : f32 to vector<1x8xf32>
    %85 = arith.addf %81, %84 : vector<1x8xf32>
    %86 = math.rsqrt %85 : vector<1x8xf32>
    %87 = vector.broadcast %86 : vector<1x8xf32> to vector<32x8xf32>
    %88 = arith.mulf %83, %87 : vector<32x8xf32>
    %c0_59 = arith.constant 0 : index
    %c0_60 = arith.constant 0 : index
    %89 = vector.load %arg8[%c0_59, %c0_60] : memref<1x8xf32, #tpu.memory_space<vmem>>, vector<1x8xf32>
    %90 = vector.broadcast %89 : vector<1x8xf32> to vector<32x8xf32>
    %91 = arith.mulf %88, %90 : vector<32x8xf32>
    %c0_61 = arith.constant 0 : index
    %c0_62 = arith.constant 0 : index
    %92 = vector.load %arg9[%c0_61, %c0_62] : memref<1x8xf32, #tpu.memory_space<vmem>>, vector<1x8xf32>
    %93 = vector.broadcast %92 : vector<1x8xf32> to vector<32x8xf32>
    %94 = arith.addf %91, %93 : vector<32x8xf32>
    %95 = arith.negf %94 : vector<32x8xf32>
    %96 = math.exp %95 : vector<32x8xf32>
    %cst_63 = arith.constant 1.000000e+00 : f32
    %97 = vector.broadcast %cst_63 : f32 to vector<32x8xf32>
    %98 = arith.addf %97, %96 : vector<32x8xf32>
    %99 = arith.divf %97, %98 : vector<32x8xf32>
    %100 = arith.mulf %94, %99 : vector<32x8xf32>
    %101 = arith.truncf %100 : vector<32x8xf32> to vector<32x8xbf16>
    %c1_64 = arith.constant 1 : index
    %c0_65 = arith.constant 0 : index
    %102 = vector.load %arg17[%c1_64, %c0_65] : memref<34x8xbf16, #tpu.memory_space<vmem>>, vector<32x8xbf16>
    tpu.vector_store %arg17[%c1_64, %c0_65], %101 {strides = array<i32>} : memref<34x8xbf16, #tpu.memory_space<vmem>>, vector<32x8xbf16>,
    %c0_66 = arith.constant 0 : index
    %c0_67 = arith.constant 0 : index
    %103 = vector.load %arg17[%c0_66, %c0_67] : memref<34x8xbf16, #tpu.memory_space<vmem>>, vector<32x8xbf16>
    %c1_68 = arith.constant 1 : index
    %c0_69 = arith.constant 0 : index
    %104 = vector.load %arg17[%c1_68, %c0_69] : memref<34x8xbf16, #tpu.memory_space<vmem>>, vector<32x8xbf16>
    %c2_70 = arith.constant 2 : index
    %c0_71 = arith.constant 0 : index
    %105 = vector.load %arg17[%c2_70, %c0_71] : memref<34x8xbf16, #tpu.memory_space<vmem>>, vector<32x8xbf16>
    %106 = tpu.concatenate %103, %104, %105 in 1 : vector<32x8xbf16>, vector<32x8xbf16>, vector<32x8xbf16> -> vector<32x24xbf16>
    %c0_72 = arith.constant 0 : index
    %c0_73 = arith.constant 0 : index
    %107 = vector.load %arg10[%c0_72, %c0_73] : memref<24x8xbf16, #tpu.memory_space<vmem>>, vector<24x8xbf16>
    %cst_74 = arith.constant dense<0.000000e+00> : vector<32x8xf32>
    %108 = tpu.matmul %106, %107, %cst_74 {dimension_numbers = #tpu.dot_dimension_numbers<[1], [0], [0], [1], [0, 0, 1, 1], [], []>} : vector<32x24xbf16>, vector<24x8xbf16>, vector<32x8xf32> -> vector<32x8xf32>
    %c0_75 = arith.constant 0 : index
    %c0_76 = arith.constant 0 : index
    %109 = vector.load %arg11[%c0_75, %c0_76] : memref<1x8xf32, #tpu.memory_space<vmem>>, vector<1x8xf32>
    %110 = vector.broadcast %109 : vector<1x8xf32> to vector<32x8xf32>
    %111 = arith.addf %108, %110 : vector<32x8xf32>
    %112 = arith.addf %111, %29 : vector<32x8xf32>
    %113 = arith.truncf %112 : vector<32x8xf32> to vector<32x8xbf16>
    %c0_77 = arith.constant 0 : index
    %c0_78 = arith.constant 0 : index
    %114 = vector.load %arg12[%c0_77, %c0_78] : memref<8x32xbf16, #tpu.memory_space<vmem>>, vector<8x32xbf16>
    %cst_79 = arith.constant dense<0.000000e+00> : vector<32x32xf32>
    %115 = tpu.matmul %113, %114, %cst_79 {dimension_numbers = #tpu.dot_dimension_numbers<[1], [0], [0], [1], [0, 0, 1, 1], [], []>} : vector<32x8xbf16>, vector<8x32xbf16>, vector<32x32xf32> -> vector<32x32xf32>
    %c0_80 = arith.constant 0 : index
    %c0_81 = arith.constant 0 : index
    %116 = vector.load %arg13[%c0_80, %c0_81] : memref<1x32xf32, #tpu.memory_space<vmem>>, vector<1x32xf32>
    %117 = vector.broadcast %116 : vector<1x32xf32> to vector<32x32xf32>
    %118 = arith.addf %115, %117 : vector<32x32xf32>
    %119 = arith.negf %118 : vector<32x32xf32>
    %120 = math.exp %119 : vector<32x32xf32>
    %cst_82 = arith.constant 1.000000e+00 : f32
    %121 = vector.broadcast %cst_82 : f32 to vector<32x32xf32>
    %122 = arith.addf %121, %120 : vector<32x32xf32>
    %123 = arith.divf %121, %122 : vector<32x32xf32>
    %124 = arith.mulf %118, %123 : vector<32x32xf32>
    %c0_83 = arith.constant 0 : index
    %c0_84 = arith.constant 0 : index
    %c0_85 = arith.constant 0 : index
    %125 = vector.load %arg14[%c0_83, %c0_84, %c0_85] : memref<1x32x32xf32, #tpu.memory_space<vmem>>, vector<1x32x32xf32>
    %126 = vector.shape_cast %125 : vector<1x32x32xf32> to vector<32x32xf32>
    %127 = vector.shape_cast %124 : vector<32x32xf32> to vector<1x32x32xf32>
    tpu.vector_store %arg14[%c0_83, %c0_84, %c0_85], %127 {strides = array<i32>} : memref<1x32x32xf32, #tpu.memory_space<vmem>>, vector<1x32x32xf32>,
    return
  }
  func.func @transform_0(%arg0: i32) -> (i32, i32, i32) {
    %c0_i32 = arith.constant 0 : i32
    %c0_i32_0 = arith.constant 0 : i32
    %c0_i32_1 = arith.constant 0 : i32
    return %arg0, %c0_i32, %c0_i32_0 : i32, i32, i32
  }
  func.func @transform_1(%arg0: i32) -> (i32, i32) {
    %c0_i32 = arith.constant 0 : i32
    %c0_i32_0 = arith.constant 0 : i32
    %c0_i32_1 = arith.constant 0 : i32
    return %c0_i32, %c0_i32_0 : i32, i32
  }
  func.func @transform_2(%arg0: i32) -> (i32, i32) {
    %c0_i32 = arith.constant 0 : i32
    %c0_i32_0 = arith.constant 0 : i32
    %c0_i32_1 = arith.constant 0 : i32
    return %c0_i32, %c0_i32_0 : i32, i32
  }
  func.func @transform_3(%arg0: i32) -> (i32, i32) {
    %c0_i32 = arith.constant 0 : i32
    %c0_i32_0 = arith.constant 0 : i32
    %c0_i32_1 = arith.constant 0 : i32
    return %c0_i32, %c0_i32_0 : i32, i32
  }
  func.func @transform_4(%arg0: i32) -> (i32, i32) {
    %c0_i32 = arith.constant 0 : i32
    %c0_i32_0 = arith.constant 0 : i32
    %c0_i32_1 = arith.constant 0 : i32
    return %c0_i32, %c0_i32_0 : i32, i32
  }
  func.func @transform_5(%arg0: i32) -> (i32, i32) {
    %c0_i32 = arith.constant 0 : i32
    %c0_i32_0 = arith.constant 0 : i32
    %c0_i32_1 = arith.constant 0 : i32
    return %c0_i32, %c0_i32_0 : i32, i32
  }
  func.func @transform_6(%arg0: i32) -> (i32, i32) {
    %c0_i32 = arith.constant 0 : i32
    %c0_i32_0 = arith.constant 0 : i32
    %c0_i32_1 = arith.constant 0 : i32
    return %c0_i32, %c0_i32_0 : i32, i32
  }
  func.func @transform_7(%arg0: i32) -> (i32, i32) {
    %c0_i32 = arith.constant 0 : i32
    %c0_i32_0 = arith.constant 0 : i32
    %c0_i32_1 = arith.constant 0 : i32
    return %c0_i32, %c0_i32_0 : i32, i32
  }
  func.func @transform_8(%arg0: i32) -> (i32, i32) {
    %c0_i32 = arith.constant 0 : i32
    %c0_i32_0 = arith.constant 0 : i32
    %c0_i32_1 = arith.constant 0 : i32
    return %c0_i32, %c0_i32_0 : i32, i32
  }
  func.func @transform_9(%arg0: i32) -> (i32, i32) {
    %c0_i32 = arith.constant 0 : i32
    %c0_i32_0 = arith.constant 0 : i32
    %c0_i32_1 = arith.constant 0 : i32
    return %c0_i32, %c0_i32_0 : i32, i32
  }
  func.func @transform_10(%arg0: i32) -> (i32, i32) {
    %c0_i32 = arith.constant 0 : i32
    %c0_i32_0 = arith.constant 0 : i32
    %c0_i32_1 = arith.constant 0 : i32
    return %c0_i32, %c0_i32_0 : i32, i32
  }
  func.func @transform_11(%arg0: i32) -> (i32, i32) {
    %c0_i32 = arith.constant 0 : i32
    %c0_i32_0 = arith.constant 0 : i32
    %c0_i32_1 = arith.constant 0 : i32
    return %c0_i32, %c0_i32_0 : i32, i32
  }
  func.func @transform_12(%arg0: i32) -> (i32, i32) {
    %c0_i32 = arith.constant 0 : i32
    %c0_i32_0 = arith.constant 0 : i32
    %c0_i32_1 = arith.constant 0 : i32
    return %c0_i32, %c0_i32_0 : i32, i32
  }
  func.func @transform_13(%arg0: i32) -> (i32, i32, i32) {
    %c0_i32 = arith.constant 0 : i32
    %c0_i32_0 = arith.constant 0 : i32
    %c0_i32_1 = arith.constant 0 : i32
    return %arg0, %c0_i32, %c0_i32_0 : i32, i32, i32
  }
}

</mosaic_0001>

<llo_original>
// kernel: upsampler_forward.2
$region0: #{upsampler_forward.2}
  #allocation0 [shape = 'u32[]', space=smem, size = 0x4, offset = 0x4, fixed_abs, tag = 'smem constant byte address 0x4 - core index']
  #allocation1 [shape = 'u32[144,128]{1,0:T(1,128)}', space=vmem, size = 0x12000, scoped, tag = 'internal scratch']
  #allocation2 [shape = 'f32[8,2,16]{2,1,0:T(2,128)}', space=vmem, size = 0x2000, scoped, tag = 'scratch operand']
  #allocation3 [shape = 'bf16[10,32]{1,0:T(8,128)(2,1)}', space=vmem, size = 0x1000, scoped, tag = 'scratch operand']
  #allocation4 [shape = 'bf16[18,16]{1,0:T(8,128)(2,1)}', space=vmem, size = 0x1800, scoped, tag = 'scratch operand']
  %s0 = inlined_call_operand.vmem [shape: bf16[2,8,32], index: 0, kind: input, shape index: {}]
  %s1 = inlined_call_operand.vmem [shape: bf16[96,32], index: 1, kind: input, shape index: {}]
  %s2 = inlined_call_operand.vmem [shape: f32[1,16], index: 2, kind: input, shape index: {}]
  %s3 = inlined_call_operand.vmem [shape: f32[1,16], index: 3, kind: input, shape index: {}]
  %s4 = inlined_call_operand.vmem [shape: f32[1,16], index: 4, kind: input, shape index: {}]
  %s5 = inlined_call_operand.vmem [shape: bf16[48,16], index: 5, kind: input, shape index: {}]
  %s6 = inlined_call_operand.vmem [shape: f32[1,16], index: 6, kind: input, shape index: {}]
  %s7 = inlined_call_operand.vmem [shape: f32[1,16], index: 7, kind: input, shape index: {}]
  %s8 = inlined_call_operand.vmem [shape: f32[1,16], index: 8, kind: input, shape index: {}]
  %s9 = inlined_call_operand.vmem [shape: bf16[48,16], index: 9, kind: input, shape index: {}]
  %s10 = inlined_call_operand.vmem [shape: f32[1,16], index: 10, kind: input, shape index: {}]
  %s11 = inlined_call_operand.vmem [shape: bf16[2,16,16], index: 11, kind: output, shape index: {}]
  %s12 = sld [smem:[#allocation0]]
  $region77: #{upsampler_forward.2} parent=0
    _
  %s14 = ssub.s32 1, %s12
  %s15 = scalar_select 0, %s14, %s12
  loop: start=0, step=1, limit=4
  $region2: #{upsampler_forward.2} parent=0 // loop_pre_header
    _
  $region3: #{upsampler_forward.2} parent=0 // loop_header
    %s17 = sphi 0, %s21
    %p18 = scmp.ge.s32.totalorder %s17, 4
    %s27 = sphi 0, %s29
    %s30 = sphi 0, %s27
    %s31 = sphi 0, %s30
    %s47 = sphi 0, %s31
    %s51 = sphi 0, %s51
    %s53 = sphi 0, %s51
    %s54 = sphi 0, %s53
    %s68 = sphi 0, %s54
    %s72 = sphi 0, %s72
    %s74 = sphi 0, %s72
    %s75 = sphi 0, %s74
    %s89 = sphi 0, %s75
    %s93 = sphi 0, %s93
    %s95 = sphi 0, %s93
    %s96 = sphi 0, %s95
    %s110 = sphi 0, %s96
    %s114 = sphi 0, %s114
    %s116 = sphi 0, %s114
    %s117 = sphi 0, %s116
    %s131 = sphi 0, %s117
    %s135 = sphi 0, %s135
    %s137 = sphi 0, %s135
    %s138 = sphi 0, %s137
    %s152 = sphi 0, %s138
    %s156 = sphi 0, %s156
    %s158 = sphi 0, %s156
    %s159 = sphi 0, %s158
    %s173 = sphi 0, %s159
    %s177 = sphi 0, %s177
    %s179 = sphi 0, %s177
    %s180 = sphi 0, %s179
    %s194 = sphi 0, %s180
    %s198 = sphi 0, %s198
    %s200 = sphi 0, %s198
    %s201 = sphi 0, %s200
    %s215 = sphi 0, %s201
    %s219 = sphi 0, %s219
    %s221 = sphi 0, %s219
    %s222 = sphi 0, %s221
    %s236 = sphi 0, %s222
    %s240 = sphi 0, %s240
    %s242 = sphi 0, %s240
    %s243 = sphi 0, %s242
    %s257 = sphi 0, %s243
    %s263 = sphi 0, %s265
    %s266 = sphi 0, %s263
    %s267 = sphi 0, %s266
    %s283 = sphi 0, %s267
  $region4: #{upsampler_forward.2} parent=0 // loop_header_branch
    %20 = sbr.rel (%p18) target = $region8
  $region5: #{upsampler_forward.2} parent=0 // loop_body
    %s22 = ssub.s32 %s17, 1
    %s23 = ssub.s32 %s17, 2
    %s24 = sadd.s32 %s17, 1
    %s25 = ssub.s32 %s17, %s24
    %p26 = scmp.eq.s32.totalorder %s25, 0
    %s28 = sadd.s32 %s27, 1
    %s29 = scalar_select %p26, %s27, %s28
    %p32 = pneg %p26
    %p33 = scmp.eq.s32.totalorder %s17, 1
    %p34 = por %p32, %p33
    %p35 = scmp.ne.s32.totalorder %s27, %s30
    %p36 = scmp.eq.s32.totalorder %s17, 0
    %p37 = por %p35, %p36
    %p38 = scmp.ne.s32.totalorder %s27, %s30
    %p39 = scmp.eq.s32.totalorder %s22, 1
    %p40 = por %p38, %p39
    %p41 = scmp.ne.s32.totalorder %s30, %s31
    %p42 = scmp.eq.s32.totalorder %s22, 0
    %p43 = por %p41, %p42
    %p44 = scmp.ne.s32.totalorder %s30, %s31
    %p45 = scmp.eq.s32.totalorder %s23, 1
    %p46 = por %p44, %p45
    %p48 = scmp.ne.s32.totalorder %s31, %s47
    %p49 = scmp.eq.s32.totalorder %s23, 0
    %p50 = por %p48, %p49
    %s52 = sadd.s32 %s51, 1
    %p55 = scmp.eq.s32.totalorder %s17, 1
    %p56 = scmp.ne.s32.totalorder %s51, %s53
    %p57 = scmp.eq.s32.totalorder %s17, 0
    %p58 = por %p56, %p57
    %p59 = scmp.ne.s32.totalorder %s51, %s53
    %p60 = scmp.eq.s32.totalorder %s22, 1
    %p61 = por %p59, %p60
    %p62 = scmp.ne.s32.totalorder %s53, %s54
    %p63 = scmp.eq.s32.totalorder %s22, 0
    %p64 = por %p62, %p63
    %p65 = scmp.ne.s32.totalorder %s53, %s54
    %p66 = scmp.eq.s32.totalorder %s23, 1
    %p67 = por %p65, %p66
    %p69 = scmp.ne.s32.totalorder %s54, %s68
    %p70 = scmp.eq.s32.totalorder %s23, 0
    %p71 = por %p69, %p70
    %s73 = sadd.s32 %s72, 1
    %p76 = scmp.eq.s32.totalorder %s17, 1
    %p77 = scmp.ne.s32.totalorder %s72, %s74
    %p78 = scmp.eq.s32.totalorder %s17, 0
    %p79 = por %p77, %p78
    %p80 = scmp.ne.s32.totalorder %s72, %s74
    %p81 = scmp.eq.s32.totalorder %s22, 1
    %p82 = por %p80, %p81
    %p83 = scmp.ne.s32.totalorder %s74, %s75
    %p84 = scmp.eq.s32.totalorder %s22, 0
    %p85 = por %p83, %p84
    %p86 = scmp.ne.s32.totalorder %s74, %s75
    %p87 = scmp.eq.s32.totalorder %s23, 1
    %p88 = por %p86, %p87
    %p90 = scmp.ne.s32.totalorder %s75, %s89
    %p91 = scmp.eq.s32.totalorder %s23, 0
    %p92 = por %p90, %p91
    %s94 = sadd.s32 %s93, 1
    %p97 = scmp.eq.s32.totalorder %s17, 1
    %p98 = scmp.ne.s32.totalorder %s93, %s95
    %p99 = scmp.eq.s32.totalorder %s17, 0
    %p100 = por %p98, %p99
    %p101 = scmp.ne.s32.totalorder %s93, %s95
    %p102 = scmp.eq.s32.totalorder %s22, 1
    %p103 = por %p101, %p102
    %p104 = scmp.ne.s32.totalorder %s95, %s96
    %p105 = scmp.eq.s32.totalorder %s22, 0
    %p106 = por %p104, %p105
    %p107 = scmp.ne.s32.totalorder %s95, %s96
    %p108 = scmp.eq.s32.totalorder %s23, 1
    %p109 = por %p107, %p108
    %p111 = scmp.ne.s32.totalorder %s96, %s110
    %p112 = scmp.eq.s32.totalorder %s23, 0
    %p113 = por %p111, %p112
    %s115 = sadd.s32 %s114, 1
    %p118 = scmp.eq.s32.totalorder %s17, 1
    %p119 = scmp.ne.s32.totalorder %s114, %s116
    %p120 = scmp.eq.s32.totalorder %s17, 0
    %p121 = por %p119, %p120
    %p122 = scmp.ne.s32.totalorder %s114, %s116
    %p123 = scmp.eq.s32.totalorder %s22, 1
    %p124 = por %p122, %p123
    %p125 = scmp.ne.s32.totalorder %s116, %s117
    %p126 = scmp.eq.s32.totalorder %s22, 0
    %p127 = por %p125, %p126
    %p128 = scmp.ne.s32.totalorder %s116, %s117
    %p129 = scmp.eq.s32.totalorder %s23, 1
    %p130 = por %p128, %p129
    %p132 = scmp.ne.s32.totalorder %s117, %s131
    %p133 = scmp.eq.s32.totalorder %s23, 0
    %p134 = por %p132, %p133
    %s136 = sadd.s32 %s135, 1
    %p139 = scmp.eq.s32.totalorder %s17, 1
    %p140 = scmp.ne.s32.totalorder %s135, %s137
    %p141 = scmp.eq.s32.totalorder %s17, 0
    %p142 = por %p140, %p141
    %p143 = scmp.ne.s32.totalorder %s135, %s137
    %p144 = scmp.eq.s32.totalorder %s22, 1
    %p145 = por %p143, %p144
    %p146 = scmp.ne.s32.totalorder %s137, %s138
    %p147 = scmp.eq.s32.totalorder %s22, 0
    %p148 = por %p146, %p147
    %p149 = scmp.ne.s32.totalorder %s137, %s138
    %p150 = scmp.eq.s32.totalorder %s23, 1
    %p151 = por %p149, %p150
    %p153 = scmp.ne.s32.totalorder %s138, %s152
    %p154 = scmp.eq.s32.totalorder %s23, 0
    %p155 = por %p153, %p154
    %s157 = sadd.s32 %s156, 1
    %p160 = scmp.eq.s32.totalorder %s17, 1
    %p161 = scmp.ne.s32.totalorder %s156, %s158
    %p162 = scmp.eq.s32.totalorder %s17, 0
    %p163 = por %p161, %p162
    %p164 = scmp.ne.s32.totalorder %s156, %s158
    %p165 = scmp.eq.s32.totalorder %s22, 1
    %p166 = por %p164, %p165
    %p167 = scmp.ne.s32.totalorder %s158, %s159
    %p168 = scmp.eq.s32.totalorder %s22, 0
    %p169 = por %p167, %p168
    %p170 = scmp.ne.s32.totalorder %s158, %s159
    %p171 = scmp.eq.s32.totalorder %s23, 1
    %p172 = por %p170, %p171
    %p174 = scmp.ne.s32.totalorder %s159, %s173
    %p175 = scmp.eq.s32.totalorder %s23, 0
    %p176 = por %p174, %p175
    %s178 = sadd.s32 %s177, 1
    %p181 = scmp.eq.s32.totalorder %s17, 1
    %p182 = scmp.ne.s32.totalorder %s177, %s179
    %p183 = scmp.eq.s32.totalorder %s17, 0
    %p184 = por %p182, %p183
    %p185 = scmp.ne.s32.totalorder %s177, %s179
    %p186 = scmp.eq.s32.totalorder %s22, 1
    %p187 = por %p185, %p186
    %p188 = scmp.ne.s32.totalorder %s179, %s180
    %p189 = scmp.eq.s32.totalorder %s22, 0
    %p190 = por %p188, %p189
    %p191 = scmp.ne.s32.totalorder %s179, %s180
    %p192 = scmp.eq.s32.totalorder %s23, 1
    %p193 = por %p191, %p192
    %p195 = scmp.ne.s32.totalorder %s180, %s194
    %p196 = scmp.eq.s32.totalorder %s23, 0
    %p197 = por %p195, %p196
    %s199 = sadd.s32 %s198, 1
    %p202 = scmp.eq.s32.totalorder %s17, 1
    %p203 = scmp.ne.s32.totalorder %s198, %s200
    %p204 = scmp.eq.s32.totalorder %s17, 0
    %p205 = por %p203, %p204
    %p206 = scmp.ne.s32.totalorder %s198, %s200
    %p207 = scmp.eq.s32.totalorder %s22, 1
    %p208 = por %p206, %p207
    %p209 = scmp.ne.s32.totalorder %s200, %s201
    %p210 = scmp.eq.s32.totalorder %s22, 0
    %p211 = por %p209, %p210
    %p212 = scmp.ne.s32.totalorder %s200, %s201
    %p213 = scmp.eq.s32.totalorder %s23, 1
    %p214 = por %p212, %p213
    %p216 = scmp.ne.s32.totalorder %s201, %s215
    %p217 = scmp.eq.s32.totalorder %s23, 0
    %p218 = por %p216, %p217
    %s220 = sadd.s32 %s219, 1
    %p223 = scmp.eq.s32.totalorder %s17, 1
    %p224 = scmp.ne.s32.totalorder %s219, %s221
    %p225 = scmp.eq.s32.totalorder %s17, 0
    %p226 = por %p224, %p225
    %p227 = scmp.ne.s32.totalorder %s219, %s221
    %p228 = scmp.eq.s32.totalorder %s22, 1
    %p229 = por %p227, %p228
    %p230 = scmp.ne.s32.totalorder %s221, %s222
    %p231 = scmp.eq.s32.totalorder %s22, 0
    %p232 = por %p230, %p231
    %p233 = scmp.ne.s32.totalorder %s221, %s222
    %p234 = scmp.eq.s32.totalorder %s23, 1
    %p235 = por %p233, %p234
    %p237 = scmp.ne.s32.totalorder %s222, %s236
    %p238 = scmp.eq.s32.totalorder %s23, 0
    %p239 = por %p237, %p238
    %s241 = sadd.s32 %s240, 1
    %p244 = scmp.eq.s32.totalorder %s17, 1
    %p245 = scmp.ne.s32.totalorder %s240, %s242
    %p246 = scmp.eq.s32.totalorder %s17, 0
    %p247 = por %p245, %p246
    %p248 = scmp.ne.s32.totalorder %s240, %s242
    %p249 = scmp.eq.s32.totalorder %s22, 1
    %p250 = por %p248, %p249
    %p251 = scmp.ne.s32.totalorder %s242, %s243
    %p252 = scmp.eq.s32.totalorder %s22, 0
    %p253 = por %p251, %p252
    %p254 = scmp.ne.s32.totalorder %s242, %s243
    %p255 = scmp.eq.s32.totalorder %s23, 1
    %p256 = por %p254, %p255
    %p258 = scmp.ne.s32.totalorder %s243, %s257
    %p259 = scmp.eq.s32.totalorder %s23, 0
    %p260 = por %p258, %p259
    %s261 = ssub.s32 %s17, %s24
    %p262 = scmp.eq.s32.totalorder %s261, 0
    %s264 = sadd.s32 %s263, 1
    %s265 = scalar_select %p262, %s263, %s264
    %p268 = pneg %p262
    %p269 = scmp.eq.s32.totalorder %s17, 1
    %p270 = por %p268, %p269
    %p271 = scmp.ne.s32.totalorder %s263, %s266
    %p272 = scmp.eq.s32.totalorder %s17, 0
    %p273 = por %p271, %p272
    %p274 = scmp.ne.s32.totalorder %s263, %s266
    %p275 = scmp.eq.s32.totalorder %s22, 1
    %p276 = por %p274, %p275
    %p277 = scmp.ne.s32.totalorder %s266, %s267
    %p278 = scmp.eq.s32.totalorder %s22, 0
    %p279 = por %p277, %p278
    %p280 = scmp.ne.s32.totalorder %s266, %s267
    %p281 = scmp.eq.s32.totalorder %s23, 1
    %p282 = por %p280, %p281
    %p284 = scmp.ne.s32.totalorder %s267, %s283
    %p285 = scmp.eq.s32.totalorder %s23, 0
    %p286 = por %p284, %p285
    %p287 = scmp.le.s32.totalorder 1, %s17
    %p288 = scmp.lt.s32.totalorder %s17, 3
    %p289 = pnand %p287, %p288
    %p290 = pneg %p289
    // Predicated region
    $region9: #{upsampler_forward.2} parent=5 // pred_check
      _
    $region10: #{upsampler_forward.2} parent=5 // pred_check_branch
      %292 = sbr.rel (%p289) target = $region12
    $region11: #{upsampler_forward.2} parent=5 // pred_region
      %s293 = ssub.s32 %s17, 1
      // Predicated region
      $region13: #{upsampler_forward.2} parent=11 // pred_check
        %p294 = pneg %p64
      $region14: #{upsampler_forward.2} parent=11 // pred_check_branch
        %296 = sbr.rel (%p294) target = $region16
      $region15: #{upsampler_forward.2} parent=11 // pred_region
        _
      $region16: #{upsampler_forward.2} parent=11 // pred_fallthru
        _
      // Predicated region
      $region17: #{upsampler_forward.2} parent=11 // pred_check
        %p297 = pneg %p85
      $region18: #{upsampler_forward.2} parent=11 // pred_check_branch
        %299 = sbr.rel (%p297) target = $region20
      $region19: #{upsampler_forward.2} parent=11 // pred_region
        _
      $region20: #{upsampler_forward.2} parent=11 // pred_fallthru
        _
      // Predicated region
      $region21: #{upsampler_forward.2} parent=11 // pred_check
        %p300 = pneg %p106
      $region22: #{upsampler_forward.2} parent=11 // pred_check_branch
        %302 = sbr.rel (%p300) target = $region24
      $region23: #{upsampler_forward.2} parent=11 // pred_region
        _
      $region24: #{upsampler_forward.2} parent=11 // pred_fallthru
        _
      // Predicated region
      $region25: #{upsampler_forward.2} parent=11 // pred_check
        %p303 = pneg %p127
      $region26: #{upsampler_forward.2} parent=11 // pred_check_branch
        %305 = sbr.rel (%p303) target = $region28
      $region27: #{upsampler_forward.2} parent=11 // pred_region
        _
      $region28: #{upsampler_forward.2} parent=11 // pred_fallthru
        _
      // Predicated region
      $region29: #{upsampler_forward.2} parent=11 // pred_check
        %p306 = pneg %p148
      $region30: #{upsampler_forward.2} parent=11 // pred_check_branch
        %308 = sbr.rel (%p306) target = $region32
      $region31: #{upsampler_forward.2} parent=11 // pred_region
        _
      $region32: #{upsampler_forward.2} parent=11 // pred_fallthru
        _
      // Predicated region
      $region33: #{upsampler_forward.2} parent=11 // pred_check
        %p309 = pneg %p169
      $region34: #{upsampler_forward.2} parent=11 // pred_check_branch
        %311 = sbr.rel (%p309) target = $region36
      $region35: #{upsampler_forward.2} parent=11 // pred_region
        _
      $region36: #{upsampler_forward.2} parent=11 // pred_fallthru
        _
      // Predicated region
      $region37: #{upsampler_forward.2} parent=11 // pred_check
        %p312 = pneg %p190
      $region38: #{upsampler_forward.2} parent=11 // pred_check_branch
        %314 = sbr.rel (%p312) target = $region40
      $region39: #{upsampler_forward.2} parent=11 // pred_region
        _
      $region40: #{upsampler_forward.2} parent=11 // pred_fallthru
        _
      // Predicated region
      $region41: #{upsampler_forward.2} parent=11 // pred_check
        %p315 = pneg %p211
      $region42: #{upsampler_forward.2} parent=11 // pred_check_branch
        %317 = sbr.rel (%p315) target = $region44
      $region43: #{upsampler_forward.2} parent=11 // pred_region
        _
      $region44: #{upsampler_forward.2} parent=11 // pred_fallthru
        _
      // Predicated region
      $region45: #{upsampler_forward.2} parent=11 // pred_check
        %p318 = pneg %p232
      $region46: #{upsampler_forward.2} parent=11 // pred_check_branch
        %320 = sbr.rel (%p318) target = $region48
      $region47: #{upsampler_forward.2} parent=11 // pred_region
        _
      $region48: #{upsampler_forward.2} parent=11 // pred_fallthru
        _
      // Predicated region
      $region49: #{upsampler_forward.2} parent=11 // pred_check
        %p321 = pneg %p253
      $region50: #{upsampler_forward.2} parent=11 // pred_check_branch
        %323 = sbr.rel (%p321) target = $region52
      $region51: #{upsampler_forward.2} parent=11 // pred_region
        _
      $region52: #{upsampler_forward.2} parent=11 // pred_fallthru
        _
    $region12: #{upsampler_forward.2} parent=5 // pred_fallthru
      _
    %p324 = scmp.lt.s32.totalorder %s17, 2
    // Predicated region
    $region53: #{upsampler_forward.2} parent=5 // pred_check
      %p325 = pneg %p324
    $region54: #{upsampler_forward.2} parent=5 // pred_check_branch
      %327 = sbr.rel (%p325) target = $region56
    $region55: #{upsampler_forward.2} parent=5 // pred_region
      // Predicated region
      $region57: #{upsampler_forward.2} parent=55 // pred_check
        %p328 = pneg %p37
      $region58: #{upsampler_forward.2} parent=55 // pred_check_branch
        %330 = sbr.rel (%p328) target = $region60
      $region59: #{upsampler_forward.2} parent=55 // pred_region
        %p331 = scmp.lt.s32.totalorder %s17, 1
        %s332 = scalar_select %p331, %s17, 1
        %s333 = smul.addr %s332, 4
        %s334 = scalar_lea.vmem %s0, %s333
      $region60: #{upsampler_forward.2} parent=55 // pred_fallthru
        _
    $region56: #{upsampler_forward.2} parent=5 // pred_fallthru
      _
    %p335 = scmp.le.s32.totalorder 1, %s17
    %p336 = scmp.lt.s32.totalorder %s17, 3
    %p337 = pnand %p335, %p336
    %p338 = pneg %p337
    // Predicated region
    $region61: #{upsampler_forward.2} parent=5 // pred_check
      _
    $region62: #{upsampler_forward.2} parent=5 // pred_check_branch
      %340 = sbr.rel (%p337) target = $region64
    $region63: #{upsampler_forward.2} parent=5 // pred_region
      %s341 = ssub.s32 %s17, 1
      %p342 = scmp.lt.s32.totalorder %s22, 1
      %s343 = scalar_select %p342, %s22, 1
      %s344 = smul.addr %s343, 4
      %s345 = scalar_lea.vmem %s0, %s344
      %p346 = pneg %p43
      %p347 = pneg %p40
      %p348 = pneg %p64
      %p349 = pneg %p61
      %p350 = pneg %p85
      %p351 = pneg %p82
      %p352 = pneg %p106
      %p353 = pneg %p103
      %p354 = pneg %p127
      %p355 = pneg %p124
      %p356 = pneg %p148
      %p357 = pneg %p145
      %p358 = pneg %p169
      %p359 = pneg %p166
      %p360 = pneg %p190
      %p361 = pneg %p187
      %p362 = pneg %p211
      %p363 = pneg %p208
      %p364 = pneg %p232
      %p365 = pneg %p229
      %p366 = pneg %p253
      %p367 = pneg %p250
      %p368 = pneg %p279
      %p369 = pneg %p276
      %p370 = scmp.lt.s32.totalorder %s22, 1
      %s371 = scalar_select %p370, %s22, 1
      %s372 = smul.addr %s371, 2
      %s373 = smul.addr %s372, 4
      %s374 = scalar_lea.vmem %s11, %s373
      %p375 = scmp.lt.s32.totalorder %s22, 1
      %s376 = scalar_select %p375, %s22, 1
      %s377 = smul.addr %s376, 4
      %s378 = scalar_lea.vmem %s0, %s377
      %p379 = scmp.lt.s32.totalorder %s22, 1
      %s380 = scalar_select %p379, %s22, 1
      %s381 = smul.addr %s380, 2
      %s382 = smul.addr %s381, 4
      %s383 = scalar_lea.vmem %s11, %s382
      %vm385 = vcmask 253952
      %vm386 = vsmask.f32 256
      %vm387 = vmand %vm385, %vm386
      %v388 = vld [vmem:[#allocation3] sm:$0x1]
      %v389 = vsel %vm387, 0, %v388
      %390 = vst [vmem:[#allocation3] sm:$0x1] %v389
      %vm391 = vsmask.f32 7938
      %vm392 = vmand %vm385, %vm391
      %v393 = vld [vmem:[#allocation3 + $0x4] sm:$0x1]
      %v394 = vsel %vm392, 0, %v393
      %395 = vst [vmem:[#allocation3 + $0x4] sm:$0x1] %v394
      %vm396 = vcmask 122880
      %vm397 = vmand %vm396, %vm386
      %v398 = vld [vmem:[#allocation4] sm:$0x1]
      %v399 = vsel %vm397, 0, %v398
      %400 = vst [vmem:[#allocation4] sm:$0x1] %v399
      %vm401 = vmand %vm396, %vm391
      %v402 = vld [vmem:[#allocation4 + $0x8] sm:$0x1]
      %v403 = vsel %vm401, 0, %v402
      %404 = vst [vmem:[#allocation4 + $0x8] sm:$0x1] %v403
      %v405 = vld [vmem:[%s378] sm:$0xf]
      %v407 = vshrl.u32 %v405, 16
      %v409 = vrot.slane %v407, 7
      %v410 = vshll.u32 %v405, 16
      %v412 = vor.u32 %v409, %v410
      %v413 = vrot.slane %v409, 4
      %vm416 = vcmask 257024
      %vm417 = vmand %vm416, %vm391
      %v418 = vld [vmem:[#allocation3] sm:$0xf]
      %v419 = vsel %vm417, %v412, %v418
      %420 = vst [vmem:[#allocation3] sm:$0xf] %v419
      %v421 = vld [vmem:[#allocation3 + $0x4] sm:$0x1]
      %v422 = vsel %vm387, %v413, %v421
      %423 = vst [vmem:[#allocation3 + $0x4] sm:$0x1] %v422
      %v424 = vld [vmem:[#allocation3] sm:$0xf]
      %v425 = vld [vmem:[#allocation3 + $0x4] sm:$0x1]
      %v426 = vld [vmem:[#allocation3] sm:$0xe]
      %v429 = vunpack.c.l.b16 %v424
      %v430 = vunpack.c.l.b16 %v425
      %v431 = vpack.c.b16 %v430, %v429
      %v433 = vshrl.u32 %v431, 16
      %v435 = vshll.u32 %v431, 16
      %v437 = vrot.slane %v435, 1
      %v438 = vor.u32 %v433, %v437
      %439 = vrot.lane.b32.xlu0 %v438, 32
      %v440 = vpop.permute.xlu0 %439
      %v442 = vunpack.c.l.b16 %v426
      %v443 = vpack.c.b16 %v430, %v442
      %v444 = vrot.slane %v443, 1
      %445 = vrot.lane.b32.xlu0 %v444, 64
      %v446 = vpop.permute.xlu0 %445
      %vm447 = vcmask 261120
      %v450 = vsel %vm447, %v424, %v440
      %vm451 = vcmask 523264
      %v453 = vsel %vm451, %v450, %v446
      %v454 = vld [vmem:[%s1] sm:$0xf]
      %v455 = vld [vmem:[%s1 + $0x4] sm:$0xf]
      %v456 = vld [vmem:[%s1 + $0x8] sm:$0xf]
      %v457 = vld [vmem:[%s1 + $0xc] sm:$0xf]
      %v458 = vld [vmem:[%s1 + $0x10] sm:$0xf]
      %v459 = vld [vmem:[%s1 + $0x14] sm:$0xf]
      %v460 = vld [vmem:[%s1 + $0x18] sm:$0xf]
      %v461 = vld [vmem:[%s1 + $0x1c] sm:$0xf]
      %v462 = vld [vmem:[%s1 + $0x20] sm:$0xf]
      %v463 = vld [vmem:[%s1 + $0x24] sm:$0xf]
      %v464 = vld [vmem:[%s1 + $0x28] sm:$0xf]
      %v465 = vld [vmem:[%s1 + $0x2c] sm:$0xf]
      %v478 = vunpack.c.l.b16 %v454
      %v479 = vunpack.c.l.b16 %v455
      %v480 = vunpack.c.l.b16 %v456
      %v481 = vunpack.c.l.b16 %v457
      %v482 = vunpack.c.l.b16 %v458
      %v483 = vunpack.c.l.b16 %v459
      %v484 = vunpack.c.l.b16 %v460
      %v485 = vunpack.c.l.b16 %v461
      %v486 = vunpack.c.l.b16 %v462
      %v487 = vunpack.c.l.b16 %v463
      %v488 = vunpack.c.l.b16 %v464
      %v489 = vunpack.c.l.b16 %v465
      %v490 = vpack.c.b16 %v479, %v478
      %v491 = vpack.c.b16 %v481, %v480
      %v492 = vpack.c.b16 %v483, %v482
      %v493 = vpack.c.b16 %v485, %v484
      %v494 = vpack.c.b16 %v487, %v486
      %v495 = vpack.c.b16 %v489, %v488
      %vm502 = vcmask 785408
      %v503 = vsel %vm502, %v453, 0
      %505 = vmatprep.subr.bf16.mxu0 0
      %506 = vmatpush1.bf16.msra.mxu0 0
      %507 = vmatprep.subr.bf16.mxu0 0
      %508 = vmatpush1.bf16.msra.mxu0 0
      %509 = vmatprep.subr.bf16.mxu0 0
      %510 = vmatpush1.bf16.msra.mxu0 %v495
      %511 = vmatprep.subr.bf16.mxu0 0
      %512 = vmatpush1.bf16.msra.mxu0 %v494
      %513 = vmatprep.subr.bf16.mxu0 0
      %514 = vmatpush1.bf16.msra.mxu0 %v493
      %515 = vmatprep.subr.bf16.mxu0 0
      %516 = vmatpush1.bf16.msra.mxu0 %v492
      %517 = vmatprep.subr.bf16.mxu0 0
      %518 = vmatpush1.bf16.msra.mxu0 %v491
      %519 = vmatprep.subr.bf16.mxu0 0
      %520 = vmatpush1.bf16.msra.mxu0 %v490
      %521 = vmatprep.subr.bf16.mxu0 0
      %522 = vmatpush2.bf16.msra.mxu0 0
      %523 = vmatprep.subr.bf16.mxu0 0
      %524 = vmatpush2.bf16.msra.mxu0 0
      %525 = vmatprep.subr.bf16.mxu0 0
      %526 = vmatpush2.bf16.msra.mxu0 0
      %527 = vmatprep.subr.bf16.mxu0 0
      %528 = vmatpush2.bf16.msra.mxu0 0
      %529 = vmatprep.subr.bf16.mxu0 0
      %530 = vmatpush2.bf16.msra.mxu0 0
      %531 = vmatprep.subr.bf16.mxu0 0
      %532 = vmatpush2.bf16.msra.mxu0 0
      %533 = vmatprep.subr.bf16.mxu0 0
      %534 = vmatpush2.bf16.msra.mxu0 0
      %535 = vmatprep.subr.bf16.mxu0 0
      %536 = vmatpush2.bf16.msra.mxu0 0
      %537 = vmatprep.mubr.bf16.mxu0 0
      %538 = vmatmul.mubr.bf16.gmra.mxu0 %v503
      %v539 = vpop.f32.mrf.mxu0
      %v540 = vadd.f32 0.0, %v539
      %v541 = vpop.f32.mrf.mxu0
      %v542 = vpop.f32.mrf.mxu0
      %v543 = vpop.f32.mrf.mxu0
      %544 = vdwg.mxu0
      %v546 = vcombine.high %v540, %v540
      %v548 = vunpack.c.l.s4 1966171168
      %v549 = vunpack.c.0.s8 %v548
      %v550 = vlaneseq
      %v551 = vshrl.u32 %v550, 7
      %v552 = vsub.s32 %v549, %v551
      %v553 = vrot.slane %v540, %v552
      %v555 = vunpack.c.l.s4 1966171168
      %v556 = vunpack.c.0.s8 %v555
      %v557 = vlaneseq
      %v558 = vshrl.u32 %v557, 7
      %v559 = vsub.s32 %v556, %v558
      %v560 = vrot.slane %v546, %v559
      %v561 = vcombine.high %v553, %v553
      %v562 = vcombine.high %v560, %v560
      %v564 = vunpack.c.l.s4 1966171168
      %v565 = vunpack.c.0.s8 %v564
      %v566 = vlaneseq
      %v567 = vshrl.u32 %v566, 7
      %v568 = vsub.s32 %v565, %v567
      %v569 = vrot.slane %v553, %v568
      %v571 = vunpack.c.l.s4 1966171168
      %v572 = vunpack.c.0.s8 %v571
      %v573 = vlaneseq
      %v574 = vshrl.u32 %v573, 7
      %v575 = vsub.s32 %v572, %v574
      %v576 = vrot.slane %v560, %v575
      %v578 = vunpack.c.l.s4 1966171168
      %v579 = vunpack.c.0.s8 %v578
      %v580 = vlaneseq
      %v581 = vshrl.u32 %v580, 7
      %v582 = vsub.s32 %v579, %v581
      %v583 = vrot.slane %v561, %v582
      %v585 = vunpack.c.l.s4 1966171168
      %v586 = vunpack.c.0.s8 %v585
      %v587 = vlaneseq
      %v588 = vshrl.u32 %v587, 7
      %v589 = vsub.s32 %v586, %v588
      %v590 = vrot.slane %v562, %v589
      %v591 = vcombine.high %v569, %v569
      %v592 = vcombine.high %v576, %v576
      %v593 = vcombine.high %v583, %v583
      %v594 = vcombine.high %v590, %v590
      %vm603 = vcmask 122880
      %604 = vst.msk [vmem:[#allocation2] sm:$0x1] %vm603, %v569
      %605 = vst.msk [vmem:[#allocation2 + $0x2] sm:$0x1] %vm603, %v583
      %606 = vst.msk [vmem:[#allocation2 + $0x4] sm:$0x1] %vm603, %v591
      %607 = vst.msk [vmem:[#allocation2 + $0x6] sm:$0x1] %vm603, %v593
      %608 = vst.msk [vmem:[#allocation2 + $0x8] sm:$0x1] %vm603, %v576
      %609 = vst.msk [vmem:[#allocation2 + $0xa] sm:$0x1] %vm603, %v590
      %610 = vst.msk [vmem:[#allocation2 + $0xc] sm:$0x1] %vm603, %v592
      %611 = vst.msk [vmem:[#allocation2 + $0xe] sm:$0x1] %vm603, %v594
      %v612 = vlaneseq
      %v613 = vshrl.u32 %v612, 7
      %v614 = vsub.s32 0, %v613
      %v615 = vrot.slane %v569, %v614
      %v616 = vlaneseq
      %v617 = vshrl.u32 %v616, 7
      %v618 = vsub.s32 0, %v617
      %v619 = vrot.slane %v583, %v618
      %v620 = vlaneseq
      %v621 = vshrl.u32 %v620, 7
      %v622 = vsub.s32 0, %v621
      %v623 = vrot.slane %v591, %v622
      %v624 = vlaneseq
      %v625 = vshrl.u32 %v624, 7
      %v626 = vsub.s32 0, %v625
      %v627 = vrot.slane %v593, %v626
      %v628 = vlaneseq
      %v629 = vshrl.u32 %v628, 7
      %v630 = vsub.s32 0, %v629
      %v631 = vrot.slane %v576, %v630
      %v632 = vlaneseq
      %v633 = vshrl.u32 %v632, 7
      %v634 = vsub.s32 0, %v633
      %v635 = vrot.slane %v590, %v634
      %v636 = vlaneseq
      %v637 = vshrl.u32 %v636, 7
      %v638 = vsub.s32 0, %v637
      %v639 = vrot.slane %v592, %v638
      %v640 = vlaneseq
      %v641 = vshrl.u32 %v640, 7
      %v642 = vsub.s32 0, %v641
      %v643 = vrot.slane %v594, %v642
      %644 = vrot.lane.b32.xlu0 %v615, 112
      %v645 = vpop.permute.xlu0 %644
      %646 = vrot.lane.b32.xlu0 %v619, 112
      %v647 = vpop.permute.xlu0 %646
      %648 = vrot.lane.b32.xlu0 %v623, 112
      %v649 = vpop.permute.xlu0 %648
      %650 = vrot.lane.b32.xlu0 %v627, 112
      %v651 = vpop.permute.xlu0 %650
      %652 = vrot.lane.b32.xlu0 %v631, 112
      %v653 = vpop.permute.xlu0 %652
      %654 = vrot.lane.b32.xlu0 %v635, 112
      %v655 = vpop.permute.xlu0 %654
      %656 = vrot.lane.b32.xlu0 %v639, 112
      %v657 = vpop.permute.xlu0 %656
      %658 = vrot.lane.b32.xlu0 %v643, 112
      %v659 = vpop.permute.xlu0 %658
      %668 = vst.msk [vmem:[#allocation2 + $0x1] sm:$0x1] %vm603, %v645
      %669 = vst.msk [vmem:[#allocation2 + $0x3] sm:$0x1] %vm603, %v647
      %670 = vst.msk [vmem:[#allocation2 + $0x5] sm:$0x1] %vm603, %v649
      %671 = vst.msk [vmem:[#allocation2 + $0x7] sm:$0x1] %vm603, %v651
      %672 = vst.msk [vmem:[#allocation2 + $0x9] sm:$0x1] %vm603, %v653
      %673 = vst.msk [vmem:[#allocation2 + $0xb] sm:$0x1] %vm603, %v655
      %674 = vst.msk [vmem:[#allocation2 + $0xd] sm:$0x1] %vm603, %v657
      %675 = vst.msk [vmem:[#allocation2 + $0xf] sm:$0x1] %vm603, %v659
      %v676 = vld [vmem:[#allocation2] sm:$0x3]
      %v677 = vld [vmem:[#allocation2 + $0x2] sm:$0x3]
      %v678 = vld [vmem:[#allocation2 + $0x4] sm:$0x3]
      %v679 = vld [vmem:[#allocation2 + $0x6] sm:$0x3]
      %v680 = vld [vmem:[#allocation2 + $0x8] sm:$0x3]
      %v681 = vld [vmem:[#allocation2 + $0xa] sm:$0x3]
      %v682 = vld [vmem:[#allocation2 + $0xc] sm:$0x3]
      %v683 = vld [vmem:[#allocation2 + $0xe] sm:$0x3]
      %v684 = vld [vmem:[%s2] sm:$0x1]
      %v686 = vlaneseq
      %v687 = vshrl.u32 %v686, 7
      %v688 = vsub.s32 0, %v687
      %v689 = vrot.slane %v684, %v688
      %v690 = vcombine.high %v689, %v689
      %v692 = vunpack.c.l.s4 1983009808
      %v693 = vunpack.c.0.s8 %v692
      %v694 = vlaneseq
      %v695 = vshrl.u32 %v694, 7
      %v696 = vsub.s32 %v693, %v695
      %v697 = vrot.slane %v689, %v696
      %v699 = vunpack.c.l.s4 1983009808
      %v700 = vunpack.c.0.s8 %v699
      %v701 = vlaneseq
      %v702 = vshrl.u32 %v701, 7
      %v703 = vsub.s32 %v700, %v702
      %v704 = vrot.slane %v690, %v703
      %v705 = vcombine.high %v697, %v697
      %v706 = vcombine.high %v704, %v704
      %v711 = vadd.f32 %v676, %v697
      %v712 = vadd.f32 %v677, %v705
      %v713 = vadd.f32 %v678, %v704
      %v714 = vadd.f32 %v679, %v706
      %v715 = vadd.f32 %v680, %v697
      %v716 = vadd.f32 %v681, %v705
      %v717 = vadd.f32 %v682, %v704
      %v718 = vadd.f32 %v683, %v706
      %v727 = vcombine.low %v711, %v712
      %v728 = vcombine.low %v713, %v714
      %v730 = vunpack.c.l.s4 1983009808
      %v731 = vunpack.c.0.s8 %v730
      %v732 = vlaneseq
      %v733 = vshrl.u32 %v732, 7
      %v734 = vsub.s32 %v731, %v733
      %v735 = vrot.slane %v727, %v734
      %v737 = vunpack.c.l.s4 1983009808
      %v738 = vunpack.c.0.s8 %v737
      %v739 = vlaneseq
      %v740 = vshrl.u32 %v739, 7
      %v741 = vsub.s32 %v738, %v740
      %v742 = vrot.slane %v728, %v741
      %v743 = vcombine.low %v735, %v742
      %v744 = vcombine.low %v715, %v716
      %v745 = vcombine.low %v717, %v718
      %v747 = vunpack.c.l.s4 1983009808
      %v748 = vunpack.c.0.s8 %v747
      %v749 = vlaneseq
      %v750 = vshrl.u32 %v749, 7
      %v751 = vsub.s32 %v748, %v750
      %v752 = vrot.slane %v744, %v751
      %v754 = vunpack.c.l.s4 1983009808
      %v755 = vunpack.c.0.s8 %v754
      %v756 = vlaneseq
      %v757 = vshrl.u32 %v756, 7
      %v758 = vsub.s32 %v755, %v757
      %v759 = vrot.slane %v745, %v758
      %v760 = vcombine.low %v752, %v759
      %vm763 = vcmask 130048
      %v764 = vsel %vm763, %v743, 0.0
      %v765 = vsel %vm763, %v760, 0.0
      %v766 = vadd.f32 %v764, %v765
      %v767 = vrot.slane %v766, 4
      %v768 = vadd.f32 %v766, %v767
      %v769 = vrot.slane %v768, 2
      %v770 = vadd.f32 %v768, %v769
      %v771 = vrot.slane %v770, 1
      %v772 = vadd.f32 %v770, %v771
      %v773 = vmul.f32 %v711, %v711
      %v774 = vmul.f32 %v712, %v712
      %v775 = vmul.f32 %v713, %v713
      %v776 = vmul.f32 %v714, %v714
      %v777 = vmul.f32 %v715, %v715
      %v778 = vmul.f32 %v716, %v716
      %v779 = vmul.f32 %v717, %v717
      %v780 = vmul.f32 %v718, %v718
      %v789 = vcombine.low %v773, %v774
      %v790 = vcombine.low %v775, %v776
      %v792 = vunpack.c.l.s4 1983009808
      %v793 = vunpack.c.0.s8 %v792
      %v794 = vlaneseq
      %v795 = vshrl.u32 %v794, 7
      %v796 = vsub.s32 %v793, %v795
      %v797 = vrot.slane %v789, %v796
      %v799 = vunpack.c.l.s4 1983009808
      %v800 = vunpack.c.0.s8 %v799
      %v801 = vlaneseq
      %v802 = vshrl.u32 %v801, 7
      %v803 = vsub.s32 %v800, %v802
      %v804 = vrot.slane %v790, %v803
      %v805 = vcombine.low %v797, %v804
      %v806 = vcombine.low %v777, %v778
      %v807 = vcombine.low %v779, %v780
      %v809 = vunpack.c.l.s4 1983009808
      %v810 = vunpack.c.0.s8 %v809
      %v811 = vlaneseq
      %v812 = vshrl.u32 %v811, 7
      %v813 = vsub.s32 %v810, %v812
      %v814 = vrot.slane %v806, %v813
      %v816 = vunpack.c.l.s4 1983009808
      %v817 = vunpack.c.0.s8 %v816
      %v818 = vlaneseq
      %v819 = vshrl.u32 %v818, 7
      %v820 = vsub.s32 %v817, %v819
      %v821 = vrot.slane %v807, %v820
      %v822 = vcombine.low %v814, %v821
      %v825 = vsel %vm763, %v805, 0.0
      %v826 = vsel %vm763, %v822, 0.0
      %v827 = vadd.f32 %v825, %v826
      %v828 = vrot.slane %v827, 4
      %v829 = vadd.f32 %v827, %v828
      %v830 = vrot.slane %v829, 2
      %v831 = vadd.f32 %v829, %v830
      %v832 = vrot.slane %v831, 1
      %v833 = vadd.f32 %v831, %v832
      %v834 = vmul.f32 %v772, 0.0625
      %v835 = vmul.f32 %v833, 0.0625
      %v836 = vmul.f32 %v834, %v834
      %v837 = vsub.f32 %v835, %v836
      %v839 = vcombine.high %v834, %v834
      %v841 = vunpack.c.l.s4 1983009808
      %v842 = vunpack.c.0.s8 %v841
      %v843 = vlaneseq
      %v844 = vshrl.u32 %v843, 7
      %v845 = vsub.s32 %v842, %v844
      %v846 = vrot.slane %v834, %v845
      %v848 = vunpack.c.l.s4 1983009808
      %v849 = vunpack.c.0.s8 %v848
      %v850 = vlaneseq
      %v851 = vshrl.u32 %v850, 7
      %v852 = vsub.s32 %v849, %v851
      %v853 = vrot.slane %v839, %v852
      %v854 = vcombine.high %v846, %v846
      %v855 = vcombine.high %v853, %v853
      %v860 = vsub.f32 %v711, %v846
      %v861 = vsub.f32 %v712, %v854
      %v862 = vsub.f32 %v713, %v853
      %v863 = vsub.f32 %v714, %v855
      %v864 = vsub.f32 %v715, %v846
      %v865 = vsub.f32 %v716, %v854
      %v866 = vsub.f32 %v717, %v853
      %v867 = vsub.f32 %v718, %v855
      %v868 = vadd.f32 %v837, 1e-06
      %v869 = vrsqrt.pop %v868
      %v871 = vcombine.high %v869, %v869
      %v873 = vunpack.c.l.s4 1983009808
      %v874 = vunpack.c.0.s8 %v873
      %v875 = vlaneseq
      %v876 = vshrl.u32 %v875, 7
      %v877 = vsub.s32 %v874, %v876
      %v878 = vrot.slane %v869, %v877
      %v880 = vunpack.c.l.s4 1983009808
      %v881 = vunpack.c.0.s8 %v880
      %v882 = vlaneseq
      %v883 = vshrl.u32 %v882, 7
      %v884 = vsub.s32 %v881, %v883
      %v885 = vrot.slane %v871, %v884
      %v886 = vcombine.high %v878, %v878
      %v887 = vcombine.high %v885, %v885
      %v892 = vmul.f32 %v860, %v878
      %v893 = vmul.f32 %v861, %v886
      %v894 = vmul.f32 %v862, %v885
      %v895 = vmul.f32 %v863, %v887
      %v896 = vmul.f32 %v864, %v878
      %v897 = vmul.f32 %v865, %v886
      %v898 = vmul.f32 %v866, %v885
      %v899 = vmul.f32 %v867, %v887
      %v900 = vld [vmem:[%s3] sm:$0x1]
      %v902 = vlaneseq
      %v903 = vshrl.u32 %v902, 7
      %v904 = vsub.s32 0, %v903
      %v905 = vrot.slane %v900, %v904
      %v906 = vcombine.high %v905, %v905
      %v908 = vunpack.c.l.s4 1983009808
      %v909 = vunpack.c.0.s8 %v908
      %v910 = vlaneseq
      %v911 = vshrl.u32 %v910, 7
      %v912 = vsub.s32 %v909, %v911
      %v913 = vrot.slane %v905, %v912
      %v915 = vunpack.c.l.s4 1983009808
      %v916 = vunpack.c.0.s8 %v915
      %v917 = vlaneseq
      %v918 = vshrl.u32 %v917, 7
      %v919 = vsub.s32 %v916, %v918
      %v920 = vrot.slane %v906, %v919
      %v921 = vcombine.high %v913, %v913
      %v922 = vcombine.high %v920, %v920
      %v927 = vmul.f32 %v892, %v913
      %v928 = vmul.f32 %v893, %v921
      %v929 = vmul.f32 %v894, %v920
      %v930 = vmul.f32 %v895, %v922
      %v931 = vmul.f32 %v896, %v913
      %v932 = vmul.f32 %v897, %v921
      %v933 = vmul.f32 %v898, %v920
      %v934 = vmul.f32 %v899, %v922
      %v935 = vld [vmem:[%s4] sm:$0x1]
      %v937 = vlaneseq
      %v938 = vshrl.u32 %v937, 7
      %v939 = vsub.s32 0, %v938
      %v940 = vrot.slane %v935, %v939
      %v941 = vcombine.high %v940, %v940
      %v943 = vunpack.c.l.s4 1983009808
      %v944 = vunpack.c.0.s8 %v943
      %v945 = vlaneseq
      %v946 = vshrl.u32 %v945, 7
      %v947 = vsub.s32 %v944, %v946
      %v948 = vrot.slane %v940, %v947
      %v950 = vunpack.c.l.s4 1983009808
      %v951 = vunpack.c.0.s8 %v950
      %v952 = vlaneseq
      %v953 = vshrl.u32 %v952, 7
      %v954 = vsub.s32 %v951, %v953
      %v955 = vrot.slane %v941, %v954
      %v956 = vcombine.high %v948, %v948
      %v957 = vcombine.high %v955, %v955
      %v962 = vadd.f32 %v927, %v948
      %v963 = vadd.f32 %v928, %v956
      %v964 = vadd.f32 %v929, %v955
      %v965 = vadd.f32 %v930, %v957
      %v966 = vadd.f32 %v931, %v948
      %v967 = vadd.f32 %v932, %v956
      %v968 = vadd.f32 %v933, %v955
      %v969 = vadd.f32 %v934, %v957
      %v970 = vxor.u32 %v962, 2147483648
      %v971 = vxor.u32 %v963, 2147483648
      %v972 = vxor.u32 %v964, 2147483648
      %v973 = vxor.u32 %v965, 2147483648
      %v974 = vxor.u32 %v966, 2147483648
      %v975 = vxor.u32 %v967, 2147483648
      %v976 = vxor.u32 %v968, 2147483648
      %v977 = vxor.u32 %v969, 2147483648
      %v978 = vmul.f32 %v970, 1.442695
      %v979 = vpow.pop %v978
      %v980 = vmul.f32 %v971, 1.442695
      %v981 = vpow.pop %v980
      %v982 = vmul.f32 %v972, 1.442695
      %v983 = vpow.pop %v982
      %v984 = vmul.f32 %v973, 1.442695
      %v985 = vpow.pop %v984
      %v986 = vmul.f32 %v974, 1.442695
      %v987 = vpow.pop %v986
      %v988 = vmul.f32 %v975, 1.442695
      %v989 = vpow.pop %v988
      %v990 = vmul.f32 %v976, 1.442695
      %v991 = vpow.pop %v990
      %v992 = vmul.f32 %v977, 1.442695
      %v993 = vpow.pop %v992
      %v994 = vadd.f32 %v979, 1.0
      %v995 = vadd.f32 %v981, 1.0
      %v996 = vadd.f32 %v983, 1.0
      %v997 = vadd.f32 %v985, 1.0
      %v998 = vadd.f32 %v987, 1.0
      %v999 = vadd.f32 %v989, 1.0
      %v1000 = vadd.f32 %v991, 1.0
      %v1001 = vadd.f32 %v993, 1.0
      %v1002 = vrcp.pop %v994
      %v1003 = vmul.f32 1.0, %v1002
      %v1004 = vrcp.pop %v995
      %v1005 = vmul.f32 1.0, %v1004
      %v1006 = vrcp.pop %v996
      %v1007 = vmul.f32 1.0, %v1006
      %v1008 = vrcp.pop %v997
      %v1009 = vmul.f32 1.0, %v1008
      %v1010 = vrcp.pop %v998
      %v1011 = vmul.f32 1.0, %v1010
      %v1012 = vrcp.pop %v999
      %v1013 = vmul.f32 1.0, %v1012
      %v1014 = vrcp.pop %v1000
      %v1015 = vmul.f32 1.0, %v1014
      %v1016 = vrcp.pop %v1001
      %v1017 = vmul.f32 1.0, %v1016
      %v1018 = vmul.f32 %v962, %v1003
      %v1019 = vmul.f32 %v963, %v1005
      %v1020 = vmul.f32 %v964, %v1007
      %v1021 = vmul.f32 %v965, %v1009
      %v1022 = vmul.f32 %v966, %v1011
      %v1023 = vmul.f32 %v967, %v1013
      %v1024 = vmul.f32 %v968, %v1015
      %v1025 = vmul.f32 %v969, %v1017
      %v1034 = vcombine.low %v1018, %v1019
      %v1035 = vcombine.low %v1020, %v1021
      %v1037 = vunpack.c.l.s4 1983009808
      %v1038 = vunpack.c.0.s8 %v1037
      %v1039 = vlaneseq
      %v1040 = vshrl.u32 %v1039, 7
      %v1041 = vsub.s32 %v1038, %v1040
      %v1042 = vrot.slane %v1034, %v1041
      %v1044 = vunpack.c.l.s4 1983009808
      %v1045 = vunpack.c.0.s8 %v1044
      %v1046 = vlaneseq
      %v1047 = vshrl.u32 %v1046, 7
      %v1048 = vsub.s32 %v1045, %v1047
      %v1049 = vrot.slane %v1035, %v1048
      %v1050 = vcombine.low %v1042, %v1049
      %v1051 = vcombine.low %v1022, %v1023
      %v1052 = vcombine.low %v1024, %v1025
      %v1054 = vunpack.c.l.s4 1983009808
      %v1055 = vunpack.c.0.s8 %v1054
      %v1056 = vlaneseq
      %v1057 = vshrl.u32 %v1056, 7
      %v1058 = vsub.s32 %v1055, %v1057
      %v1059 = vrot.slane %v1051, %v1058
      %v1061 = vunpack.c.l.s4 1983009808
      %v1062 = vunpack.c.0.s8 %v1061
      %v1063 = vlaneseq
      %v1064 = vshrl.u32 %v1063, 7
      %v1065 = vsub.s32 %v1062, %v1064
      %v1066 = vrot.slane %v1052, %v1065
      %v1067 = vcombine.low %v1059, %v1066
      %v1070 = vpack.c.bf16 %v1067, %v1050
      %v1072 = vunpack.c.l.b16 %v1070
      %v1073 = vunpack.c.h.b16 %v1070
      %v1074 = vpack.c.b16 %v1072, %v1072
      %v1075 = vpack.c.b16 %v1073, %v1073
      %vm1076 = vsmask.f32 4368
      %vm1077 = vmor %vm386, %vm1076
      %v1079 = vshrl.u32 %v1074, 16
      %v1081 = vrot.slane %v1079, 7
      %v1082 = vshll.u32 %v1074, 16
      %v1084 = vor.u32 %v1081, %v1082
      %v1085 = vrot.slane %v1081, 4
      %v1087 = vshrl.u32 %v1075, 16
      %v1089 = vrot.slane %v1087, 7
      %v1090 = vshll.u32 %v1075, 16
      %v1092 = vor.u32 %v1089, %v1090
      %v1093 = vsel %vm1077, %v1085, %v1092
      %v1094 = vrot.slane %v1089, 4
      %vm1098 = vcmask 125952
      %vm1099 = vmand %vm1098, %vm391
      %v1100 = vld [vmem:[#allocation4] sm:$0xf]
      %v1101 = vsel %vm1099, %v1084, %v1100
      %1102 = vst [vmem:[#allocation4] sm:$0xf] %v1101
      %vm1103 = vcmask 125952
      %1104 = vst.msk [vmem:[#allocation4 + $0x4] sm:$0xf] %vm1103, %v1093
      %v1105 = vld [vmem:[#allocation4 + $0x8] sm:$0x1]
      %v1106 = vsel %vm397, %v1094, %v1105
      %1107 = vst [vmem:[#allocation4 + $0x8] sm:$0x1] %v1106
      %v1108 = vld [vmem:[#allocation4] sm:$0xf]
      %v1109 = vld [vmem:[#allocation4 + $0x4] sm:$0xf]
      %v1110 = vld [vmem:[#allocation4 + $0x8] sm:$0x1]
      %v1111 = vld [vmem:[#allocation4] sm:$0xe]
      %v1114 = vunpack.c.l.b16 %v1108
      %v1115 = vunpack.c.l.b16 %v1109
      %v1116 = vpack.c.b16 %v1115, %v1114
      %v1118 = vunpack.c.l.b16 %v1110
      %v1119 = vpack.c.b16 %v1118, %v1118
      %vm1120 = vsmask.f32 7424
      %v1122 = vshrl.u32 %v1116, 16
      %v1124 = vshll.u32 %v1116, 16
      %v1126 = vrot.slane %v1124, 1
      %v1127 = vor.u32 %v1122, %v1126
      %v1129 = vshll.u32 %v1119, 16
      %v1131 = vrot.slane %v1129, 1
      %v1132 = vsel %vm1120, %v1127, %v1131
      %1133 = vrot.lane.b32.xlu0 %v1132, 16
      %v1134 = vpop.permute.xlu0 %1133
      %v1136 = vunpack.c.l.b16 %v1111
      %v1137 = vpack.c.b16 %v1115, %v1136
      %vm1138 = vcmask 1046528
      %v1139 = vrot.slane %v1137, 1
      %v1140 = vrot.slane %v1119, 1
      %v1141 = vsel %vm1138, %v1139, %v1140
      %1142 = vrot.lane.b32.xlu0 %v1141, 32
      %v1143 = vpop.permute.xlu0 %1142
      %v1145 = vsel %vm763, %v1116, %v1134
      %v1147 = vsel %vm447, %v1145, %v1143
      %v1148 = vld [vmem:[%s5] sm:$0xf]
      %v1149 = vld [vmem:[%s5 + $0x4] sm:$0xf]
      %v1150 = vld [vmem:[%s5 + $0x8] sm:$0xf]
      %v1151 = vld [vmem:[%s5 + $0xc] sm:$0xf]
      %v1152 = vld [vmem:[%s5 + $0x10] sm:$0xf]
      %v1153 = vld [vmem:[%s5 + $0x14] sm:$0xf]
      %v1154 = vld [vmem:[%s6] sm:$0x1]
      %v1156 = vlaneseq
      %v1157 = vshrl.u32 %v1156, 7
      %v1158 = vsub.s32 0, %v1157
      %v1159 = vrot.slane %v1154, %v1158
      %v1167 = vunpack.c.l.b16 %v1148
      %v1168 = vunpack.c.l.b16 %v1149
      %v1169 = vunpack.c.l.b16 %v1150
      %v1170 = vunpack.c.l.b16 %v1151
      %v1171 = vunpack.c.l.b16 %v1152
      %v1172 = vunpack.c.l.b16 %v1153
      %v1173 = vpack.c.b16 %v1168, %v1167
      %v1174 = vpack.c.b16 %v1170, %v1169
      %v1175 = vpack.c.b16 %v1172, %v1171
      %vm1179 = vcmask 392192
      %v1180 = vsel %vm1179, %v1147, 0
      %1182 = vmatprep.subr.bf16.mxu0 0
      %1183 = vmatpush1.bf16.msra.mxu0 0
      %1184 = vmatprep.subr.bf16.mxu0 0
      %1185 = vmatpush1.bf16.msra.mxu0 0
      %1186 = vmatprep.subr.bf16.mxu0 0
      %1187 = vmatpush1.bf16.msra.mxu0 0
      %1188 = vmatprep.subr.bf16.mxu0 0
      %1189 = vmatpush1.bf16.msra.mxu0 0
      %1190 = vmatprep.subr.bf16.mxu0 0
      %1191 = vmatpush1.bf16.msra.mxu0 0
      %1192 = vmatprep.subr.bf16.mxu0 0
      %1193 = vmatpush1.bf16.msra.mxu0 %v1175
      %1194 = vmatprep.subr.bf16.mxu0 0
      %1195 = vmatpush1.bf16.msra.mxu0 %v1174
      %1196 = vmatprep.subr.bf16.mxu0 0
      %1197 = vmatpush1.bf16.msra.mxu0 %v1173
      %1198 = vmatprep.subr.bf16.mxu0 0
      %1199 = vmatpush2.bf16.msra.mxu0 0
      %1200 = vmatprep.subr.bf16.mxu0 0
      %1201 = vmatpush2.bf16.msra.mxu0 0
      %1202 = vmatprep.subr.bf16.mxu0 0
      %1203 = vmatpush2.bf16.msra.mxu0 0
      %1204 = vmatprep.subr.bf16.mxu0 0
      %1205 = vmatpush2.bf16.msra.mxu0 0
      %1206 = vmatprep.subr.bf16.mxu0 0
      %1207 = vmatpush2.bf16.msra.mxu0 0
      %1208 = vmatprep.subr.bf16.mxu0 0
      %1209 = vmatpush2.bf16.msra.mxu0 0
      %1210 = vmatprep.subr.bf16.mxu0 0
      %1211 = vmatpush2.bf16.msra.mxu0 0
      %1212 = vmatprep.subr.bf16.mxu0 0
      %1213 = vmatpush2.bf16.msra.mxu0 0
      %1214 = vmatprep.mubr.bf16.mxu0 0
      %1215 = vmatmul.mubr.bf16.gmra.mxu0 %v1180
      %v1216 = vpop.f32.mrf.mxu0
      %v1217 = vadd.f32 %v1159, %v1216
      %v1218 = vpop.f32.mrf.mxu0
      %v1219 = vpop.f32.mrf.mxu0
      %v1220 = vadd.f32 %v1159, %v1219
      %v1221 = vpop.f32.mrf.mxu0
      %1222 = vdwg.mxu0
      %v1223 = vsel %vm763, %v1217, 0.0
      %v1224 = vsel %vm763, %v1220, 0.0
      %v1225 = vadd.f32 %v1223, %v1224
      %v1226 = vrot.slane %v1225, 4
      %v1227 = vadd.f32 %v1225, %v1226
      %v1228 = vrot.slane %v1227, 2
      %v1229 = vadd.f32 %v1227, %v1228
      %v1230 = vrot.slane %v1229, 1
      %v1231 = vadd.f32 %v1229, %v1230
      %v1232 = vmul.f32 %v1217, %v1217
      %v1233 = vmul.f32 %v1220, %v1220
      %v1234 = vsel %vm763, %v1232, 0.0
      %v1235 = vsel %vm763, %v1233, 0.0
      %v1236 = vadd.f32 %v1234, %v1235
      %v1237 = vrot.slane %v1236, 4
      %v1238 = vadd.f32 %v1236, %v1237
      %v1239 = vrot.slane %v1238, 2
      %v1240 = vadd.f32 %v1238, %v1239
      %v1241 = vrot.slane %v1240, 1
      %v1242 = vadd.f32 %v1240, %v1241
      %v1243 = vmul.f32 %v1231, 0.0625
      %v1244 = vmul.f32 %v1242, 0.0625
      %v1245 = vmul.f32 %v1243, %v1243
      %v1246 = vsub.f32 %v1244, %v1245
      %v1247 = vsub.f32 %v1217, %v1243
      %v1248 = vsub.f32 %v1220, %v1243
      %v1249 = vadd.f32 %v1246, 1e-06
      %v1250 = vrsqrt.pop %v1249
      %v1251 = vmul.f32 %v1247, %v1250
      %v1252 = vmul.f32 %v1248, %v1250
      %v1253 = vld [vmem:[%s7] sm:$0x1]
      %v1255 = vlaneseq
      %v1256 = vshrl.u32 %v1255, 7
      %v1257 = vsub.s32 0, %v1256
      %v1258 = vrot.slane %v1253, %v1257
      %v1260 = vmul.f32 %v1251, %v1258
      %v1261 = vmul.f32 %v1252, %v1258
      %v1262 = vld [vmem:[%s8] sm:$0x1]
      %v1264 = vlaneseq
      %v1265 = vshrl.u32 %v1264, 7
      %v1266 = vsub.s32 0, %v1265
      %v1267 = vrot.slane %v1262, %v1266
      %v1269 = vadd.f32 %v1260, %v1267
      %v1270 = vadd.f32 %v1261, %v1267
      %v1271 = vxor.u32 %v1269, 2147483648
      %v1272 = vxor.u32 %v1270, 2147483648
      %v1273 = vmul.f32 %v1271, 1.442695
      %v1274 = vpow.pop %v1273
      %v1275 = vmul.f32 %v1272, 1.442695
      %v1276 = vpow.pop %v1275
      %v1277 = vadd.f32 %v1274, 1.0
      %v1278 = vadd.f32 %v1276, 1.0
      %v1279 = vrcp.pop %v1277
      %v1280 = vmul.f32 1.0, %v1279
      %v1281 = vrcp.pop %v1278
      %v1282 = vmul.f32 1.0, %v1281
      %v1283 = vmul.f32 %v1269, %v1280
      %v1284 = vmul.f32 %v1270, %v1282
      %v1285 = vpack.c.bf16 %v1284, %v1283
      %v1287 = vunpack.c.l.b16 %v1285
      %v1288 = vunpack.c.h.b16 %v1285
      %v1289 = vpack.c.b16 %v1287, %v1287
      %v1290 = vpack.c.b16 %v1288, %v1288
      %v1292 = vshrl.u32 %v1289, 16
      %v1294 = vrot.slane %v1292, 7
      %v1295 = vshll.u32 %v1289, 16
      %v1297 = vor.u32 %v1294, %v1295
      %v1298 = vrot.slane %v1294, 4
      %v1300 = vshrl.u32 %v1290, 16
      %v1302 = vrot.slane %v1300, 7
      %v1303 = vshll.u32 %v1290, 16
      %v1305 = vor.u32 %v1302, %v1303
      %v1306 = vsel %vm1077, %v1298, %v1305
      %v1307 = vrot.slane %v1302, 4
      %v1311 = vsel %vm1099, %v1297, %v1108
      %1312 = vst [vmem:[#allocation4] sm:$0xf] %v1311
      %1313 = vst.msk [vmem:[#allocation4 + $0x4] sm:$0xf] %vm1103, %v1306
      %v1314 = vld [vmem:[#allocation4 + $0x8] sm:$0x1]
      %v1315 = vsel %vm397, %v1307, %v1314
      %1316 = vst [vmem:[#allocation4 + $0x8] sm:$0x1] %v1315
      %v1317 = vld [vmem:[#allocation4] sm:$0xf]
      %v1318 = vld [vmem:[#allocation4 + $0x4] sm:$0xf]
      %v1319 = vld [vmem:[#allocation4 + $0x8] sm:$0x1]
      %v1320 = vld [vmem:[#allocation4] sm:$0xe]
      %v1323 = vunpack.c.l.b16 %v1317
      %v1324 = vunpack.c.l.b16 %v1318
      %v1325 = vpack.c.b16 %v1324, %v1323
      %v1327 = vunpack.c.l.b16 %v1319
      %v1328 = vpack.c.b16 %v1327, %v1327
      %v1330 = vshrl.u32 %v1325, 16
      %v1332 = vshll.u32 %v1325, 16
      %v1334 = vrot.slane %v1332, 1
      %v1335 = vor.u32 %v1330, %v1334
      %v1337 = vshll.u32 %v1328, 16
      %v1339 = vrot.slane %v1337, 1
      %v1340 = vsel %vm1120, %v1335, %v1339
      %1341 = vrot.lane.b32.xlu0 %v1340, 16
      %v1342 = vpop.permute.xlu0 %1341
      %v1344 = vunpack.c.l.b16 %v1320
      %v1345 = vpack.c.b16 %v1324, %v1344
      %v1346 = vrot.slane %v1345, 1
      %v1347 = vrot.slane %v1328, 1
      %v1348 = vsel %vm1138, %v1346, %v1347
      %1349 = vrot.lane.b32.xlu0 %v1348, 32
      %v1350 = vpop.permute.xlu0 %1349
      %v1352 = vsel %vm763, %v1325, %v1342
      %v1354 = vsel %vm447, %v1352, %v1350
      %v1355 = vld [vmem:[%s9] sm:$0xf]
      %v1356 = vld [vmem:[%s9 + $0x4] sm:$0xf]
      %v1357 = vld [vmem:[%s9 + $0x8] sm:$0xf]
      %v1358 = vld [vmem:[%s9 + $0xc] sm:$0xf]
      %v1359 = vld [vmem:[%s9 + $0x10] sm:$0xf]
      %v1360 = vld [vmem:[%s9 + $0x14] sm:$0xf]
      %v1361 = vld [vmem:[%s10] sm:$0x1]
      %v1363 = vlaneseq
      %v1364 = vshrl.u32 %v1363, 7
      %v1365 = vsub.s32 0, %v1364
      %v1366 = vrot.slane %v1361, %v1365
      %v1374 = vunpack.c.l.b16 %v1355
      %v1375 = vunpack.c.l.b16 %v1356
      %v1376 = vunpack.c.l.b16 %v1357
      %v1377 = vunpack.c.l.b16 %v1358
      %v1378 = vunpack.c.l.b16 %v1359
      %v1379 = vunpack.c.l.b16 %v1360
      %v1380 = vpack.c.b16 %v1375, %v1374
      %v1381 = vpack.c.b16 %v1377, %v1376
      %v1382 = vpack.c.b16 %v1379, %v1378
      %v1386 = vsel %vm1179, %v1354, 0
      %1388 = vmatprep.subr.bf16.mxu0 0
      %1389 = vmatpush1.bf16.msra.mxu0 0
      %1390 = vmatprep.subr.bf16.mxu0 0
      %1391 = vmatpush1.bf16.msra.mxu0 0
      %1392 = vmatprep.subr.bf16.mxu0 0
      %1393 = vmatpush1.bf16.msra.mxu0 0
      %1394 = vmatprep.subr.bf16.mxu0 0
      %1395 = vmatpush1.bf16.msra.mxu0 0
      %1396 = vmatprep.subr.bf16.mxu0 0
      %1397 = vmatpush1.bf16.msra.mxu0 0
      %1398 = vmatprep.subr.bf16.mxu0 0
      %1399 = vmatpush1.bf16.msra.mxu0 %v1382
      %1400 = vmatprep.subr.bf16.mxu0 0
      %1401 = vmatpush1.bf16.msra.mxu0 %v1381
      %1402 = vmatprep.subr.bf16.mxu0 0
      %1403 = vmatpush1.bf16.msra.mxu0 %v1380
      %1404 = vmatprep.subr.bf16.mxu0 0
      %1405 = vmatpush2.bf16.msra.mxu0 0
      %1406 = vmatprep.subr.bf16.mxu0 0
      %1407 = vmatpush2.bf16.msra.mxu0 0
      %1408 = vmatprep.subr.bf16.mxu0 0
      %1409 = vmatpush2.bf16.msra.mxu0 0
      %1410 = vmatprep.subr.bf16.mxu0 0
      %1411 = vmatpush2.bf16.msra.mxu0 0
      %1412 = vmatprep.subr.bf16.mxu0 0
      %1413 = vmatpush2.bf16.msra.mxu0 0
      %1414 = vmatprep.subr.bf16.mxu0 0
      %1415 = vmatpush2.bf16.msra.mxu0 0
      %1416 = vmatprep.subr.bf16.mxu0 0
      %1417 = vmatpush2.bf16.msra.mxu0 0
      %1418 = vmatprep.subr.bf16.mxu0 0
      %1419 = vmatpush2.bf16.msra.mxu0 0
      %1420 = vmatprep.mubr.bf16.mxu0 0
      %1421 = vmatmul.mubr.bf16.gmra.mxu0 %v1386
      %v1422 = vpop.f32.mrf.mxu0
      %v1423 = vadd.f32 %v1366, %v1422
      %v1424 = vpop.f32.mrf.mxu0
      %v1425 = vpop.f32.mrf.mxu0
      %v1426 = vadd.f32 %v1366, %v1425
      %v1427 = vpop.f32.mrf.mxu0
      %1428 = vdwg.mxu0
      %v1429 = vadd.f32 %v1423, %v743
      %v1430 = vadd.f32 %v1426, %v760
      %v1431 = vpack.c.bf16 %v1430, %v1429
      %v1433 = vunpack.c.l.b16 %v1431
      %v1434 = vunpack.c.h.b16 %v1431
      %v1435 = vpack.c.b16 %v1433, %v1433
      %v1436 = vpack.c.b16 %v1434, %v1434
      %1439 = vst.msk [vmem:[%s383] sm:$0xf] %vm1103, %v1435
      %1440 = vst.msk [vmem:[%s383 + $0x4] sm:$0xf] %vm1103, %v1436
      %p1441 = scmp.lt.s32.totalorder %s22, 1
      %s1442 = scalar_select %p1441, %s22, 1
      %s1443 = smul.addr %s1442, 2
      %s1444 = smul.addr %s1443, 4
      %s1445 = scalar_lea.vmem %s11, %s1444
      // Predicated region
      $region65: #{upsampler_forward.2} parent=63 // pred_check
        %p1446 = pneg %p276
      $region66: #{upsampler_forward.2} parent=63 // pred_check_branch
        %1448 = sbr.rel (%p1446) target = $region68
      $region67: #{upsampler_forward.2} parent=63 // pred_region
        _
      $region68: #{upsampler_forward.2} parent=63 // pred_fallthru
        _
    $region64: #{upsampler_forward.2} parent=5 // pred_fallthru
      _
    %p1449 = scmp.le.s32.totalorder 2, %s17
    // Predicated region
    $region69: #{upsampler_forward.2} parent=5 // pred_check
      %p1450 = pneg %p1449
    $region70: #{upsampler_forward.2} parent=5 // pred_check_branch
      %1452 = sbr.rel (%p1450) target = $region72
    $region71: #{upsampler_forward.2} parent=5 // pred_region
      %s1453 = ssub.s32 %s17, 2
      // Predicated region
      $region73: #{upsampler_forward.2} parent=71 // pred_check
        %p1454 = pneg %p282
      $region74: #{upsampler_forward.2} parent=71 // pred_check_branch
        %1456 = sbr.rel (%p1454) target = $region76
      $region75: #{upsampler_forward.2} parent=71 // pred_region
        %p1457 = scmp.lt.s32.totalorder %s23, 1
        %s1458 = scalar_select %p1457, %s23, 1
        %s1459 = smul.addr %s1458, 2
        %s1460 = smul.addr %s1459, 4
        %s1461 = scalar_lea.vmem %s11, %s1460
      $region76: #{upsampler_forward.2} parent=71 // pred_fallthru
        _
    $region72: #{upsampler_forward.2} parent=5 // pred_fallthru
      _
  $region6: #{upsampler_forward.2} parent=0 // loop_footer
    %s21 = sadd.s32 1, %s17
  $region7: #{upsampler_forward.2} parent=0 // loop_footer_branch
    %16 = sbr.rel target = $region3
  $region8: #{upsampler_forward.2} parent=0 // loop_exit
    _

// kernel: upsampler_forward.3
$region0: #{upsampler_forward.3}
  #allocation0 [shape = 'u32[]', space=smem, size = 0x4, offset = 0x4, fixed_abs, tag = 'smem constant byte address 0x4 - core index']
  #allocation1 [shape = 'u32[144,128]{1,0:T(1,128)}', space=vmem, size = 0x12000, scoped, tag = 'internal scratch']
  #allocation2 [shape = 'f32[16,2,8]{2,1,0:T(2,128)}', space=vmem, size = 0x4000, scoped, tag = 'scratch operand']
  #allocation3 [shape = 'bf16[18,16]{1,0:T(8,128)(2,1)}', space=vmem, size = 0x1800, scoped, tag = 'scratch operand']
  #allocation4 [shape = 'bf16[34,8]{1,0:T(8,128)(2,1)}', space=vmem, size = 0x2800, scoped, tag = 'scratch operand']
  %s0 = inlined_call_operand.vmem [shape: bf16[2,16,16], index: 0, kind: input, shape index: {}]
  %s1 = inlined_call_operand.vmem [shape: bf16[48,16], index: 1, kind: input, shape index: {}]
  %s2 = inlined_call_operand.vmem [shape: f32[1,8], index: 2, kind: input, shape index: {}]
  %s3 = inlined_call_operand.vmem [shape: f32[1,8], index: 3, kind: input, shape index: {}]
  %s4 = inlined_call_operand.vmem [shape: f32[1,8], index: 4, kind: input, shape index: {}]
  %s5 = inlined_call_operand.vmem [shape: bf16[24,8], index: 5, kind: input, shape index: {}]
  %s6 = inlined_call_operand.vmem [shape: f32[1,8], index: 6, kind: input, shape index: {}]
  %s7 = inlined_call_operand.vmem [shape: f32[1,8], index: 7, kind: input, shape index: {}]
  %s8 = inlined_call_operand.vmem [shape: f32[1,8], index: 8, kind: input, shape index: {}]
  %s9 = inlined_call_operand.vmem [shape: bf16[24,8], index: 9, kind: input, shape index: {}]
  %s10 = inlined_call_operand.vmem [shape: f32[1,8], index: 10, kind: input, shape index: {}]
  %s11 = inlined_call_operand.vmem [shape: bf16[8,32], index: 11, kind: input, shape index: {}]
  %s12 = inlined_call_operand.vmem [shape: f32[1,32], index: 12, kind: input, shape index: {}]
  %s13 = inlined_call_operand.hbm [shape: f32[2,32,32], index: 13, kind: output, shape index: {}]
  %s14 = sld [smem:[#allocation0]]
  $region85: #{upsampler_forward.3} parent=0
    _
  %s16 = ssub.s32 1, %s14
  %s17 = scalar_select 0, %s16, %s14
  $region1: #{upsampler_forward.3} parent=0
    #allocation5 [shape = 'u8[32768]{0}', space=vmem, size = 0x8000, scoped, tag = 'output window, operand 0']
    #allocation6 [shape = 's32[2]{0}', space=sflag, size = 0x8, scoped, tag = 'scoped memory for upsampler_forward.3']
    %18 = vsyncpa [#allocation6], 0
    %s19 = scalar_lea.sflag [#allocation6], 1
    %20 = vsyncpa %s19, 0
    loop: start=0, step=1, limit=4
    $region2: #{upsampler_forward.3} parent=1 // loop_pre_header
      _
    $region3: #{upsampler_forward.3} parent=1 // loop_header
      %s22 = sphi 0, %s26
      %p23 = scmp.ge.s32.totalorder %s22, 4
      %s32 = sphi 0, %s34
      %s35 = sphi 0, %s32
      %s36 = sphi 0, %s35
      %s52 = sphi 0, %s36
      %s56 = sphi 0, %s56
      %s58 = sphi 0, %s56
      %s59 = sphi 0, %s58
      %s73 = sphi 0, %s59
      %s77 = sphi 0, %s77
      %s79 = sphi 0, %s77
      %s80 = sphi 0, %s79
      %s94 = sphi 0, %s80
      %s98 = sphi 0, %s98
      %s100 = sphi 0, %s98
      %s101 = sphi 0, %s100
      %s115 = sphi 0, %s101
      %s119 = sphi 0, %s119
      %s121 = sphi 0, %s119
      %s122 = sphi 0, %s121
      %s136 = sphi 0, %s122
      %s140 = sphi 0, %s140
      %s142 = sphi 0, %s140
      %s143 = sphi 0, %s142
      %s157 = sphi 0, %s143
      %s161 = sphi 0, %s161
      %s163 = sphi 0, %s161
      %s164 = sphi 0, %s163
      %s178 = sphi 0, %s164
      %s182 = sphi 0, %s182
      %s184 = sphi 0, %s182
      %s185 = sphi 0, %s184
      %s199 = sphi 0, %s185
      %s203 = sphi 0, %s203
      %s205 = sphi 0, %s203
      %s206 = sphi 0, %s205
      %s220 = sphi 0, %s206
      %s224 = sphi 0, %s224
      %s226 = sphi 0, %s224
      %s227 = sphi 0, %s226
      %s241 = sphi 0, %s227
      %s245 = sphi 0, %s245
      %s247 = sphi 0, %s245
      %s248 = sphi 0, %s247
      %s262 = sphi 0, %s248
      %s266 = sphi 0, %s266
      %s268 = sphi 0, %s266
      %s269 = sphi 0, %s268
      %s283 = sphi 0, %s269
      %s287 = sphi 0, %s287
      %s289 = sphi 0, %s287
      %s290 = sphi 0, %s289
      %s304 = sphi 0, %s290
      %s310 = sphi 0, %s312
      %s313 = sphi 0, %s310
      %s314 = sphi 0, %s313
      %s330 = sphi 0, %s314
    $region4: #{upsampler_forward.3} parent=1 // loop_header_branch
      %25 = sbr.rel (%p23) target = $region8
    $region5: #{upsampler_forward.3} parent=1 // loop_body
      %s27 = ssub.s32 %s22, 1
      %s28 = ssub.s32 %s22, 2
      %s29 = sadd.s32 %s22, 1
      %s30 = ssub.s32 %s22, %s29
      %p31 = scmp.eq.s32.totalorder %s30, 0
      %s33 = sadd.s32 %s32, 1
      %s34 = scalar_select %p31, %s32, %s33
      %p37 = pneg %p31
      %p38 = scmp.eq.s32.totalorder %s22, 1
      %p39 = por %p37, %p38
      %p40 = scmp.ne.s32.totalorder %s32, %s35
      %p41 = scmp.eq.s32.totalorder %s22, 0
      %p42 = por %p40, %p41
      %p43 = scmp.ne.s32.totalorder %s32, %s35
      %p44 = scmp.eq.s32.totalorder %s27, 1
      %p45 = por %p43, %p44
      %p46 = scmp.ne.s32.totalorder %s35, %s36
      %p47 = scmp.eq.s32.totalorder %s27, 0
      %p48 = por %p46, %p47
      %p49 = scmp.ne.s32.totalorder %s35, %s36
      %p50 = scmp.eq.s32.totalorder %s28, 1
      %p51 = por %p49, %p50
      %p53 = scmp.ne.s32.totalorder %s36, %s52
      %p54 = scmp.eq.s32.totalorder %s28, 0
      %p55 = por %p53, %p54
      %s57 = sadd.s32 %s56, 1
      %p60 = scmp.eq.s32.totalorder %s22, 1
      %p61 = scmp.ne.s32.totalorder %s56, %s58
      %p62 = scmp.eq.s32.totalorder %s22, 0
      %p63 = por %p61, %p62
      %p64 = scmp.ne.s32.totalorder %s56, %s58
      %p65 = scmp.eq.s32.totalorder %s27, 1
      %p66 = por %p64, %p65
      %p67 = scmp.ne.s32.totalorder %s58, %s59
      %p68 = scmp.eq.s32.totalorder %s27, 0
      %p69 = por %p67, %p68
      %p70 = scmp.ne.s32.totalorder %s58, %s59
      %p71 = scmp.eq.s32.totalorder %s28, 1
      %p72 = por %p70, %p71
      %p74 = scmp.ne.s32.totalorder %s59, %s73
      %p75 = scmp.eq.s32.totalorder %s28, 0
      %p76 = por %p74, %p75
      %s78 = sadd.s32 %s77, 1
      %p81 = scmp.eq.s32.totalorder %s22, 1
      %p82 = scmp.ne.s32.totalorder %s77, %s79
      %p83 = scmp.eq.s32.totalorder %s22, 0
      %p84 = por %p82, %p83
      %p85 = scmp.ne.s32.totalorder %s77, %s79
      %p86 = scmp.eq.s32.totalorder %s27, 1
      %p87 = por %p85, %p86
      %p88 = scmp.ne.s32.totalorder %s79, %s80
      %p89 = scmp.eq.s32.totalorder %s27, 0
      %p90 = por %p88, %p89
      %p91 = scmp.ne.s32.totalorder %s79, %s80
      %p92 = scmp.eq.s32.totalorder %s28, 1
      %p93 = por %p91, %p92
      %p95 = scmp.ne.s32.totalorder %s80, %s94
      %p96 = scmp.eq.s32.totalorder %s28, 0
      %p97 = por %p95, %p96
      %s99 = sadd.s32 %s98, 1
      %p102 = scmp.eq.s32.totalorder %s22, 1
      %p103 = scmp.ne.s32.totalorder %s98, %s100
      %p104 = scmp.eq.s32.totalorder %s22, 0
      %p105 = por %p103, %p104
      %p106 = scmp.ne.s32.totalorder %s98, %s100
      %p107 = scmp.eq.s32.totalorder %s27, 1
      %p108 = por %p106, %p107
      %p109 = scmp.ne.s32.totalorder %s100, %s101
      %p110 = scmp.eq.s32.totalorder %s27, 0
      %p111 = por %p109, %p110
      %p112 = scmp.ne.s32.totalorder %s100, %s101
      %p113 = scmp.eq.s32.totalorder %s28, 1
      %p114 = por %p112, %p113
      %p116 = scmp.ne.s32.totalorder %s101, %s115
      %p117 = scmp.eq.s32.totalorder %s28, 0
      %p118 = por %p116, %p117
      %s120 = sadd.s32 %s119, 1
      %p123 = scmp.eq.s32.totalorder %s22, 1
      %p124 = scmp.ne.s32.totalorder %s119, %s121
      %p125 = scmp.eq.s32.totalorder %s22, 0
      %p126 = por %p124, %p125
      %p127 = scmp.ne.s32.totalorder %s119, %s121
      %p128 = scmp.eq.s32.totalorder %s27, 1
      %p129 = por %p127, %p128
      %p130 = scmp.ne.s32.totalorder %s121, %s122
      %p131 = scmp.eq.s32.totalorder %s27, 0
      %p132 = por %p130, %p131
      %p133 = scmp.ne.s32.totalorder %s121, %s122
      %p134 = scmp.eq.s32.totalorder %s28, 1
      %p135 = por %p133, %p134
      %p137 = scmp.ne.s32.totalorder %s122, %s136
      %p138 = scmp.eq.s32.totalorder %s28, 0
      %p139 = por %p137, %p138
      %s141 = sadd.s32 %s140, 1
      %p144 = scmp.eq.s32.totalorder %s22, 1
      %p145 = scmp.ne.s32.totalorder %s140, %s142
      %p146 = scmp.eq.s32.totalorder %s22, 0
      %p147 = por %p145, %p146
      %p148 = scmp.ne.s32.totalorder %s140, %s142
      %p149 = scmp.eq.s32.totalorder %s27, 1
      %p150 = por %p148, %p149
      %p151 = scmp.ne.s32.totalorder %s142, %s143
      %p152 = scmp.eq.s32.totalorder %s27, 0
      %p153 = por %p151, %p152
      %p154 = scmp.ne.s32.totalorder %s142, %s143
      %p155 = scmp.eq.s32.totalorder %s28, 1
      %p156 = por %p154, %p155
      %p158 = scmp.ne.s32.totalorder %s143, %s157
      %p159 = scmp.eq.s32.totalorder %s28, 0
      %p160 = por %p158, %p159
      %s162 = sadd.s32 %s161, 1
      %p165 = scmp.eq.s32.totalorder %s22, 1
      %p166 = scmp.ne.s32.totalorder %s161, %s163
      %p167 = scmp.eq.s32.totalorder %s22, 0
      %p168 = por %p166, %p167
      %p169 = scmp.ne.s32.totalorder %s161, %s163
      %p170 = scmp.eq.s32.totalorder %s27, 1
      %p171 = por %p169, %p170
      %p172 = scmp.ne.s32.totalorder %s163, %s164
      %p173 = scmp.eq.s32.totalorder %s27, 0
      %p174 = por %p172, %p173
      %p175 = scmp.ne.s32.totalorder %s163, %s164
      %p176 = scmp.eq.s32.totalorder %s28, 1
      %p177 = por %p175, %p176
      %p179 = scmp.ne.s32.totalorder %s164, %s178
      %p180 = scmp.eq.s32.totalorder %s28, 0
      %p181 = por %p179, %p180
      %s183 = sadd.s32 %s182, 1
      %p186 = scmp.eq.s32.totalorder %s22, 1
      %p187 = scmp.ne.s32.totalorder %s182, %s184
      %p188 = scmp.eq.s32.totalorder %s22, 0
      %p189 = por %p187, %p188
      %p190 = scmp.ne.s32.totalorder %s182, %s184
      %p191 = scmp.eq.s32.totalorder %s27, 1
      %p192 = por %p190, %p191
      %p193 = scmp.ne.s32.totalorder %s184, %s185
      %p194 = scmp.eq.s32.totalorder %s27, 0
      %p195 = por %p193, %p194
      %p196 = scmp.ne.s32.totalorder %s184, %s185
      %p197 = scmp.eq.s32.totalorder %s28, 1
      %p198 = por %p196, %p197
      %p200 = scmp.ne.s32.totalorder %s185, %s199
      %p201 = scmp.eq.s32.totalorder %s28, 0
      %p202 = por %p200, %p201
      %s204 = sadd.s32 %s203, 1
      %p207 = scmp.eq.s32.totalorder %s22, 1
      %p208 = scmp.ne.s32.totalorder %s203, %s205
      %p209 = scmp.eq.s32.totalorder %s22, 0
      %p210 = por %p208, %p209
      %p211 = scmp.ne.s32.totalorder %s203, %s205
      %p212 = scmp.eq.s32.totalorder %s27, 1
      %p213 = por %p211, %p212
      %p214 = scmp.ne.s32.totalorder %s205, %s206
      %p215 = scmp.eq.s32.totalorder %s27, 0
      %p216 = por %p214, %p215
      %p217 = scmp.ne.s32.totalorder %s205, %s206
      %p218 = scmp.eq.s32.totalorder %s28, 1
      %p219 = por %p217, %p218
      %p221 = scmp.ne.s32.totalorder %s206, %s220
      %p222 = scmp.eq.s32.totalorder %s28, 0
      %p223 = por %p221, %p222
      %s225 = sadd.s32 %s224, 1
      %p228 = scmp.eq.s32.totalorder %s22, 1
      %p229 = scmp.ne.s32.totalorder %s224, %s226
      %p230 = scmp.eq.s32.totalorder %s22, 0
      %p231 = por %p229, %p230
      %p232 = scmp.ne.s32.totalorder %s224, %s226
      %p233 = scmp.eq.s32.totalorder %s27, 1
      %p234 = por %p232, %p233
      %p235 = scmp.ne.s32.totalorder %s226, %s227
      %p236 = scmp.eq.s32.totalorder %s27, 0
      %p237 = por %p235, %p236
      %p238 = scmp.ne.s32.totalorder %s226, %s227
      %p239 = scmp.eq.s32.totalorder %s28, 1
      %p240 = por %p238, %p239
      %p242 = scmp.ne.s32.totalorder %s227, %s241
      %p243 = scmp.eq.s32.totalorder %s28, 0
      %p244 = por %p242, %p243
      %s246 = sadd.s32 %s245, 1
      %p249 = scmp.eq.s32.totalorder %s22, 1
      %p250 = scmp.ne.s32.totalorder %s245, %s247
      %p251 = scmp.eq.s32.totalorder %s22, 0
      %p252 = por %p250, %p251
      %p253 = scmp.ne.s32.totalorder %s245, %s247
      %p254 = scmp.eq.s32.totalorder %s27, 1
      %p255 = por %p253, %p254
      %p256 = scmp.ne.s32.totalorder %s247, %s248
      %p257 = scmp.eq.s32.totalorder %s27, 0
      %p258 = por %p256, %p257
      %p259 = scmp.ne.s32.totalorder %s247, %s248
      %p260 = scmp.eq.s32.totalorder %s28, 1
      %p261 = por %p259, %p260
      %p263 = scmp.ne.s32.totalorder %s248, %s262
      %p264 = scmp.eq.s32.totalorder %s28, 0
      %p265 = por %p263, %p264
      %s267 = sadd.s32 %s266, 1
      %p270 = scmp.eq.s32.totalorder %s22, 1
      %p271 = scmp.ne.s32.totalorder %s266, %s268
      %p272 = scmp.eq.s32.totalorder %s22, 0
      %p273 = por %p271, %p272
      %p274 = scmp.ne.s32.totalorder %s266, %s268
      %p275 = scmp.eq.s32.totalorder %s27, 1
      %p276 = por %p274, %p275
      %p277 = scmp.ne.s32.totalorder %s268, %s269
      %p278 = scmp.eq.s32.totalorder %s27, 0
      %p279 = por %p277, %p278
      %p280 = scmp.ne.s32.totalorder %s268, %s269
      %p281 = scmp.eq.s32.totalorder %s28, 1
      %p282 = por %p280, %p281
      %p284 = scmp.ne.s32.totalorder %s269, %s283
      %p285 = scmp.eq.s32.totalorder %s28, 0
      %p286 = por %p284, %p285
      %s288 = sadd.s32 %s287, 1
      %p291 = scmp.eq.s32.totalorder %s22, 1
      %p292 = scmp.ne.s32.totalorder %s287, %s289
      %p293 = scmp.eq.s32.totalorder %s22, 0
      %p294 = por %p292, %p293
      %p295 = scmp.ne.s32.totalorder %s287, %s289
      %p296 = scmp.eq.s32.totalorder %s27, 1
      %p297 = por %p295, %p296
      %p298 = scmp.ne.s32.totalorder %s289, %s290
      %p299 = scmp.eq.s32.totalorder %s27, 0
      %p300 = por %p298, %p299
      %p301 = scmp.ne.s32.totalorder %s289, %s290
      %p302 = scmp.eq.s32.totalorder %s28, 1
      %p303 = por %p301, %p302
      %p305 = scmp.ne.s32.totalorder %s290, %s304
      %p306 = scmp.eq.s32.totalorder %s28, 0
      %p307 = por %p305, %p306
      %s308 = ssub.s32 %s22, %s29
      %p309 = scmp.eq.s32.totalorder %s308, 0
      %s311 = sadd.s32 %s310, 1
      %s312 = scalar_select %p309, %s310, %s311
      %p315 = pneg %p309
      %p316 = scmp.eq.s32.totalorder %s22, 1
      %p317 = por %p315, %p316
      %p318 = scmp.ne.s32.totalorder %s310, %s313
      %p319 = scmp.eq.s32.totalorder %s22, 0
      %p320 = por %p318, %p319
      %p321 = scmp.ne.s32.totalorder %s310, %s313
      %p322 = scmp.eq.s32.totalorder %s27, 1
      %p323 = por %p321, %p322
      %p324 = scmp.ne.s32.totalorder %s313, %s314
      %p325 = scmp.eq.s32.totalorder %s27, 0
      %p326 = por %p324, %p325
      %p327 = scmp.ne.s32.totalorder %s313, %s314
      %p328 = scmp.eq.s32.totalorder %s28, 1
      %p329 = por %p327, %p328
      %p331 = scmp.ne.s32.totalorder %s314, %s330
      %p332 = scmp.eq.s32.totalorder %s28, 0
      %p333 = por %p331, %p332
      %p334 = scmp.le.s32.totalorder 1, %s22
      %p335 = scmp.lt.s32.totalorder %s22, 3
      %p336 = pnand %p334, %p335
      %p337 = pneg %p336
      // Predicated region
      $region9: #{upsampler_forward.3} parent=5 // pred_check
        _
      $region10: #{upsampler_forward.3} parent=5 // pred_check_branch
        %339 = sbr.rel (%p336) target = $region12
      $region11: #{upsampler_forward.3} parent=5 // pred_region
        %s340 = ssub.s32 %s22, 1
        // Predicated region
        $region13: #{upsampler_forward.3} parent=11 // pred_check
          %p341 = pneg %p69
        $region14: #{upsampler_forward.3} parent=11 // pred_check_branch
          %343 = sbr.rel (%p341) target = $region16
        $region15: #{upsampler_forward.3} parent=11 // pred_region
          _
        $region16: #{upsampler_forward.3} parent=11 // pred_fallthru
          _
        // Predicated region
        $region17: #{upsampler_forward.3} parent=11 // pred_check
          %p344 = pneg %p90
        $region18: #{upsampler_forward.3} parent=11 // pred_check_branch
          %346 = sbr.rel (%p344) target = $region20
        $region19: #{upsampler_forward.3} parent=11 // pred_region
          _
        $region20: #{upsampler_forward.3} parent=11 // pred_fallthru
          _
        // Predicated region
        $region21: #{upsampler_forward.3} parent=11 // pred_check
          %p347 = pneg %p111
        $region22: #{upsampler_forward.3} parent=11 // pred_check_branch
          %349 = sbr.rel (%p347) target = $region24
        $region23: #{upsampler_forward.3} parent=11 // pred_region
          _
        $region24: #{upsampler_forward.3} parent=11 // pred_fallthru
          _
        // Predicated region
        $region25: #{upsampler_forward.3} parent=11 // pred_check
          %p350 = pneg %p132
        $region26: #{upsampler_forward.3} parent=11 // pred_check_branch
          %352 = sbr.rel (%p350) target = $region28
        $region27: #{upsampler_forward.3} parent=11 // pred_region
          _
        $region28: #{upsampler_forward.3} parent=11 // pred_fallthru
          _
        // Predicated region
        $region29: #{upsampler_forward.3} parent=11 // pred_check
          %p353 = pneg %p153
        $region30: #{upsampler_forward.3} parent=11 // pred_check_branch
          %355 = sbr.rel (%p353) target = $region32
        $region31: #{upsampler_forward.3} parent=11 // pred_region
          _
        $region32: #{upsampler_forward.3} parent=11 // pred_fallthru
          _
        // Predicated region
        $region33: #{upsampler_forward.3} parent=11 // pred_check
          %p356 = pneg %p174
        $region34: #{upsampler_forward.3} parent=11 // pred_check_branch
          %358 = sbr.rel (%p356) target = $region36
        $region35: #{upsampler_forward.3} parent=11 // pred_region
          _
        $region36: #{upsampler_forward.3} parent=11 // pred_fallthru
          _
        // Predicated region
        $region37: #{upsampler_forward.3} parent=11 // pred_check
          %p359 = pneg %p195
        $region38: #{upsampler_forward.3} parent=11 // pred_check_branch
          %361 = sbr.rel (%p359) target = $region40
        $region39: #{upsampler_forward.3} parent=11 // pred_region
          _
        $region40: #{upsampler_forward.3} parent=11 // pred_fallthru
          _
        // Predicated region
        $region41: #{upsampler_forward.3} parent=11 // pred_check
          %p362 = pneg %p216
        $region42: #{upsampler_forward.3} parent=11 // pred_check_branch
          %364 = sbr.rel (%p362) target = $region44
        $region43: #{upsampler_forward.3} parent=11 // pred_region
          _
        $region44: #{upsampler_forward.3} parent=11 // pred_fallthru
          _
        // Predicated region
        $region45: #{upsampler_forward.3} parent=11 // pred_check
          %p365 = pneg %p237
        $region46: #{upsampler_forward.3} parent=11 // pred_check_branch
          %367 = sbr.rel (%p365) target = $region48
        $region47: #{upsampler_forward.3} parent=11 // pred_region
          _
        $region48: #{upsampler_forward.3} parent=11 // pred_fallthru
          _
        // Predicated region
        $region49: #{upsampler_forward.3} parent=11 // pred_check
          %p368 = pneg %p258
        $region50: #{upsampler_forward.3} parent=11 // pred_check_branch
          %370 = sbr.rel (%p368) target = $region52
        $region51: #{upsampler_forward.3} parent=11 // pred_region
          _
        $region52: #{upsampler_forward.3} parent=11 // pred_fallthru
          _
        // Predicated region
        $region53: #{upsampler_forward.3} parent=11 // pred_check
          %p371 = pneg %p279
        $region54: #{upsampler_forward.3} parent=11 // pred_check_branch
          %373 = sbr.rel (%p371) target = $region56
        $region55: #{upsampler_forward.3} parent=11 // pred_region
          _
        $region56: #{upsampler_forward.3} parent=11 // pred_fallthru
          _
        // Predicated region
        $region57: #{upsampler_forward.3} parent=11 // pred_check
          %p374 = pneg %p300
        $region58: #{upsampler_forward.3} parent=11 // pred_check_branch
          %376 = sbr.rel (%p374) target = $region60
        $region59: #{upsampler_forward.3} parent=11 // pred_region
          _
        $region60: #{upsampler_forward.3} parent=11 // pred_fallthru
          _
      $region12: #{upsampler_forward.3} parent=5 // pred_fallthru
        _
      %p377 = scmp.lt.s32.totalorder %s22, 2
      // Predicated region
      $region61: #{upsampler_forward.3} parent=5 // pred_check
        %p378 = pneg %p377
      $region62: #{upsampler_forward.3} parent=5 // pred_check_branch
        %380 = sbr.rel (%p378) target = $region64
      $region63: #{upsampler_forward.3} parent=5 // pred_region
        // Predicated region
        $region65: #{upsampler_forward.3} parent=63 // pred_check
          %p381 = pneg %p42
        $region66: #{upsampler_forward.3} parent=63 // pred_check_branch
          %383 = sbr.rel (%p381) target = $region68
        $region67: #{upsampler_forward.3} parent=63 // pred_region
          %p384 = scmp.lt.s32.totalorder %s22, 1
          %s385 = scalar_select %p384, %s22, 1
          %s386 = smul.addr %s385, 2
          %s387 = smul.addr %s386, 4
          %s388 = scalar_lea.vmem %s0, %s387
        $region68: #{upsampler_forward.3} parent=63 // pred_fallthru
          _
      $region64: #{upsampler_forward.3} parent=5 // pred_fallthru
        _
      %p389 = scmp.le.s32.totalorder 1, %s22
      %p390 = scmp.lt.s32.totalorder %s22, 3
      %p391 = pnand %p389, %p390
      %p392 = pneg %p391
      // Predicated region
      $region69: #{upsampler_forward.3} parent=5 // pred_check
        _
      $region70: #{upsampler_forward.3} parent=5 // pred_check_branch
        %394 = sbr.rel (%p391) target = $region72
      $region71: #{upsampler_forward.3} parent=5 // pred_region
        %s395 = ssub.s32 %s22, 1
        %p396 = scmp.lt.s32.totalorder %s27, 1
        %s397 = scalar_select %p396, %s27, 1
        %s398 = smul.addr %s397, 2
        %s399 = smul.addr %s398, 4
        %s400 = scalar_lea.vmem %s0, %s399
        %p401 = pneg %p48
        %p402 = pneg %p45
        %p403 = pneg %p69
        %p404 = pneg %p66
        %p405 = pneg %p90
        %p406 = pneg %p87
        %p407 = pneg %p111
        %p408 = pneg %p108
        %p409 = pneg %p132
        %p410 = pneg %p129
        %p411 = pneg %p153
        %p412 = pneg %p150
        %p413 = pneg %p174
        %p414 = pneg %p171
        %p415 = pneg %p195
        %p416 = pneg %p192
        %p417 = pneg %p216
        %p418 = pneg %p213
        %p419 = pneg %p237
        %p420 = pneg %p234
        %p421 = pneg %p258
        %p422 = pneg %p255
        %p423 = pneg %p279
        %p424 = pneg %p276
        %p425 = pneg %p300
        %p426 = pneg %p297
        %p427 = pneg %p326
        %p428 = pneg %p323
        %s429 = sand.u32 %s313, 1
        %s430 = scalar_lea.sflag [#allocation6], %s429
        %s431 = sand.u32 %s313, 1
        %s432 = smul.addr %s431, 32
        %s433 = scalar_lea.vmem [#allocation5], %s432
        %p434 = scmp.lt.s32.totalorder %s27, 1
        %s435 = scalar_select %p434, %s27, 1
        %s436 = smul.addr %s435, 2
        %s437 = smul.addr %s436, 4
        %s438 = scalar_lea.vmem %s0, %s437
        %vm440 = vcmask 122880
        %vm441 = vsmask.f32 256
        %vm442 = vmand %vm440, %vm441
        %v443 = vld [vmem:[#allocation3] sm:$0x1]
        %v444 = vsel %vm442, 0, %v443
        %445 = vst [vmem:[#allocation3] sm:$0x1] %v444
        %vm446 = vsmask.f32 7938
        %vm447 = vmand %vm440, %vm446
        %v448 = vld [vmem:[#allocation3 + $0x8] sm:$0x1]
        %v449 = vsel %vm447, 0, %v448
        %450 = vst [vmem:[#allocation3 + $0x8] sm:$0x1] %v449
        %vm451 = vcmask 57344
        %vm452 = vmand %vm451, %vm441
        %v453 = vld [vmem:[#allocation4] sm:$0x1]
        %v454 = vsel %vm452, 0, %v453
        %455 = vst [vmem:[#allocation4] sm:$0x1] %v454
        %vm456 = vmand %vm451, %vm446
        %v457 = vld [vmem:[#allocation4 + $0x10] sm:$0x1]
        %v458 = vsel %vm456, 0, %v457
        %459 = vst [vmem:[#allocation4 + $0x10] sm:$0x1] %v458
        %v460 = vld [vmem:[%s438] sm:$0xf]
        %v461 = vld [vmem:[%s438 + $0x4] sm:$0xf]
        %vm462 = vsmask.f32 4368
        %vm463 = vmor %vm441, %vm462
        %v465 = vshrl.u32 %v460, 16
        %v467 = vrot.slane %v465, 7
        %v468 = vshll.u32 %v460, 16
        %v470 = vor.u32 %v467, %v468
        %v471 = vrot.slane %v467, 4
        %v473 = vshrl.u32 %v461, 16
        %v475 = vrot.slane %v473, 7
        %v476 = vshll.u32 %v461, 16
        %v478 = vor.u32 %v475, %v476
        %v479 = vsel %vm463, %v471, %v478
        %v480 = vrot.slane %v475, 4
        %vm484 = vcmask 125952
        %vm485 = vmand %vm484, %vm446
        %v486 = vld [vmem:[#allocation3] sm:$0xf]
        %v487 = vsel %vm485, %v470, %v486
        %488 = vst [vmem:[#allocation3] sm:$0xf] %v487
        %vm489 = vcmask 125952
        %490 = vst.msk [vmem:[#allocation3 + $0x4] sm:$0xf] %vm489, %v479
        %v491 = vld [vmem:[#allocation3 + $0x8] sm:$0x1]
        %v492 = vsel %vm442, %v480, %v491
        %493 = vst [vmem:[#allocation3 + $0x8] sm:$0x1] %v492
        %v494 = vld [vmem:[#allocation3] sm:$0xf]
        %v495 = vld [vmem:[#allocation3 + $0x4] sm:$0xf]
        %v496 = vld [vmem:[#allocation3 + $0x8] sm:$0x1]
        %v497 = vld [vmem:[#allocation3] sm:$0xe]
        %v500 = vunpack.c.l.b16 %v494
        %v501 = vunpack.c.l.b16 %v495
        %v502 = vpack.c.b16 %v501, %v500
        %v504 = vunpack.c.l.b16 %v496
        %v505 = vpack.c.b16 %v504, %v504
        %vm506 = vsmask.f32 7424
        %v508 = vshrl.u32 %v502, 16
        %v510 = vshll.u32 %v502, 16
        %v512 = vrot.slane %v510, 1
        %v513 = vor.u32 %v508, %v512
        %v515 = vshll.u32 %v505, 16
        %v517 = vrot.slane %v515, 1
        %v518 = vsel %vm506, %v513, %v517
        %519 = vrot.lane.b32.xlu0 %v518, 16
        %v520 = vpop.permute.xlu0 %519
        %v522 = vunpack.c.l.b16 %v497
        %v523 = vpack.c.b16 %v501, %v522
        %vm524 = vcmask 1046528
        %v525 = vrot.slane %v523, 1
        %v526 = vrot.slane %v505, 1
        %v527 = vsel %vm524, %v525, %v526
        %528 = vrot.lane.b32.xlu0 %v527, 32
        %v529 = vpop.permute.xlu0 %528
        %vm530 = vcmask 130048
        %v532 = vsel %vm530, %v502, %v520
        %vm533 = vcmask 261120
        %v535 = vsel %vm533, %v532, %v529
        %v536 = vld [vmem:[%s1] sm:$0xf]
        %v537 = vld [vmem:[%s1 + $0x4] sm:$0xf]
        %v538 = vld [vmem:[%s1 + $0x8] sm:$0xf]
        %v539 = vld [vmem:[%s1 + $0xc] sm:$0xf]
        %v540 = vld [vmem:[%s1 + $0x10] sm:$0xf]
        %v541 = vld [vmem:[%s1 + $0x14] sm:$0xf]
        %v548 = vunpack.c.l.b16 %v536
        %v549 = vunpack.c.l.b16 %v537
        %v550 = vunpack.c.l.b16 %v538
        %v551 = vunpack.c.l.b16 %v539
        %v552 = vunpack.c.l.b16 %v540
        %v553 = vunpack.c.l.b16 %v541
        %v554 = vpack.c.b16 %v549, %v548
        %v555 = vpack.c.b16 %v551, %v550
        %v556 = vpack.c.b16 %v553, %v552
        %vm560 = vcmask 392192
        %v561 = vsel %vm560, %v535, 0
        %563 = vmatprep.subr.bf16.mxu0 0
        %564 = vmatpush1.bf16.msra.mxu0 0
        %565 = vmatprep.subr.bf16.mxu0 0
        %566 = vmatpush1.bf16.msra.mxu0 0
        %567 = vmatprep.subr.bf16.mxu0 0
        %568 = vmatpush1.bf16.msra.mxu0 0
        %569 = vmatprep.subr.bf16.mxu0 0
        %570 = vmatpush1.bf16.msra.mxu0 0
        %571 = vmatprep.subr.bf16.mxu0 0
        %572 = vmatpush1.bf16.msra.mxu0 0
        %573 = vmatprep.subr.bf16.mxu0 0
        %574 = vmatpush1.bf16.msra.mxu0 %v556
        %575 = vmatprep.subr.bf16.mxu0 0
        %576 = vmatpush1.bf16.msra.mxu0 %v555
        %577 = vmatprep.subr.bf16.mxu0 0
        %578 = vmatpush1.bf16.msra.mxu0 %v554
        %579 = vmatprep.subr.bf16.mxu0 0
        %580 = vmatpush2.bf16.msra.mxu0 0
        %581 = vmatprep.subr.bf16.mxu0 0
        %582 = vmatpush2.bf16.msra.mxu0 0
        %583 = vmatprep.subr.bf16.mxu0 0
        %584 = vmatpush2.bf16.msra.mxu0 0
        %585 = vmatprep.subr.bf16.mxu0 0
        %586 = vmatpush2.bf16.msra.mxu0 0
        %587 = vmatprep.subr.bf16.mxu0 0
        %588 = vmatpush2.bf16.msra.mxu0 0
        %589 = vmatprep.subr.bf16.mxu0 0
        %590 = vmatpush2.bf16.msra.mxu0 0
        %591 = vmatprep.subr.bf16.mxu0 0
        %592 = vmatpush2.bf16.msra.mxu0 0
        %593 = vmatprep.subr.bf16.mxu0 0
        %594 = vmatpush2.bf16.msra.mxu0 0
        %595 = vmatprep.mubr.bf16.mxu0 0
        %596 = vmatmul.mubr.bf16.gmra.mxu0 %v561
        %v597 = vpop.f32.mrf.mxu0
        %v598 = vadd.f32 0.0, %v597
        %v599 = vpop.f32.mrf.mxu0
        %v600 = vpop.f32.mrf.mxu0
        %v601 = vadd.f32 0.0, %v600
        %v602 = vpop.f32.mrf.mxu0
        %603 = vdwg.mxu0
        %v606 = vcombine.high %v598, %v598
        %v608 = vunpack.c.l.s4 1966171168
        %v609 = vunpack.c.0.s8 %v608
        %v610 = vlaneseq
        %v611 = vshrl.u32 %v610, 7
        %v612 = vsub.s32 %v609, %v611
        %v613 = vrot.slane %v598, %v612
        %v615 = vunpack.c.l.s4 1966171168
        %v616 = vunpack.c.0.s8 %v615
        %v617 = vlaneseq
        %v618 = vshrl.u32 %v617, 7
        %v619 = vsub.s32 %v616, %v618
        %v620 = vrot.slane %v606, %v619
        %v621 = vcombine.high %v613, %v613
        %v622 = vcombine.high %v620, %v620
        %v624 = vunpack.c.l.s4 1966171168
        %v625 = vunpack.c.0.s8 %v624
        %v626 = vlaneseq
        %v627 = vshrl.u32 %v626, 7
        %v628 = vsub.s32 %v625, %v627
        %v629 = vrot.slane %v613, %v628
        %v631 = vunpack.c.l.s4 1966171168
        %v632 = vunpack.c.0.s8 %v631
        %v633 = vlaneseq
        %v634 = vshrl.u32 %v633, 7
        %v635 = vsub.s32 %v632, %v634
        %v636 = vrot.slane %v620, %v635
        %v638 = vunpack.c.l.s4 1966171168
        %v639 = vunpack.c.0.s8 %v638
        %v640 = vlaneseq
        %v641 = vshrl.u32 %v640, 7
        %v642 = vsub.s32 %v639, %v641
        %v643 = vrot.slane %v621, %v642
        %v645 = vunpack.c.l.s4 1966171168
        %v646 = vunpack.c.0.s8 %v645
        %v647 = vlaneseq
        %v648 = vshrl.u32 %v647, 7
        %v649 = vsub.s32 %v646, %v648
        %v650 = vrot.slane %v622, %v649
        %v651 = vcombine.high %v629, %v629
        %v652 = vcombine.high %v636, %v636
        %v653 = vcombine.high %v643, %v643
        %v654 = vcombine.high %v650, %v650
        %v655 = vcombine.high %v601, %v601
        %v657 = vunpack.c.l.s4 1966171168
        %v658 = vunpack.c.0.s8 %v657
        %v659 = vlaneseq
        %v660 = vshrl.u32 %v659, 7
        %v661 = vsub.s32 %v658, %v660
        %v662 = vrot.slane %v601, %v661
        %v664 = vunpack.c.l.s4 1966171168
        %v665 = vunpack.c.0.s8 %v664
        %v666 = vlaneseq
        %v667 = vshrl.u32 %v666, 7
        %v668 = vsub.s32 %v665, %v667
        %v669 = vrot.slane %v655, %v668
        %v670 = vcombine.high %v662, %v662
        %v671 = vcombine.high %v669, %v669
        %v673 = vunpack.c.l.s4 1966171168
        %v674 = vunpack.c.0.s8 %v673
        %v675 = vlaneseq
        %v676 = vshrl.u32 %v675, 7
        %v677 = vsub.s32 %v674, %v676
        %v678 = vrot.slane %v662, %v677
        %v680 = vunpack.c.l.s4 1966171168
        %v681 = vunpack.c.0.s8 %v680
        %v682 = vlaneseq
        %v683 = vshrl.u32 %v682, 7
        %v684 = vsub.s32 %v681, %v683
        %v685 = vrot.slane %v669, %v684
        %v687 = vunpack.c.l.s4 1966171168
        %v688 = vunpack.c.0.s8 %v687
        %v689 = vlaneseq
        %v690 = vshrl.u32 %v689, 7
        %v691 = vsub.s32 %v688, %v690
        %v692 = vrot.slane %v670, %v691
        %v694 = vunpack.c.l.s4 1966171168
        %v695 = vunpack.c.0.s8 %v694
        %v696 = vlaneseq
        %v697 = vshrl.u32 %v696, 7
        %v698 = vsub.s32 %v695, %v697
        %v699 = vrot.slane %v671, %v698
        %v700 = vcombine.high %v678, %v678
        %v701 = vcombine.high %v685, %v685
        %v702 = vcombine.high %v692, %v692
        %v703 = vcombine.high %v699, %v699
        %vm720 = vcmask 57344
        %721 = vst.msk [vmem:[#allocation2] sm:$0x1] %vm720, %v629
        %722 = vst.msk [vmem:[#allocation2 + $0x2] sm:$0x1] %vm720, %v643
        %723 = vst.msk [vmem:[#allocation2 + $0x4] sm:$0x1] %vm720, %v651
        %724 = vst.msk [vmem:[#allocation2 + $0x6] sm:$0x1] %vm720, %v653
        %725 = vst.msk [vmem:[#allocation2 + $0x8] sm:$0x1] %vm720, %v636
        %726 = vst.msk [vmem:[#allocation2 + $0xa] sm:$0x1] %vm720, %v650
        %727 = vst.msk [vmem:[#allocation2 + $0xc] sm:$0x1] %vm720, %v652
        %728 = vst.msk [vmem:[#allocation2 + $0xe] sm:$0x1] %vm720, %v654
        %729 = vst.msk [vmem:[#allocation2 + $0x10] sm:$0x1] %vm720, %v678
        %730 = vst.msk [vmem:[#allocation2 + $0x12] sm:$0x1] %vm720, %v692
        %731 = vst.msk [vmem:[#allocation2 + $0x14] sm:$0x1] %vm720, %v700
        %732 = vst.msk [vmem:[#allocation2 + $0x16] sm:$0x1] %vm720, %v702
        %733 = vst.msk [vmem:[#allocation2 + $0x18] sm:$0x1] %vm720, %v685
        %734 = vst.msk [vmem:[#allocation2 + $0x1a] sm:$0x1] %vm720, %v699
        %735 = vst.msk [vmem:[#allocation2 + $0x1c] sm:$0x1] %vm720, %v701
        %736 = vst.msk [vmem:[#allocation2 + $0x1e] sm:$0x1] %vm720, %v703
        %v737 = vlaneseq
        %v738 = vshrl.u32 %v737, 7
        %v739 = vsub.s32 0, %v738
        %v740 = vrot.slane %v629, %v739
        %v741 = vlaneseq
        %v742 = vshrl.u32 %v741, 7
        %v743 = vsub.s32 0, %v742
        %v744 = vrot.slane %v643, %v743
        %v745 = vlaneseq
        %v746 = vshrl.u32 %v745, 7
        %v747 = vsub.s32 0, %v746
        %v748 = vrot.slane %v651, %v747
        %v749 = vlaneseq
        %v750 = vshrl.u32 %v749, 7
        %v751 = vsub.s32 0, %v750
        %v752 = vrot.slane %v653, %v751
        %v753 = vlaneseq
        %v754 = vshrl.u32 %v753, 7
        %v755 = vsub.s32 0, %v754
        %v756 = vrot.slane %v636, %v755
        %v757 = vlaneseq
        %v758 = vshrl.u32 %v757, 7
        %v759 = vsub.s32 0, %v758
        %v760 = vrot.slane %v650, %v759
        %v761 = vlaneseq
        %v762 = vshrl.u32 %v761, 7
        %v763 = vsub.s32 0, %v762
        %v764 = vrot.slane %v652, %v763
        %v765 = vlaneseq
        %v766 = vshrl.u32 %v765, 7
        %v767 = vsub.s32 0, %v766
        %v768 = vrot.slane %v654, %v767
        %v769 = vlaneseq
        %v770 = vshrl.u32 %v769, 7
        %v771 = vsub.s32 0, %v770
        %v772 = vrot.slane %v678, %v771
        %v773 = vlaneseq
        %v774 = vshrl.u32 %v773, 7
        %v775 = vsub.s32 0, %v774
        %v776 = vrot.slane %v692, %v775
        %v777 = vlaneseq
        %v778 = vshrl.u32 %v777, 7
        %v779 = vsub.s32 0, %v778
        %v780 = vrot.slane %v700, %v779
        %v781 = vlaneseq
        %v782 = vshrl.u32 %v781, 7
        %v783 = vsub.s32 0, %v782
        %v784 = vrot.slane %v702, %v783
        %v785 = vlaneseq
        %v786 = vshrl.u32 %v785, 7
        %v787 = vsub.s32 0, %v786
        %v788 = vrot.slane %v685, %v787
        %v789 = vlaneseq
        %v790 = vshrl.u32 %v789, 7
        %v791 = vsub.s32 0, %v790
        %v792 = vrot.slane %v699, %v791
        %v793 = vlaneseq
        %v794 = vshrl.u32 %v793, 7
        %v795 = vsub.s32 0, %v794
        %v796 = vrot.slane %v701, %v795
        %v797 = vlaneseq
        %v798 = vshrl.u32 %v797, 7
        %v799 = vsub.s32 0, %v798
        %v800 = vrot.slane %v703, %v799
        %801 = vrot.lane.b32.xlu0 %v740, 120
        %v802 = vpop.permute.xlu0 %801
        %803 = vrot.lane.b32.xlu0 %v744, 120
        %v804 = vpop.permute.xlu0 %803
        %805 = vrot.lane.b32.xlu0 %v748, 120
        %v806 = vpop.permute.xlu0 %805
        %807 = vrot.lane.b32.xlu0 %v752, 120
        %v808 = vpop.permute.xlu0 %807
        %809 = vrot.lane.b32.xlu0 %v756, 120
        %v810 = vpop.permute.xlu0 %809
        %811 = vrot.lane.b32.xlu0 %v760, 120
        %v812 = vpop.permute.xlu0 %811
        %813 = vrot.lane.b32.xlu0 %v764, 120
        %v814 = vpop.permute.xlu0 %813
        %815 = vrot.lane.b32.xlu0 %v768, 120
        %v816 = vpop.permute.xlu0 %815
        %817 = vrot.lane.b32.xlu0 %v772, 120
        %v818 = vpop.permute.xlu0 %817
        %819 = vrot.lane.b32.xlu0 %v776, 120
        %v820 = vpop.permute.xlu0 %819
        %821 = vrot.lane.b32.xlu0 %v780, 120
        %v822 = vpop.permute.xlu0 %821
        %823 = vrot.lane.b32.xlu0 %v784, 120
        %v824 = vpop.permute.xlu0 %823
        %825 = vrot.lane.b32.xlu0 %v788, 120
        %v826 = vpop.permute.xlu0 %825
        %827 = vrot.lane.b32.xlu0 %v792, 120
        %v828 = vpop.permute.xlu0 %827
        %829 = vrot.lane.b32.xlu0 %v796, 120
        %v830 = vpop.permute.xlu0 %829
        %831 = vrot.lane.b32.xlu0 %v800, 120
        %v832 = vpop.permute.xlu0 %831
        %849 = vst.msk [vmem:[#allocation2 + $0x1] sm:$0x1] %vm720, %v802
        %850 = vst.msk [vmem:[#allocation2 + $0x3] sm:$0x1] %vm720, %v804
        %851 = vst.msk [vmem:[#allocation2 + $0x5] sm:$0x1] %vm720, %v806
        %852 = vst.msk [vmem:[#allocation2 + $0x7] sm:$0x1] %vm720, %v808
        %853 = vst.msk [vmem:[#allocation2 + $0x9] sm:$0x1] %vm720, %v810
        %854 = vst.msk [vmem:[#allocation2 + $0xb] sm:$0x1] %vm720, %v812
        %855 = vst.msk [vmem:[#allocation2 + $0xd] sm:$0x1] %vm720, %v814
        %856 = vst.msk [vmem:[#allocation2 + $0xf] sm:$0x1] %vm720, %v816
        %857 = vst.msk [vmem:[#allocation2 + $0x11] sm:$0x1] %vm720, %v818
        %858 = vst.msk [vmem:[#allocation2 + $0x13] sm:$0x1] %vm720, %v820
        %859 = vst.msk [vmem:[#allocation2 + $0x15] sm:$0x1] %vm720, %v822
        %860 = vst.msk [vmem:[#allocation2 + $0x17] sm:$0x1] %vm720, %v824
        %861 = vst.msk [vmem:[#allocation2 + $0x19] sm:$0x1] %vm720, %v826
        %862 = vst.msk [vmem:[#allocation2 + $0x1b] sm:$0x1] %vm720, %v828
        %863 = vst.msk [vmem:[#allocation2 + $0x1d] sm:$0x1] %vm720, %v830
        %864 = vst.msk [vmem:[#allocation2 + $0x1f] sm:$0x1] %vm720, %v832
        %v865 = vld [vmem:[#allocation2] sm:$0x3]
        %v866 = vld [vmem:[#allocation2 + $0x2] sm:$0x3]
        %v867 = vld [vmem:[#allocation2 + $0x4] sm:$0x3]
        %v868 = vld [vmem:[#allocation2 + $0x6] sm:$0x3]
        %v869 = vld [vmem:[#allocation2 + $0x8] sm:$0x3]
        %v870 = vld [vmem:[#allocation2 + $0xa] sm:$0x3]
        %v871 = vld [vmem:[#allocation2 + $0xc] sm:$0x3]
        %v872 = vld [vmem:[#allocation2 + $0xe] sm:$0x3]
        %v873 = vld [vmem:[#allocation2 + $0x10] sm:$0x3]
        %v874 = vld [vmem:[#allocation2 + $0x12] sm:$0x3]
        %v875 = vld [vmem:[#allocation2 + $0x14] sm:$0x3]
        %v876 = vld [vmem:[#allocation2 + $0x16] sm:$0x3]
        %v877 = vld [vmem:[#allocation2 + $0x18] sm:$0x3]
        %v878 = vld [vmem:[#allocation2 + $0x1a] sm:$0x3]
        %v879 = vld [vmem:[#allocation2 + $0x1c] sm:$0x3]
        %v880 = vld [vmem:[#allocation2 + $0x1e] sm:$0x3]
        %v881 = vld [vmem:[%s2] sm:$0x1]
        %v883 = vlaneseq
        %v884 = vshrl.u32 %v883, 7
        %v885 = vsub.s32 0, %v884
        %v886 = vrot.slane %v881, %v885
        %v887 = vcombine.high %v886, %v886
        %v889 = vunpack.c.l.s4 1983009808
        %v890 = vunpack.c.0.s8 %v889
        %v891 = vlaneseq
        %v892 = vshrl.u32 %v891, 7
        %v893 = vsub.s32 %v890, %v892
        %v894 = vrot.slane %v886, %v893
        %v896 = vunpack.c.l.s4 1983009808
        %v897 = vunpack.c.0.s8 %v896
        %v898 = vlaneseq
        %v899 = vshrl.u32 %v898, 7
        %v900 = vsub.s32 %v897, %v899
        %v901 = vrot.slane %v887, %v900
        %v902 = vcombine.high %v894, %v894
        %v903 = vcombine.high %v901, %v901
        %v908 = vadd.f32 %v865, %v894
        %v909 = vadd.f32 %v866, %v902
        %v910 = vadd.f32 %v867, %v901
        %v911 = vadd.f32 %v868, %v903
        %v912 = vadd.f32 %v869, %v894
        %v913 = vadd.f32 %v870, %v902
        %v914 = vadd.f32 %v871, %v901
        %v915 = vadd.f32 %v872, %v903
        %v916 = vadd.f32 %v873, %v894
        %v917 = vadd.f32 %v874, %v902
        %v918 = vadd.f32 %v875, %v901
        %v919 = vadd.f32 %v876, %v903
        %v920 = vadd.f32 %v877, %v894
        %v921 = vadd.f32 %v878, %v902
        %v922 = vadd.f32 %v879, %v901
        %v923 = vadd.f32 %v880, %v903
        %v940 = vcombine.low %v908, %v909
        %v941 = vcombine.low %v910, %v911
        %v943 = vunpack.c.l.s4 1983009808
        %v944 = vunpack.c.0.s8 %v943
        %v945 = vlaneseq
        %v946 = vshrl.u32 %v945, 7
        %v947 = vsub.s32 %v944, %v946
        %v948 = vrot.slane %v940, %v947
        %v950 = vunpack.c.l.s4 1983009808
        %v951 = vunpack.c.0.s8 %v950
        %v952 = vlaneseq
        %v953 = vshrl.u32 %v952, 7
        %v954 = vsub.s32 %v951, %v953
        %v955 = vrot.slane %v941, %v954
        %v956 = vcombine.low %v948, %v955
        %v957 = vcombine.low %v912, %v913
        %v958 = vcombine.low %v914, %v915
        %v960 = vunpack.c.l.s4 1983009808
        %v961 = vunpack.c.0.s8 %v960
        %v962 = vlaneseq
        %v963 = vshrl.u32 %v962, 7
        %v964 = vsub.s32 %v961, %v963
        %v965 = vrot.slane %v957, %v964
        %v967 = vunpack.c.l.s4 1983009808
        %v968 = vunpack.c.0.s8 %v967
        %v969 = vlaneseq
        %v970 = vshrl.u32 %v969, 7
        %v971 = vsub.s32 %v968, %v970
        %v972 = vrot.slane %v958, %v971
        %v973 = vcombine.low %v965, %v972
        %v974 = vcombine.low %v916, %v917
        %v975 = vcombine.low %v918, %v919
        %v977 = vunpack.c.l.s4 1983009808
        %v978 = vunpack.c.0.s8 %v977
        %v979 = vlaneseq
        %v980 = vshrl.u32 %v979, 7
        %v981 = vsub.s32 %v978, %v980
        %v982 = vrot.slane %v974, %v981
        %v984 = vunpack.c.l.s4 1983009808
        %v985 = vunpack.c.0.s8 %v984
        %v986 = vlaneseq
        %v987 = vshrl.u32 %v986, 7
        %v988 = vsub.s32 %v985, %v987
        %v989 = vrot.slane %v975, %v988
        %v990 = vcombine.low %v982, %v989
        %v991 = vcombine.low %v920, %v921
        %v992 = vcombine.low %v922, %v923
        %v994 = vunpack.c.l.s4 1983009808
        %v995 = vunpack.c.0.s8 %v994
        %v996 = vlaneseq
        %v997 = vshrl.u32 %v996, 7
        %v998 = vsub.s32 %v995, %v997
        %v999 = vrot.slane %v991, %v998
        %v1001 = vunpack.c.l.s4 1983009808
        %v1002 = vunpack.c.0.s8 %v1001
        %v1003 = vlaneseq
        %v1004 = vshrl.u32 %v1003, 7
        %v1005 = vsub.s32 %v1002, %v1004
        %v1006 = vrot.slane %v992, %v1005
        %v1007 = vcombine.low %v999, %v1006
        %vm1012 = vcmask 64512
        %v1013 = vsel %vm1012, %v956, 0.0
        %v1014 = vsel %vm1012, %v973, 0.0
        %v1015 = vadd.f32 %v1013, %v1014
        %v1016 = vsel %vm1012, %v990, 0.0
        %v1017 = vadd.f32 %v1015, %v1016
        %v1018 = vsel %vm1012, %v1007, 0.0
        %v1019 = vadd.f32 %v1017, %v1018
        %v1020 = vrot.slane %v1019, 4
        %v1021 = vadd.f32 %v1019, %v1020
        %v1022 = vrot.slane %v1021, 2
        %v1023 = vadd.f32 %v1021, %v1022
        %v1024 = vrot.slane %v1023, 1
        %v1025 = vadd.f32 %v1023, %v1024
        %v1026 = vmul.f32 %v908, %v908
        %v1027 = vmul.f32 %v909, %v909
        %v1028 = vmul.f32 %v910, %v910
        %v1029 = vmul.f32 %v911, %v911
        %v1030 = vmul.f32 %v912, %v912
        %v1031 = vmul.f32 %v913, %v913
        %v1032 = vmul.f32 %v914, %v914
        %v1033 = vmul.f32 %v915, %v915
        %v1034 = vmul.f32 %v916, %v916
        %v1035 = vmul.f32 %v917, %v917
        %v1036 = vmul.f32 %v918, %v918
        %v1037 = vmul.f32 %v919, %v919
        %v1038 = vmul.f32 %v920, %v920
        %v1039 = vmul.f32 %v921, %v921
        %v1040 = vmul.f32 %v922, %v922
        %v1041 = vmul.f32 %v923, %v923
        %v1058 = vcombine.low %v1026, %v1027
        %v1059 = vcombine.low %v1028, %v1029
        %v1061 = vunpack.c.l.s4 1983009808
        %v1062 = vunpack.c.0.s8 %v1061
        %v1063 = vlaneseq
        %v1064 = vshrl.u32 %v1063, 7
        %v1065 = vsub.s32 %v1062, %v1064
        %v1066 = vrot.slane %v1058, %v1065
        %v1068 = vunpack.c.l.s4 1983009808
        %v1069 = vunpack.c.0.s8 %v1068
        %v1070 = vlaneseq
        %v1071 = vshrl.u32 %v1070, 7
        %v1072 = vsub.s32 %v1069, %v1071
        %v1073 = vrot.slane %v1059, %v1072
        %v1074 = vcombine.low %v1066, %v1073
        %v1075 = vcombine.low %v1030, %v1031
        %v1076 = vcombine.low %v1032, %v1033
        %v1078 = vunpack.c.l.s4 1983009808
        %v1079 = vunpack.c.0.s8 %v1078
        %v1080 = vlaneseq
        %v1081 = vshrl.u32 %v1080, 7
        %v1082 = vsub.s32 %v1079, %v1081
        %v1083 = vrot.slane %v1075, %v1082
        %v1085 = vunpack.c.l.s4 1983009808
        %v1086 = vunpack.c.0.s8 %v1085
        %v1087 = vlaneseq
        %v1088 = vshrl.u32 %v1087, 7
        %v1089 = vsub.s32 %v1086, %v1088
        %v1090 = vrot.slane %v1076, %v1089
        %v1091 = vcombine.low %v1083, %v1090
        %v1092 = vcombine.low %v1034, %v1035
        %v1093 = vcombine.low %v1036, %v1037
        %v1095 = vunpack.c.l.s4 1983009808
        %v1096 = vunpack.c.0.s8 %v1095
        %v1097 = vlaneseq
        %v1098 = vshrl.u32 %v1097, 7
        %v1099 = vsub.s32 %v1096, %v1098
        %v1100 = vrot.slane %v1092, %v1099
        %v1102 = vunpack.c.l.s4 1983009808
        %v1103 = vunpack.c.0.s8 %v1102
        %v1104 = vlaneseq
        %v1105 = vshrl.u32 %v1104, 7
        %v1106 = vsub.s32 %v1103, %v1105
        %v1107 = vrot.slane %v1093, %v1106
        %v1108 = vcombine.low %v1100, %v1107
        %v1109 = vcombine.low %v1038, %v1039
        %v1110 = vcombine.low %v1040, %v1041
        %v1112 = vunpack.c.l.s4 1983009808
        %v1113 = vunpack.c.0.s8 %v1112
        %v1114 = vlaneseq
        %v1115 = vshrl.u32 %v1114, 7
        %v1116 = vsub.s32 %v1113, %v1115
        %v1117 = vrot.slane %v1109, %v1116
        %v1119 = vunpack.c.l.s4 1983009808
        %v1120 = vunpack.c.0.s8 %v1119
        %v1121 = vlaneseq
        %v1122 = vshrl.u32 %v1121, 7
        %v1123 = vsub.s32 %v1120, %v1122
        %v1124 = vrot.slane %v1110, %v1123
        %v1125 = vcombine.low %v1117, %v1124
        %v1130 = vsel %vm1012, %v1074, 0.0
        %v1131 = vsel %vm1012, %v1091, 0.0
        %v1132 = vadd.f32 %v1130, %v1131
        %v1133 = vsel %vm1012, %v1108, 0.0
        %v1134 = vadd.f32 %v1132, %v1133
        %v1135 = vsel %vm1012, %v1125, 0.0
        %v1136 = vadd.f32 %v1134, %v1135
        %v1137 = vrot.slane %v1136, 4
        %v1138 = vadd.f32 %v1136, %v1137
        %v1139 = vrot.slane %v1138, 2
        %v1140 = vadd.f32 %v1138, %v1139
        %v1141 = vrot.slane %v1140, 1
        %v1142 = vadd.f32 %v1140, %v1141
        %v1143 = vmul.f32 %v1025, 0.03125
        %v1144 = vmul.f32 %v1142, 0.03125
        %v1145 = vmul.f32 %v1143, %v1143
        %v1146 = vsub.f32 %v1144, %v1145
        %v1148 = vcombine.high %v1143, %v1143
        %v1150 = vunpack.c.l.s4 1983009808
        %v1151 = vunpack.c.0.s8 %v1150
        %v1152 = vlaneseq
        %v1153 = vshrl.u32 %v1152, 7
        %v1154 = vsub.s32 %v1151, %v1153
        %v1155 = vrot.slane %v1143, %v1154
        %v1157 = vunpack.c.l.s4 1983009808
        %v1158 = vunpack.c.0.s8 %v1157
        %v1159 = vlaneseq
        %v1160 = vshrl.u32 %v1159, 7
        %v1161 = vsub.s32 %v1158, %v1160
        %v1162 = vrot.slane %v1148, %v1161
        %v1163 = vcombine.high %v1155, %v1155
        %v1164 = vcombine.high %v1162, %v1162
        %v1169 = vsub.f32 %v908, %v1155
        %v1170 = vsub.f32 %v909, %v1163
        %v1171 = vsub.f32 %v910, %v1162
        %v1172 = vsub.f32 %v911, %v1164
        %v1173 = vsub.f32 %v912, %v1155
        %v1174 = vsub.f32 %v913, %v1163
        %v1175 = vsub.f32 %v914, %v1162
        %v1176 = vsub.f32 %v915, %v1164
        %v1177 = vsub.f32 %v916, %v1155
        %v1178 = vsub.f32 %v917, %v1163
        %v1179 = vsub.f32 %v918, %v1162
        %v1180 = vsub.f32 %v919, %v1164
        %v1181 = vsub.f32 %v920, %v1155
        %v1182 = vsub.f32 %v921, %v1163
        %v1183 = vsub.f32 %v922, %v1162
        %v1184 = vsub.f32 %v923, %v1164
        %v1185 = vadd.f32 %v1146, 1e-06
        %v1186 = vrsqrt.pop %v1185
        %v1188 = vcombine.high %v1186, %v1186
        %v1190 = vunpack.c.l.s4 1983009808
        %v1191 = vunpack.c.0.s8 %v1190
        %v1192 = vlaneseq
        %v1193 = vshrl.u32 %v1192, 7
        %v1194 = vsub.s32 %v1191, %v1193
        %v1195 = vrot.slane %v1186, %v1194
        %v1197 = vunpack.c.l.s4 1983009808
        %v1198 = vunpack.c.0.s8 %v1197
        %v1199 = vlaneseq
        %v1200 = vshrl.u32 %v1199, 7
        %v1201 = vsub.s32 %v1198, %v1200
        %v1202 = vrot.slane %v1188, %v1201
        %v1203 = vcombine.high %v1195, %v1195
        %v1204 = vcombine.high %v1202, %v1202
        %v1209 = vmul.f32 %v1169, %v1195
        %v1210 = vmul.f32 %v1170, %v1203
        %v1211 = vmul.f32 %v1171, %v1202
        %v1212 = vmul.f32 %v1172, %v1204
        %v1213 = vmul.f32 %v1173, %v1195
        %v1214 = vmul.f32 %v1174, %v1203
        %v1215 = vmul.f32 %v1175, %v1202
        %v1216 = vmul.f32 %v1176, %v1204
        %v1217 = vmul.f32 %v1177, %v1195
        %v1218 = vmul.f32 %v1178, %v1203
        %v1219 = vmul.f32 %v1179, %v1202
        %v1220 = vmul.f32 %v1180, %v1204
        %v1221 = vmul.f32 %v1181, %v1195
        %v1222 = vmul.f32 %v1182, %v1203
        %v1223 = vmul.f32 %v1183, %v1202
        %v1224 = vmul.f32 %v1184, %v1204
        %v1225 = vld [vmem:[%s3] sm:$0x1]
        %v1227 = vlaneseq
        %v1228 = vshrl.u32 %v1227, 7
        %v1229 = vsub.s32 0, %v1228
        %v1230 = vrot.slane %v1225, %v1229
        %v1231 = vcombine.high %v1230, %v1230
        %v1233 = vunpack.c.l.s4 1983009808
        %v1234 = vunpack.c.0.s8 %v1233
        %v1235 = vlaneseq
        %v1236 = vshrl.u32 %v1235, 7
        %v1237 = vsub.s32 %v1234, %v1236
        %v1238 = vrot.slane %v1230, %v1237
        %v1240 = vunpack.c.l.s4 1983009808
        %v1241 = vunpack.c.0.s8 %v1240
        %v1242 = vlaneseq
        %v1243 = vshrl.u32 %v1242, 7
        %v1244 = vsub.s32 %v1241, %v1243
        %v1245 = vrot.slane %v1231, %v1244
        %v1246 = vcombine.high %v1238, %v1238
        %v1247 = vcombine.high %v1245, %v1245
        %v1252 = vmul.f32 %v1209, %v1238
        %v1253 = vmul.f32 %v1210, %v1246
        %v1254 = vmul.f32 %v1211, %v1245
        %v1255 = vmul.f32 %v1212, %v1247
        %v1256 = vmul.f32 %v1213, %v1238
        %v1257 = vmul.f32 %v1214, %v1246
        %v1258 = vmul.f32 %v1215, %v1245
        %v1259 = vmul.f32 %v1216, %v1247
        %v1260 = vmul.f32 %v1217, %v1238
        %v1261 = vmul.f32 %v1218, %v1246
        %v1262 = vmul.f32 %v1219, %v1245
        %v1263 = vmul.f32 %v1220, %v1247
        %v1264 = vmul.f32 %v1221, %v1238
        %v1265 = vmul.f32 %v1222, %v1246
        %v1266 = vmul.f32 %v1223, %v1245
        %v1267 = vmul.f32 %v1224, %v1247
        %v1268 = vld [vmem:[%s4] sm:$0x1]
        %v1270 = vlaneseq
        %v1271 = vshrl.u32 %v1270, 7
        %v1272 = vsub.s32 0, %v1271
        %v1273 = vrot.slane %v1268, %v1272
        %v1274 = vcombine.high %v1273, %v1273
        %v1276 = vunpack.c.l.s4 1983009808
        %v1277 = vunpack.c.0.s8 %v1276
        %v1278 = vlaneseq
        %v1279 = vshrl.u32 %v1278, 7
        %v1280 = vsub.s32 %v1277, %v1279
        %v1281 = vrot.slane %v1273, %v1280
        %v1283 = vunpack.c.l.s4 1983009808
        %v1284 = vunpack.c.0.s8 %v1283
        %v1285 = vlaneseq
        %v1286 = vshrl.u32 %v1285, 7
        %v1287 = vsub.s32 %v1284, %v1286
        %v1288 = vrot.slane %v1274, %v1287
        %v1289 = vcombine.high %v1281, %v1281
        %v1290 = vcombine.high %v1288, %v1288
        %v1295 = vadd.f32 %v1252, %v1281
        %v1296 = vadd.f32 %v1253, %v1289
        %v1297 = vadd.f32 %v1254, %v1288
        %v1298 = vadd.f32 %v1255, %v1290
        %v1299 = vadd.f32 %v1256, %v1281
        %v1300 = vadd.f32 %v1257, %v1289
        %v1301 = vadd.f32 %v1258, %v1288
        %v1302 = vadd.f32 %v1259, %v1290
        %v1303 = vadd.f32 %v1260, %v1281
        %v1304 = vadd.f32 %v1261, %v1289
        %v1305 = vadd.f32 %v1262, %v1288
        %v1306 = vadd.f32 %v1263, %v1290
        %v1307 = vadd.f32 %v1264, %v1281
        %v1308 = vadd.f32 %v1265, %v1289
        %v1309 = vadd.f32 %v1266, %v1288
        %v1310 = vadd.f32 %v1267, %v1290
        %v1311 = vxor.u32 %v1295, 2147483648
        %v1312 = vxor.u32 %v1296, 2147483648
        %v1313 = vxor.u32 %v1297, 2147483648
        %v1314 = vxor.u32 %v1298, 2147483648
        %v1315 = vxor.u32 %v1299, 2147483648
        %v1316 = vxor.u32 %v1300, 2147483648
        %v1317 = vxor.u32 %v1301, 2147483648
        %v1318 = vxor.u32 %v1302, 2147483648
        %v1319 = vxor.u32 %v1303, 2147483648
        %v1320 = vxor.u32 %v1304, 2147483648
        %v1321 = vxor.u32 %v1305, 2147483648
        %v1322 = vxor.u32 %v1306, 2147483648
        %v1323 = vxor.u32 %v1307, 2147483648
        %v1324 = vxor.u32 %v1308, 2147483648
        %v1325 = vxor.u32 %v1309, 2147483648
        %v1326 = vxor.u32 %v1310, 2147483648
        %v1327 = vmul.f32 %v1311, 1.442695
        %v1328 = vpow.pop %v1327
        %v1329 = vmul.f32 %v1312, 1.442695
        %v1330 = vpow.pop %v1329
        %v1331 = vmul.f32 %v1313, 1.442695
        %v1332 = vpow.pop %v1331
        %v1333 = vmul.f32 %v1314, 1.442695
        %v1334 = vpow.pop %v1333
        %v1335 = vmul.f32 %v1315, 1.442695
        %v1336 = vpow.pop %v1335
        %v1337 = vmul.f32 %v1316, 1.442695
        %v1338 = vpow.pop %v1337
        %v1339 = vmul.f32 %v1317, 1.442695
        %v1340 = vpow.pop %v1339
        %v1341 = vmul.f32 %v1318, 1.442695
        %v1342 = vpow.pop %v1341
        %v1343 = vmul.f32 %v1319, 1.442695
        %v1344 = vpow.pop %v1343
        %v1345 = vmul.f32 %v1320, 1.442695
        %v1346 = vpow.pop %v1345
        %v1347 = vmul.f32 %v1321, 1.442695
        %v1348 = vpow.pop %v1347
        %v1349 = vmul.f32 %v1322, 1.442695
        %v1350 = vpow.pop %v1349
        %v1351 = vmul.f32 %v1323, 1.442695
        %v1352 = vpow.pop %v1351
        %v1353 = vmul.f32 %v1324, 1.442695
        %v1354 = vpow.pop %v1353
        %v1355 = vmul.f32 %v1325, 1.442695
        %v1356 = vpow.pop %v1355
        %v1357 = vmul.f32 %v1326, 1.442695
        %v1358 = vpow.pop %v1357
        %v1359 = vadd.f32 %v1328, 1.0
        %v1360 = vadd.f32 %v1330, 1.0
        %v1361 = vadd.f32 %v1332, 1.0
        %v1362 = vadd.f32 %v1334, 1.0
        %v1363 = vadd.f32 %v1336, 1.0
        %v1364 = vadd.f32 %v1338, 1.0
        %v1365 = vadd.f32 %v1340, 1.0
        %v1366 = vadd.f32 %v1342, 1.0
        %v1367 = vadd.f32 %v1344, 1.0
        %v1368 = vadd.f32 %v1346, 1.0
        %v1369 = vadd.f32 %v1348, 1.0
        %v1370 = vadd.f32 %v1350, 1.0
        %v1371 = vadd.f32 %v1352, 1.0
        %v1372 = vadd.f32 %v1354, 1.0
        %v1373 = vadd.f32 %v1356, 1.0
        %v1374 = vadd.f32 %v1358, 1.0
        %v1375 = vrcp.pop %v1359
        %v1376 = vmul.f32 1.0, %v1375
        %v1377 = vrcp.pop %v1360
        %v1378 = vmul.f32 1.0, %v1377
        %v1379 = vrcp.pop %v1361
        %v1380 = vmul.f32 1.0, %v1379
        %v1381 = vrcp.pop %v1362
        %v1382 = vmul.f32 1.0, %v1381
        %v1383 = vrcp.pop %v1363
        %v1384 = vmul.f32 1.0, %v1383
        %v1385 = vrcp.pop %v1364
        %v1386 = vmul.f32 1.0, %v1385
        %v1387 = vrcp.pop %v1365
        %v1388 = vmul.f32 1.0, %v1387
        %v1389 = vrcp.pop %v1366
        %v1390 = vmul.f32 1.0, %v1389
        %v1391 = vrcp.pop %v1367
        %v1392 = vmul.f32 1.0, %v1391
        %v1393 = vrcp.pop %v1368
        %v1394 = vmul.f32 1.0, %v1393
        %v1395 = vrcp.pop %v1369
        %v1396 = vmul.f32 1.0, %v1395
        %v1397 = vrcp.pop %v1370
        %v1398 = vmul.f32 1.0, %v1397
        %v1399 = vrcp.pop %v1371
        %v1400 = vmul.f32 1.0, %v1399
        %v1401 = vrcp.pop %v1372
        %v1402 = vmul.f32 1.0, %v1401
        %v1403 = vrcp.pop %v1373
        %v1404 = vmul.f32 1.0, %v1403
        %v1405 = vrcp.pop %v1374
        %v1406 = vmul.f32 1.0, %v1405
        %v1407 = vmul.f32 %v1295, %v1376
        %v1408 = vmul.f32 %v1296, %v1378
        %v1409 = vmul.f32 %v1297, %v1380
        %v1410 = vmul.f32 %v1298, %v1382
        %v1411 = vmul.f32 %v1299, %v1384
        %v1412 = vmul.f32 %v1300, %v1386
        %v1413 = vmul.f32 %v1301, %v1388
        %v1414 = vmul.f32 %v1302, %v1390
        %v1415 = vmul.f32 %v1303, %v1392
        %v1416 = vmul.f32 %v1304, %v1394
        %v1417 = vmul.f32 %v1305, %v1396
        %v1418 = vmul.f32 %v1306, %v1398
        %v1419 = vmul.f32 %v1307, %v1400
        %v1420 = vmul.f32 %v1308, %v1402
        %v1421 = vmul.f32 %v1309, %v1404
        %v1422 = vmul.f32 %v1310, %v1406
        %v1439 = vcombine.low %v1407, %v1408
        %v1440 = vcombine.low %v1409, %v1410
        %v1442 = vunpack.c.l.s4 1983009808
        %v1443 = vunpack.c.0.s8 %v1442
        %v1444 = vlaneseq
        %v1445 = vshrl.u32 %v1444, 7
        %v1446 = vsub.s32 %v1443, %v1445
        %v1447 = vrot.slane %v1439, %v1446
        %v1449 = vunpack.c.l.s4 1983009808
        %v1450 = vunpack.c.0.s8 %v1449
        %v1451 = vlaneseq
        %v1452 = vshrl.u32 %v1451, 7
        %v1453 = vsub.s32 %v1450, %v1452
        %v1454 = vrot.slane %v1440, %v1453
        %v1455 = vcombine.low %v1447, %v1454
        %v1456 = vcombine.low %v1411, %v1412
        %v1457 = vcombine.low %v1413, %v1414
        %v1459 = vunpack.c.l.s4 1983009808
        %v1460 = vunpack.c.0.s8 %v1459
        %v1461 = vlaneseq
        %v1462 = vshrl.u32 %v1461, 7
        %v1463 = vsub.s32 %v1460, %v1462
        %v1464 = vrot.slane %v1456, %v1463
        %v1466 = vunpack.c.l.s4 1983009808
        %v1467 = vunpack.c.0.s8 %v1466
        %v1468 = vlaneseq
        %v1469 = vshrl.u32 %v1468, 7
        %v1470 = vsub.s32 %v1467, %v1469
        %v1471 = vrot.slane %v1457, %v1470
        %v1472 = vcombine.low %v1464, %v1471
        %v1473 = vcombine.low %v1415, %v1416
        %v1474 = vcombine.low %v1417, %v1418
        %v1476 = vunpack.c.l.s4 1983009808
        %v1477 = vunpack.c.0.s8 %v1476
        %v1478 = vlaneseq
        %v1479 = vshrl.u32 %v1478, 7
        %v1480 = vsub.s32 %v1477, %v1479
        %v1481 = vrot.slane %v1473, %v1480
        %v1483 = vunpack.c.l.s4 1983009808
        %v1484 = vunpack.c.0.s8 %v1483
        %v1485 = vlaneseq
        %v1486 = vshrl.u32 %v1485, 7
        %v1487 = vsub.s32 %v1484, %v1486
        %v1488 = vrot.slane %v1474, %v1487
        %v1489 = vcombine.low %v1481, %v1488
        %v1490 = vcombine.low %v1419, %v1420
        %v1491 = vcombine.low %v1421, %v1422
        %v1493 = vunpack.c.l.s4 1983009808
        %v1494 = vunpack.c.0.s8 %v1493
        %v1495 = vlaneseq
        %v1496 = vshrl.u32 %v1495, 7
        %v1497 = vsub.s32 %v1494, %v1496
        %v1498 = vrot.slane %v1490, %v1497
        %v1500 = vunpack.c.l.s4 1983009808
        %v1501 = vunpack.c.0.s8 %v1500
        %v1502 = vlaneseq
        %v1503 = vshrl.u32 %v1502, 7
        %v1504 = vsub.s32 %v1501, %v1503
        %v1505 = vrot.slane %v1491, %v1504
        %v1506 = vcombine.low %v1498, %v1505
        %v1511 = vpack.c.bf16 %v1472, %v1455
        %v1512 = vpack.c.bf16 %v1506, %v1489
        %v1515 = vunpack.c.l.b16 %v1511
        %v1516 = vunpack.c.h.b16 %v1511
        %v1517 = vunpack.c.l.b16 %v1512
        %v1518 = vunpack.c.h.b16 %v1512
        %v1519 = vpack.c.b16 %v1515, %v1515
        %v1520 = vpack.c.b16 %v1516, %v1516
        %v1521 = vpack.c.b16 %v1517, %v1517
        %v1522 = vpack.c.b16 %v1518, %v1518
        %v1524 = vshrl.u32 %v1519, 16
        %v1526 = vrot.slane %v1524, 7
        %v1527 = vshll.u32 %v1519, 16
        %v1529 = vor.u32 %v1526, %v1527
        %v1530 = vrot.slane %v1526, 4
        %v1532 = vshrl.u32 %v1520, 16
        %v1534 = vrot.slane %v1532, 7
        %v1535 = vshll.u32 %v1520, 16
        %v1537 = vor.u32 %v1534, %v1535
        %v1538 = vsel %vm463, %v1530, %v1537
        %v1539 = vrot.slane %v1534, 4
        %v1541 = vshrl.u32 %v1521, 16
        %v1543 = vrot.slane %v1541, 7
        %v1544 = vshll.u32 %v1521, 16
        %v1546 = vor.u32 %v1543, %v1544
        %v1547 = vsel %vm463, %v1539, %v1546
        %v1548 = vrot.slane %v1543, 4
        %v1550 = vshrl.u32 %v1522, 16
        %v1552 = vrot.slane %v1550, 7
        %v1553 = vshll.u32 %v1522, 16
        %v1555 = vor.u32 %v1552, %v1553
        %v1556 = vsel %vm463, %v1548, %v1555
        %v1557 = vrot.slane %v1552, 4
        %vm1563 = vcmask 60416
        %vm1564 = vmand %vm1563, %vm446
        %v1565 = vld [vmem:[#allocation4] sm:$0xf]
        %v1566 = vsel %vm1564, %v1529, %v1565
        %1567 = vst [vmem:[#allocation4] sm:$0xf] %v1566
        %vm1568 = vcmask 60416
        %1569 = vst.msk [vmem:[#allocation4 + $0x4] sm:$0xf] %vm1568, %v1538
        %1570 = vst.msk [vmem:[#allocation4 + $0x8] sm:$0xf] %vm1568, %v1547
        %1571 = vst.msk [vmem:[#allocation4 + $0xc] sm:$0xf] %vm1568, %v1556
        %v1572 = vld [vmem:[#allocation4 + $0x10] sm:$0x1]
        %v1573 = vsel %vm452, %v1557, %v1572
        %1574 = vst [vmem:[#allocation4 + $0x10] sm:$0x1] %v1573
        %v1575 = vld [vmem:[#allocation4] sm:$0xf]
        %v1576 = vld [vmem:[#allocation4 + $0x4] sm:$0xf]
        %v1577 = vld [vmem:[#allocation4 + $0x8] sm:$0xf]
        %v1578 = vld [vmem:[#allocation4 + $0xc] sm:$0xf]
        %v1579 = vld [vmem:[#allocation4 + $0x10] sm:$0x1]
        %v1580 = vld [vmem:[#allocation4] sm:$0xe]
        %v1585 = vunpack.c.l.b16 %v1575
        %v1586 = vunpack.c.l.b16 %v1576
        %v1587 = vunpack.c.l.b16 %v1577
        %v1588 = vunpack.c.l.b16 %v1578
        %v1589 = vpack.c.b16 %v1586, %v1585
        %v1590 = vpack.c.b16 %v1588, %v1587
        %v1592 = vunpack.c.l.b16 %v1579
        %v1593 = vpack.c.b16 %v1592, %v1592
        %v1595 = vshrl.u32 %v1589, 16
        %v1597 = vshll.u32 %v1589, 16
        %v1599 = vrot.slane %v1597, 1
        %v1600 = vor.u32 %v1595, %v1599
        %v1602 = vshll.u32 %v1590, 16
        %v1604 = vrot.slane %v1602, 1
        %v1605 = vsel %vm506, %v1600, %v1604
        %v1606 = vshrl.u32 %v1590, 16
        %v1608 = vor.u32 %v1606, %v1604
        %v1610 = vshll.u32 %v1593, 16
        %v1612 = vrot.slane %v1610, 1
        %v1613 = vsel %vm506, %v1608, %v1612
        %1614 = vrot.lane.b32.xlu0 %v1605, 8
        %v1615 = vpop.permute.xlu0 %1614
        %1616 = vrot.lane.b32.xlu0 %v1613, 8
        %v1617 = vpop.permute.xlu0 %1616
        %v1619 = vunpack.c.l.b16 %v1580
        %v1620 = vpack.c.b16 %v1586, %v1619
        %v1621 = vrot.slane %v1620, 1
        %v1622 = vrot.slane %v1590, 1
        %v1623 = vsel %vm524, %v1621, %v1622
        %v1624 = vrot.slane %v1593, 1
        %v1625 = vsel %vm524, %v1622, %v1624
        %1626 = vrot.lane.b32.xlu0 %v1623, 16
        %v1627 = vpop.permute.xlu0 %1626
        %1628 = vrot.lane.b32.xlu0 %v1625, 16
        %v1629 = vpop.permute.xlu0 %1628
        %v1631 = vsel %vm1012, %v1589, %v1615
        %v1633 = vsel %vm1012, %v1590, %v1617
        %v1635 = vsel %vm530, %v1631, %v1627
        %v1637 = vsel %vm530, %v1633, %v1629
        %v1638 = vld [vmem:[%s5] sm:$0xf]
        %v1639 = vld [vmem:[%s5 + $0x4] sm:$0xf]
        %v1640 = vld [vmem:[%s5 + $0x8] sm:$0xf]
        %v1641 = vld [vmem:[%s6] sm:$0x1]
        %v1643 = vlaneseq
        %v1644 = vshrl.u32 %v1643, 7
        %v1645 = vsub.s32 0, %v1644
        %v1646 = vrot.slane %v1641, %v1645
        %v1651 = vunpack.c.l.b16 %v1638
        %v1652 = vunpack.c.l.b16 %v1639
        %v1653 = vunpack.c.l.b16 %v1640
        %v1654 = vpack.c.b16 %v1652, %v1651
        %v1655 = vpack.c.b16 %v1653, %v1653
        %vm1657 = vcmask 195584
        %v1658 = vsel %vm1657, %v1635, 0
        %v1660 = vsel %vm1657, %v1637, 0
        %vm1662 = vcmask 1043456
        %v1664 = vsel %vm1662, %v1655, 0
        %1666 = vmatprep.subr.bf16.mxu0 0
        %1667 = vmatpush1.bf16.msra.mxu0 0
        %1668 = vmatprep.subr.bf16.mxu0 0
        %1669 = vmatpush1.bf16.msra.mxu0 0
        %1670 = vmatprep.subr.bf16.mxu0 0
        %1671 = vmatpush1.bf16.msra.mxu0 0
        %1672 = vmatprep.subr.bf16.mxu0 0
        %1673 = vmatpush1.bf16.msra.mxu0 0
        %1674 = vmatprep.subr.bf16.mxu0 0
        %1675 = vmatpush1.bf16.msra.mxu0 0
        %1676 = vmatprep.subr.bf16.mxu0 0
        %1677 = vmatpush1.bf16.msra.mxu0 0
        %1678 = vmatprep.subr.bf16.mxu0 0
        %1679 = vmatpush1.bf16.msra.mxu0 %v1664
        %1680 = vmatprep.subr.bf16.mxu0 0
        %1681 = vmatpush1.bf16.msra.mxu0 %v1654
        %1682 = vmatprep.subr.bf16.mxu0 0
        %1683 = vmatpush2.bf16.msra.mxu0 0
        %1684 = vmatprep.subr.bf16.mxu0 0
        %1685 = vmatpush2.bf16.msra.mxu0 0
        %1686 = vmatprep.subr.bf16.mxu0 0
        %1687 = vmatpush2.bf16.msra.mxu0 0
        %1688 = vmatprep.subr.bf16.mxu0 0
        %1689 = vmatpush2.bf16.msra.mxu0 0
        %1690 = vmatprep.subr.bf16.mxu0 0
        %1691 = vmatpush2.bf16.msra.mxu0 0
        %1692 = vmatprep.subr.bf16.mxu0 0
        %1693 = vmatpush2.bf16.msra.mxu0 0
        %1694 = vmatprep.subr.bf16.mxu0 0
        %1695 = vmatpush2.bf16.msra.mxu0 0
        %1696 = vmatprep.subr.bf16.mxu0 0
        %1697 = vmatpush2.bf16.msra.mxu0 0
        %1698 = vmatprep.mubr.bf16.mxu0 0
        %1699 = vmatmul.mubr.bf16.gmra.mxu0 %v1658
        %v1700 = vpop.f32.mrf.mxu0
        %v1701 = vadd.f32 %v1646, %v1700
        %v1702 = vpop.f32.mrf.mxu0
        %v1703 = vpop.f32.mrf.mxu0
        %v1704 = vadd.f32 %v1646, %v1703
        %v1705 = vpop.f32.mrf.mxu0
        %1706 = vmatprep.mubr.bf16.mxu0 0
        %1707 = vmatmul.mubr.bf16.gmra.mxu0 %v1660
        %v1708 = vpop.f32.mrf.mxu0
        %v1709 = vadd.f32 %v1646, %v1708
        %v1710 = vpop.f32.mrf.mxu0
        %v1711 = vpop.f32.mrf.mxu0
        %v1712 = vadd.f32 %v1646, %v1711
        %v1713 = vpop.f32.mrf.mxu0
        %1714 = vdwg.mxu0
        %v1715 = vsel %vm1012, %v1701, 0.0
        %v1716 = vsel %vm1012, %v1704, 0.0
        %v1717 = vadd.f32 %v1715, %v1716
        %v1718 = vsel %vm1012, %v1709, 0.0
        %v1719 = vadd.f32 %v1717, %v1718
        %v1720 = vsel %vm1012, %v1712, 0.0
        %v1721 = vadd.f32 %v1719, %v1720
        %v1722 = vrot.slane %v1721, 4
        %v1723 = vadd.f32 %v1721, %v1722
        %v1724 = vrot.slane %v1723, 2
        %v1725 = vadd.f32 %v1723, %v1724
        %v1726 = vrot.slane %v1725, 1
        %v1727 = vadd.f32 %v1725, %v1726
        %v1728 = vmul.f32 %v1701, %v1701
        %v1729 = vmul.f32 %v1704, %v1704
        %v1730 = vmul.f32 %v1709, %v1709
        %v1731 = vmul.f32 %v1712, %v1712
        %v1732 = vsel %vm1012, %v1728, 0.0
        %v1733 = vsel %vm1012, %v1729, 0.0
        %v1734 = vadd.f32 %v1732, %v1733
        %v1735 = vsel %vm1012, %v1730, 0.0
        %v1736 = vadd.f32 %v1734, %v1735
        %v1737 = vsel %vm1012, %v1731, 0.0
        %v1738 = vadd.f32 %v1736, %v1737
        %v1739 = vrot.slane %v1738, 4
        %v1740 = vadd.f32 %v1738, %v1739
        %v1741 = vrot.slane %v1740, 2
        %v1742 = vadd.f32 %v1740, %v1741
        %v1743 = vrot.slane %v1742, 1
        %v1744 = vadd.f32 %v1742, %v1743
        %v1745 = vmul.f32 %v1727, 0.03125
        %v1746 = vmul.f32 %v1744, 0.03125
        %v1747 = vmul.f32 %v1745, %v1745
        %v1748 = vsub.f32 %v1746, %v1747
        %v1749 = vsub.f32 %v1701, %v1745
        %v1750 = vsub.f32 %v1704, %v1745
        %v1751 = vsub.f32 %v1709, %v1745
        %v1752 = vsub.f32 %v1712, %v1745
        %v1753 = vadd.f32 %v1748, 1e-06
        %v1754 = vrsqrt.pop %v1753
        %v1755 = vmul.f32 %v1749, %v1754
        %v1756 = vmul.f32 %v1750, %v1754
        %v1757 = vmul.f32 %v1751, %v1754
        %v1758 = vmul.f32 %v1752, %v1754
        %v1759 = vld [vmem:[%s7] sm:$0x1]
        %v1761 = vlaneseq
        %v1762 = vshrl.u32 %v1761, 7
        %v1763 = vsub.s32 0, %v1762
        %v1764 = vrot.slane %v1759, %v1763
        %v1766 = vmul.f32 %v1755, %v1764
        %v1767 = vmul.f32 %v1756, %v1764
        %v1768 = vmul.f32 %v1757, %v1764
        %v1769 = vmul.f32 %v1758, %v1764
        %v1770 = vld [vmem:[%s8] sm:$0x1]
        %v1772 = vlaneseq
        %v1773 = vshrl.u32 %v1772, 7
        %v1774 = vsub.s32 0, %v1773
        %v1775 = vrot.slane %v1770, %v1774
        %v1777 = vadd.f32 %v1766, %v1775
        %v1778 = vadd.f32 %v1767, %v1775
        %v1779 = vadd.f32 %v1768, %v1775
        %v1780 = vadd.f32 %v1769, %v1775
        %v1781 = vxor.u32 %v1777, 2147483648
        %v1782 = vxor.u32 %v1778, 2147483648
        %v1783 = vxor.u32 %v1779, 2147483648
        %v1784 = vxor.u32 %v1780, 2147483648
        %v1785 = vmul.f32 %v1781, 1.442695
        %v1786 = vpow.pop %v1785
        %v1787 = vmul.f32 %v1782, 1.442695
        %v1788 = vpow.pop %v1787
        %v1789 = vmul.f32 %v1783, 1.442695
        %v1790 = vpow.pop %v1789
        %v1791 = vmul.f32 %v1784, 1.442695
        %v1792 = vpow.pop %v1791
        %v1793 = vadd.f32 %v1786, 1.0
        %v1794 = vadd.f32 %v1788, 1.0
        %v1795 = vadd.f32 %v1790, 1.0
        %v1796 = vadd.f32 %v1792, 1.0
        %v1797 = vrcp.pop %v1793
        %v1798 = vmul.f32 1.0, %v1797
        %v1799 = vrcp.pop %v1794
        %v1800 = vmul.f32 1.0, %v1799
        %v1801 = vrcp.pop %v1795
        %v1802 = vmul.f32 1.0, %v1801
        %v1803 = vrcp.pop %v1796
        %v1804 = vmul.f32 1.0, %v1803
        %v1805 = vmul.f32 %v1777, %v1798
        %v1806 = vmul.f32 %v1778, %v1800
        %v1807 = vmul.f32 %v1779, %v1802
        %v1808 = vmul.f32 %v1780, %v1804
        %v1809 = vpack.c.bf16 %v1806, %v1805
        %v1810 = vpack.c.bf16 %v1808, %v1807
        %v1813 = vunpack.c.l.b16 %v1809
        %v1814 = vunpack.c.h.b16 %v1809
        %v1815 = vunpack.c.l.b16 %v1810
        %v1816 = vunpack.c.h.b16 %v1810
        %v1817 = vpack.c.b16 %v1813, %v1813
        %v1818 = vpack.c.b16 %v1814, %v1814
        %v1819 = vpack.c.b16 %v1815, %v1815
        %v1820 = vpack.c.b16 %v1816, %v1816
        %v1822 = vshrl.u32 %v1817, 16
        %v1824 = vrot.slane %v1822, 7
        %v1825 = vshll.u32 %v1817, 16
        %v1827 = vor.u32 %v1824, %v1825
        %v1828 = vrot.slane %v1824, 4
        %v1830 = vshrl.u32 %v1818, 16
        %v1832 = vrot.slane %v1830, 7
        %v1833 = vshll.u32 %v1818, 16
        %v1835 = vor.u32 %v1832, %v1833
        %v1836 = vsel %vm463, %v1828, %v1835
        %v1837 = vrot.slane %v1832, 4
        %v1839 = vshrl.u32 %v1819, 16
        %v1841 = vrot.slane %v1839, 7
        %v1842 = vshll.u32 %v1819, 16
        %v1844 = vor.u32 %v1841, %v1842
        %v1845 = vsel %vm463, %v1837, %v1844
        %v1846 = vrot.slane %v1841, 4
        %v1848 = vshrl.u32 %v1820, 16
        %v1850 = vrot.slane %v1848, 7
        %v1851 = vshll.u32 %v1820, 16
        %v1853 = vor.u32 %v1850, %v1851
        %v1854 = vsel %vm463, %v1846, %v1853
        %v1855 = vrot.slane %v1850, 4
        %v1861 = vsel %vm1564, %v1827, %v1575
        %1862 = vst [vmem:[#allocation4] sm:$0xf] %v1861
        %1863 = vst.msk [vmem:[#allocation4 + $0x4] sm:$0xf] %vm1568, %v1836
        %1864 = vst.msk [vmem:[#allocation4 + $0x8] sm:$0xf] %vm1568, %v1845
        %1865 = vst.msk [vmem:[#allocation4 + $0xc] sm:$0xf] %vm1568, %v1854
        %v1866 = vld [vmem:[#allocation4 + $0x10] sm:$0x1]
        %v1867 = vsel %vm452, %v1855, %v1866
        %1868 = vst [vmem:[#allocation4 + $0x10] sm:$0x1] %v1867
        %v1869 = vld [vmem:[#allocation4] sm:$0xf]
        %v1870 = vld [vmem:[#allocation4 + $0x4] sm:$0xf]
        %v1871 = vld [vmem:[#allocation4 + $0x8] sm:$0xf]
        %v1872 = vld [vmem:[#allocation4 + $0xc] sm:$0xf]
        %v1873 = vld [vmem:[#allocation4 + $0x10] sm:$0x1]
        %v1874 = vld [vmem:[#allocation4] sm:$0xe]
        %v1879 = vunpack.c.l.b16 %v1869
        %v1880 = vunpack.c.l.b16 %v1870
        %v1881 = vunpack.c.l.b16 %v1871
        %v1882 = vunpack.c.l.b16 %v1872
        %v1883 = vpack.c.b16 %v1880, %v1879
        %v1884 = vpack.c.b16 %v1882, %v1881
        %v1886 = vunpack.c.l.b16 %v1873
        %v1887 = vpack.c.b16 %v1886, %v1886
        %v1889 = vshrl.u32 %v1883, 16
        %v1891 = vshll.u32 %v1883, 16
        %v1893 = vrot.slane %v1891, 1
        %v1894 = vor.u32 %v1889, %v1893
        %v1896 = vshll.u32 %v1884, 16
        %v1898 = vrot.slane %v1896, 1
        %v1899 = vsel %vm506, %v1894, %v1898
        %v1900 = vshrl.u32 %v1884, 16
        %v1902 = vor.u32 %v1900, %v1898
        %v1904 = vshll.u32 %v1887, 16
        %v1906 = vrot.slane %v1904, 1
        %v1907 = vsel %vm506, %v1902, %v1906
        %1908 = vrot.lane.b32.xlu0 %v1899, 8
        %v1909 = vpop.permute.xlu0 %1908
        %1910 = vrot.lane.b32.xlu0 %v1907, 8
        %v1911 = vpop.permute.xlu0 %1910
        %v1913 = vunpack.c.l.b16 %v1874
        %v1914 = vpack.c.b16 %v1880, %v1913
        %v1915 = vrot.slane %v1914, 1
        %v1916 = vrot.slane %v1884, 1
        %v1917 = vsel %vm524, %v1915, %v1916
        %v1918 = vrot.slane %v1887, 1
        %v1919 = vsel %vm524, %v1916, %v1918
        %1920 = vrot.lane.b32.xlu0 %v1917, 16
        %v1921 = vpop.permute.xlu0 %1920
        %1922 = vrot.lane.b32.xlu0 %v1919, 16
        %v1923 = vpop.permute.xlu0 %1922
        %v1925 = vsel %vm1012, %v1883, %v1909
        %v1927 = vsel %vm1012, %v1884, %v1911
        %v1929 = vsel %vm530, %v1925, %v1921
        %v1931 = vsel %vm530, %v1927, %v1923
        %v1932 = vld [vmem:[%s9] sm:$0xf]
        %v1933 = vld [vmem:[%s9 + $0x4] sm:$0xf]
        %v1934 = vld [vmem:[%s9 + $0x8] sm:$0xf]
        %v1935 = vld [vmem:[%s10] sm:$0x1]
        %v1937 = vlaneseq
        %v1938 = vshrl.u32 %v1937, 7
        %v1939 = vsub.s32 0, %v1938
        %v1940 = vrot.slane %v1935, %v1939
        %v1945 = vunpack.c.l.b16 %v1932
        %v1946 = vunpack.c.l.b16 %v1933
        %v1947 = vunpack.c.l.b16 %v1934
        %v1948 = vpack.c.b16 %v1946, %v1945
        %v1949 = vpack.c.b16 %v1947, %v1947
        %v1951 = vsel %vm1657, %v1929, 0
        %v1953 = vsel %vm1657, %v1931, 0
        %v1956 = vsel %vm1662, %v1949, 0
        %1958 = vmatprep.subr.bf16.mxu0 0
        %1959 = vmatpush1.bf16.msra.mxu0 0
        %1960 = vmatprep.subr.bf16.mxu0 0
        %1961 = vmatpush1.bf16.msra.mxu0 0
        %1962 = vmatprep.subr.bf16.mxu0 0
        %1963 = vmatpush1.bf16.msra.mxu0 0
        %1964 = vmatprep.subr.bf16.mxu0 0
        %1965 = vmatpush1.bf16.msra.mxu0 0
        %1966 = vmatprep.subr.bf16.mxu0 0
        %1967 = vmatpush1.bf16.msra.mxu0 0
        %1968 = vmatprep.subr.bf16.mxu0 0
        %1969 = vmatpush1.bf16.msra.mxu0 0
        %1970 = vmatprep.subr.bf16.mxu0 0
        %1971 = vmatpush1.bf16.msra.mxu0 %v1956
        %1972 = vmatprep.subr.bf16.mxu0 0
        %1973 = vmatpush1.bf16.msra.mxu0 %v1948
        %1974 = vmatprep.subr.bf16.mxu0 0
        %1975 = vmatpush2.bf16.msra.mxu0 0
        %1976 = vmatprep.subr.bf16.mxu0 0
        %1977 = vmatpush2.bf16.msra.mxu0 0
        %1978 = vmatprep.subr.bf16.mxu0 0
        %1979 = vmatpush2.bf16.msra.mxu0 0
        %1980 = vmatprep.subr.bf16.mxu0 0
        %1981 = vmatpush2.bf16.msra.mxu0 0
        %1982 = vmatprep.subr.bf16.mxu0 0
        %1983 = vmatpush2.bf16.msra.mxu0 0
        %1984 = vmatprep.subr.bf16.mxu0 0
        %1985 = vmatpush2.bf16.msra.mxu0 0
        %1986 = vmatprep.subr.bf16.mxu0 0
        %1987 = vmatpush2.bf16.msra.mxu0 0
        %1988 = vmatprep.subr.bf16.mxu0 0
        %1989 = vmatpush2.bf16.msra.mxu0 0
        %1990 = vmatprep.mubr.bf16.mxu0 0
        %1991 = vmatmul.mubr.bf16.gmra.mxu0 %v1951
        %v1992 = vpop.f32.mrf.mxu0
        %v1993 = vadd.f32 %v1940, %v1992
        %v1994 = vpop.f32.mrf.mxu0
        %v1995 = vpop.f32.mrf.mxu0
        %v1996 = vadd.f32 %v1940, %v1995
        %v1997 = vpop.f32.mrf.mxu0
        %1998 = vmatprep.mubr.bf16.mxu0 0
        %1999 = vmatmul.mubr.bf16.gmra.mxu0 %v1953
        %v2000 = vpop.f32.mrf.mxu0
        %v2001 = vadd.f32 %v1940, %v2000
        %v2002 = vpop.f32.mrf.mxu0
        %v2003 = vpop.f32.mrf.mxu0
        %v2004 = vadd.f32 %v1940, %v2003
        %v2005 = vpop.f32.mrf.mxu0
        %2006 = vdwg.mxu0
        %v2007 = vadd.f32 %v1993, %v956
        %v2008 = vadd.f32 %v1996, %v973
        %v2009 = vadd.f32 %v2001, %v990
        %v2010 = vadd.f32 %v2004, %v1007
        %v2011 = vpack.c.bf16 %v2008, %v2007
        %v2012 = vpack.c.bf16 %v2010, %v2009
        %v2013 = vld [vmem:[%s11] sm:$0xf]
        %v2014 = vld [vmem:[%s12] sm:$0x1]
        %v2016 = vlaneseq
        %v2017 = vshrl.u32 %v2016, 7
        %v2018 = vsub.s32 0, %v2017
        %v2019 = vrot.slane %v2014, %v2018
        %v2022 = vsel %vm1012, %v2011, 0
        %v2025 = vsel %vm1012, %v2012, 0
        %v2028 = vsel %vm1662, %v2013, 0
        %2030 = vmatprep.subr.bf16.mxu0 0
        %2031 = vmatpush1.bf16.msra.mxu0 0
        %2032 = vmatprep.subr.bf16.mxu0 0
        %2033 = vmatpush1.bf16.msra.mxu0 0
        %2034 = vmatprep.subr.bf16.mxu0 0
        %2035 = vmatpush1.bf16.msra.mxu0 0
        %2036 = vmatprep.subr.bf16.mxu0 0
        %2037 = vmatpush1.bf16.msra.mxu0 0
        %2038 = vmatprep.subr.bf16.mxu0 0
        %2039 = vmatpush1.bf16.msra.mxu0 0
        %2040 = vmatprep.subr.bf16.mxu0 0
        %2041 = vmatpush1.bf16.msra.mxu0 0
        %2042 = vmatprep.subr.bf16.mxu0 0
        %2043 = vmatpush1.bf16.msra.mxu0 0
        %2044 = vmatprep.subr.bf16.mxu0 0
        %2045 = vmatpush1.bf16.msra.mxu0 %v2028
        %2046 = vmatprep.subr.bf16.mxu0 0
        %2047 = vmatpush2.bf16.msra.mxu0 0
        %2048 = vmatprep.subr.bf16.mxu0 0
        %2049 = vmatpush2.bf16.msra.mxu0 0
        %2050 = vmatprep.subr.bf16.mxu0 0
        %2051 = vmatpush2.bf16.msra.mxu0 0
        %2052 = vmatprep.subr.bf16.mxu0 0
        %2053 = vmatpush2.bf16.msra.mxu0 0
        %2054 = vmatprep.subr.bf16.mxu0 0
        %2055 = vmatpush2.bf16.msra.mxu0 0
        %2056 = vmatprep.subr.bf16.mxu0 0
        %2057 = vmatpush2.bf16.msra.mxu0 0
        %2058 = vmatprep.subr.bf16.mxu0 0
        %2059 = vmatpush2.bf16.msra.mxu0 0
        %2060 = vmatprep.subr.bf16.mxu0 0
        %2061 = vmatpush2.bf16.msra.mxu0 0
        %2062 = vmatprep.mubr.bf16.mxu0 0
        %2063 = vmatmul.mubr.bf16.gmra.mxu0 %v2022
        %v2064 = vpop.f32.mrf.mxu0
        %v2065 = vadd.f32 %v2019, %v2064
        %v2066 = vpop.f32.mrf.mxu0
        %v2067 = vpop.f32.mrf.mxu0
        %v2068 = vadd.f32 %v2019, %v2067
        %v2069 = vpop.f32.mrf.mxu0
        %2070 = vmatprep.mubr.bf16.mxu0 0
        %2071 = vmatmul.mubr.bf16.gmra.mxu0 %v2025
        %v2072 = vpop.f32.mrf.mxu0
        %v2073 = vadd.f32 %v2019, %v2072
        %v2074 = vpop.f32.mrf.mxu0
        %v2075 = vpop.f32.mrf.mxu0
        %v2076 = vadd.f32 %v2019, %v2075
        %v2077 = vpop.f32.mrf.mxu0
        %2078 = vdwg.mxu0
        %v2079 = vxor.u32 %v2065, 2147483648
        %v2080 = vxor.u32 %v2068, 2147483648
        %v2081 = vxor.u32 %v2073, 2147483648
        %v2082 = vxor.u32 %v2076, 2147483648
        %v2083 = vmul.f32 %v2079, 1.442695
        %v2084 = vpow.pop %v2083
        %v2085 = vmul.f32 %v2080, 1.442695
        %v2086 = vpow.pop %v2085
        %v2087 = vmul.f32 %v2081, 1.442695
        %v2088 = vpow.pop %v2087
        %v2089 = vmul.f32 %v2082, 1.442695
        %v2090 = vpow.pop %v2089
        %v2091 = vadd.f32 %v2084, 1.0
        %v2092 = vadd.f32 %v2086, 1.0
        %v2093 = vadd.f32 %v2088, 1.0
        %v2094 = vadd.f32 %v2090, 1.0
        %v2095 = vrcp.pop %v2091
        %v2096 = vmul.f32 1.0, %v2095
        %v2097 = vrcp.pop %v2092
        %v2098 = vmul.f32 1.0, %v2097
        %v2099 = vrcp.pop %v2093
        %v2100 = vmul.f32 1.0, %v2099
        %v2101 = vrcp.pop %v2094
        %v2102 = vmul.f32 1.0, %v2101
        %v2103 = vmul.f32 %v2065, %v2096
        %v2104 = vmul.f32 %v2068, %v2098
        %v2105 = vmul.f32 %v2073, %v2100
        %v2106 = vmul.f32 %v2076, %v2102
        %2107 = vst.msk [vmem:[%s433] sm:$0xff] %vm533, %v2103
        %2108 = vst.msk [vmem:[%s433 + $0x8] sm:$0xff] %vm533, %v2104
        %2109 = vst.msk [vmem:[%s433 + $0x10] sm:$0xff] %vm533, %v2105
        %2110 = vst.msk [vmem:[%s433 + $0x18] sm:$0xff] %vm533, %v2106
        %s2111 = sand.u32 %s313, 1
        %s2112 = scalar_lea.sflag [#allocation6], %s2111
        %s2113 = sand.u32 %s313, 1
        %s2114 = smul.addr %s2113, 32
        %s2115 = scalar_lea.vmem [#allocation5], %s2114
        // Predicated region
        $region73: #{upsampler_forward.3} parent=71 // pred_check
          %p2116 = pneg %p323
        $region74: #{upsampler_forward.3} parent=71 // pred_check_branch
          %2118 = sbr.rel (%p2116) target = $region76
        $region75: #{upsampler_forward.3} parent=71 // pred_region
          %s2120 = ssub.s32 512, 512
          %2121 = vsyncadd %s2112, %s2120
          %s2122 = smul.addr %s27, 4
          %s2123 = smul.addr %s2122, 128
          %s2124 = scalar_lea.hbm %s13, %s2123
          %s2125 = sshll.u32 %s2115, 4
          %s2126 = int_to_ptr.vmem [resolvable:$true] %s2125
          %2131 = dma.vmem_to_hbm [thread:$0]  %s2126, 512, %s2124, %s2112, 128, 128, 8
        $region76: #{upsampler_forward.3} parent=71 // pred_fallthru
          _
      $region72: #{upsampler_forward.3} parent=5 // pred_fallthru
        _
      %p2132 = scmp.le.s32.totalorder 2, %s22
      // Predicated region
      $region77: #{upsampler_forward.3} parent=5 // pred_check
        %p2133 = pneg %p2132
      $region78: #{upsampler_forward.3} parent=5 // pred_check_branch
        %2135 = sbr.rel (%p2133) target = $region80
      $region79: #{upsampler_forward.3} parent=5 // pred_region
        %s2136 = ssub.s32 %s22, 2
        // Predicated region
        $region81: #{upsampler_forward.3} parent=79 // pred_check
          %p2137 = pneg %p329
        $region82: #{upsampler_forward.3} parent=79 // pred_check_branch
          %2139 = sbr.rel (%p2137) target = $region84
        $region83: #{upsampler_forward.3} parent=79 // pred_region
          %s2140 = sand.u32 %s314, 1
          %s2141 = scalar_lea.sflag [#allocation6], %s2140
          %s2142 = sand.u32 %s314, 1
          %s2143 = smul.addr %s2142, 32
          %s2144 = scalar_lea.vmem [#allocation5], %s2143
          %2145 = dma.done %s2141, 512
        $region84: #{upsampler_forward.3} parent=79 // pred_fallthru
          _
      $region80: #{upsampler_forward.3} parent=5 // pred_fallthru
        _
    $region6: #{upsampler_forward.3} parent=1 // loop_footer
      %s26 = sadd.s32 1, %s22
    $region7: #{upsampler_forward.3} parent=1 // loop_footer_branch
      %21 = sbr.rel target = $region3
    $region8: #{upsampler_forward.3} parent=1 // loop_exit
      _
    %2146 = vsyncpa [#allocation6], 1
    %s2147 = scalar_lea.sflag [#allocation6], 1
    %2148 = vsyncpa %s2147, 1

</llo_original>
